<compile_context>
chip_gen: v7x
topology: tpu7x:2x2x1
jax: 0.10.0
libtpu: 0.0.40
codegen_flags: <defaults>
</compile_context>

<pallas_src>
import functools

import numpy as np
import jax
import jax.numpy as jnp
from jax import lax
from jax.experimental import pallas as pl
from jax.experimental.pallas import tpu as pltpu


def _fused_tap_kernel(W, x_ref, w_ref, b_ref, m_ref, o_ref, stack_ref):
    """Small-C path: one K=9*C matmul per layer.

    x_ref     : (C, B*HW)      activations, channels on sublanes, batched spatial on lanes
    w_ref     : (3, C, 9*C)    fused depthwise-tap x pointwise x BN weights
    b_ref     : (3, C, 1)      fused per-layer bias
    m_ref     : (9, 1, B*HW)   0/1 border masks per 3x3 tap
    o_ref     : (C, B*HW)
    stack_ref : (9*C, B*HW)    VMEM scratch holding the 9 shifted/masked activations
    """
    C, BHW = x_ref.shape
    h = x_ref[...]                                       # (C, BHW) f32
    masks = [m_ref[t] for t in range(9)]                 # hoisted out of the layer loop

    for layer in range(3):
        a = jnp.maximum(h, 0.0)                          # ReLU (VPU)
        t = 0
        for di in range(3):
            for dj in range(3):
                s = (di - 1) * W + (dj - 1)              # flat spatial offset of this tap
                if s == 0:
                    src = a                              # center tap: no shift, no mask
                else:
                    # lane rotation on the XLU; mask zeroes wrapped / cross-image positions
                    src = pltpu.roll(a, (-s) % BHW, axis=1) * masks[t]
                stack_ref[t * C:(t + 1) * C, :] = src
                t += 1
        # single fused (depthwise + pointwise + BN) matmul per layer on the MXU, K = 9*C
        h = jnp.dot(w_ref[layer], stack_ref[...],
                    preferred_element_type=jnp.float32) + b_ref[layer]

    # residual add with the original (pre-ReLU) input
    o_ref[...] = (h + x_ref[...]).astype(o_ref.dtype)


def _dw_then_pw_kernel(W, x_ref, dwk_ref, w_ref, b_ref, m_ref, o_ref):
    """Large-C path: depthwise 3x3 on the VPU, then ONE pointwise matmul per layer.

    x_ref   : (C, B*HW)
    dwk_ref : (3, 9, C, 1)   depthwise tap weights (per-channel column vectors)
    w_ref   : (3, C, C)      BN-folded pointwise weights, (c_out, c_in)
    b_ref   : (3, C, 1)      fused per-layer bias
    m_ref   : (9, 1, B*HW)   border masks
    o_ref   : (C, B*HW)
    """
    C, BHW = x_ref.shape
    h = x_ref[...]
    masks = [m_ref[t] for t in range(9)]

    for layer in range(3):
        a = jnp.maximum(h, 0.0)
        dw = None
        t = 0
        for di in range(3):
            for dj in range(3):
                s = (di - 1) * W + (dj - 1)
                if s == 0:
                    src = a
                else:
                    src = pltpu.roll(a, (-s) % BHW, axis=1) * masks[t]
                part = dwk_ref[layer, t] * src            # (C,1) * (C,BHW) on the VPU
                dw = part if dw is None else dw + part
                t += 1
        h = jnp.dot(w_ref[layer], dw,
                    preferred_element_type=jnp.float32) + b_ref[layer]

    o_ref[...] = (h + x_ref[...]).astype(o_ref.dtype)


def xception_middle_flow_block(x_nchw, dw_w, dw_b, pw_w, pw_b, bn_scale, bn_shift,
                               *, images_per_block=None, fuse_taps=None):
    """x_nchw: (N, C, H, W) float32.

    Parameters are stacked over the 3 separable-conv layers:
      dw_w: (3, 3, 3, C) [layer, kh, kw, c]    dw_b: (3, C)
      pw_w: (3, C, C)    [layer, c_in, c_out]  pw_b: (3, C)
      bn_scale / bn_shift: (3, C)  (folded inference BatchNorm)

    images_per_block: images processed per grid step (default: all N in one block;
                      use N//2 on v7x so both TensorCores get work).
    fuse_taps: if True, use the K=9*C fused-weight path; default picks it for C < 128.
    """
    N, C, H, W = x_nchw.shape
    HW = H * W
    f32 = jnp.float32

    B = N if images_per_block is None else images_per_block
    assert N % B == 0, (N, B)
    G = N // B                                            # grid steps
    BHW = B * HW
    if fuse_taps is None:
        # At real Xception width (C=728) the 9x weight pre-expansion is ~57 MiB
        # (does not fit v7x VMEM double-buffered) and pure extra MXU work.
        fuse_taps = C < 128

    dw_w = dw_w.astype(f32)
    dw_b = dw_b.astype(f32)
    pw_w = pw_w.astype(f32)
    pw_b = pw_b.astype(f32)
    bn_scale = bn_scale.astype(f32)
    bn_shift = bn_shift.astype(f32)

    # --- layout: (N,C,H,W) -> (C, N*HW); channels on sublanes, images batched on lanes ---
    x2d = jnp.transpose(x_nchw.reshape(N, C, HW), (1, 0, 2)).reshape(C, N * HW)

    # --- fold BatchNorm into pointwise weights; fold all biases into one per layer ---
    w_fold = pw_w * bn_scale[:, None, :]                                         # (3, Cin, Cout)
    bias = (jnp.einsum("lc,lcd->ld", dw_b, pw_w) + pw_b) * bn_scale + bn_shift   # (3, C)
    bias = bias[:, :, None]                                                      # (3, C, 1)

    dw_flat = dw_w.reshape(3, 9, C)                                              # (kh,kw) row-major

    # --- 0/1 border masks for the shifted taps (static -> plain numpy), tiled per image ---
    rows = np.arange(HW) // W
    cols = np.arange(HW) % W
    masks_np = np.zeros((9, 1, HW), np.float32)
    t = 0
    for di in range(3):
        for dj in range(3):
            valid = ((rows + di - 1 >= 0) & (rows + di - 1 < H) &
                     (cols + dj - 1 >= 0) & (cols + dj - 1 < W))
            masks_np[t, 0] = valid.astype(np.float32)
            t += 1
    masks = jnp.asarray(np.tile(masks_np, (1, 1, B)))                            # (9, 1, B*HW)

    compiler_params = pltpu.CompilerParams(
        dimension_semantics=("parallel",),                # shards grid across TCs on v7x
        vmem_limit_bytes=64 * 1024 * 1024)                # v5e default scoped limit is 16 MiB

    if fuse_taps:
        # Fuse each depthwise tap with the BN-folded pointwise conv and stack taps on K:
        #   W[l, d, t*C + c] = dw_w[l, t, c] * w_fold[l, c, d]
        comb = dw_flat[:, :, :, None] * w_fold[:, None, :, :]                    # (3, 9, Cin, Cout)
        w_stacked = jnp.transpose(comb, (0, 3, 1, 2)).reshape(3, C, 9 * C)       # (3, Cout, 9*Cin)
        # NOTE: on v6e/v7x, casting w_stacked and the stacked activations to bf16 roughly
        # doubles MXU throughput; kept f32 here to stay well inside the 2e-3 tolerance.
        kernel = functools.partial(_fused_tap_kernel, W)
        out2d = pl.pallas_call(
            kernel,
            out_shape=jax.ShapeDtypeStruct((C, N * HW), x2d.dtype),
            grid=(G,),
            in_specs=[
                pl.BlockSpec((C, BHW), lambda g: (0, g)),             # activations (lane-blocked)
                pl.BlockSpec((3, C, 9 * C), lambda g: (0, 0, 0)),     # fused weights (invariant)
                pl.BlockSpec((3, C, 1), lambda g: (0, 0, 0)),         # fused bias
                pl.BlockSpec((9, 1, BHW), lambda g: (0, 0, 0)),       # border masks
            ],
            out_specs=pl.BlockSpec((C, BHW), lambda g: (0, g)),
            scratch_shapes=[pltpu.VMEM((9 * C, BHW), f32)],           # stacked-tap slab
            compiler_params=compiler_params,
        )(x2d, w_stacked, bias, masks)
    else:
        w_pt = jnp.transpose(w_fold, (0, 2, 1))                       # (3, Cout, Cin)
        dwk = dw_flat[:, :, :, None]                                  # (3, 9, C, 1)
        kernel = functools.partial(_dw_then_pw_kernel, W)
        out2d = pl.pallas_call(
            kernel,
            out_shape=jax.ShapeDtypeStruct((C, N * HW), x2d.dtype),
            grid=(G,),
            in_specs=[
                pl.BlockSpec((C, BHW), lambda g: (0, g)),
                pl.BlockSpec((3, 9, C, 1), lambda g: (0, 0, 0, 0)),   # depthwise taps
                pl.BlockSpec((3, C, C), lambda g: (0, 0, 0)),         # BN-folded pointwise
                pl.BlockSpec((3, C, 1), lambda g: (0, 0, 0)),
                pl.BlockSpec((9, 1, BHW), lambda g: (0, 0, 0)),
            ],
            out_specs=pl.BlockSpec((C, BHW), lambda g: (0, g)),
            compiler_params=compiler_params,
        )(x2d, dwk, w_pt, bias, masks)

    # (C, N*HW) -> (N, C, H, W)
    return jnp.transpose(out2d.reshape(C, N, HW), (1, 0, 2)).reshape(N, C, H, W)


def reference_nhwc(x, dw_w, dw_b, pw_w, pw_b, bn_scale, bn_shift):
    """Pure-JAX reference (NHWC) matching the PyTorch forward semantics."""
    N, H, W, C = x.shape
    h = x
    for layer in range(3):
        h = jnp.maximum(h, 0.0)
        filt = dw_w[layer][:, :, None, :]       # HWIO with I = 1 (depthwise)
        h = lax.conv_general_dilated(
            h, filt, window_strides=(1, 1), padding=((1, 1), (1, 1)),
            dimension_numbers=("NHWC", "HWIO", "NHWC"),
            feature_group_count=C, precision=lax.Precision.HIGHEST)
        h = h + dw_b[layer][None, None, None, :]
        h = jnp.einsum("nhwc,cd->nhwd", h, pw_w[layer],
                       precision=lax.Precision.HIGHEST)
        h = h + pw_b[layer][None, None, None, :]
        h = h * bn_scale[layer][None, None, None, :] + bn_shift[layer][None, None, None, :]
    return h + x


if __name__ == "__main__":
    N, C, H, W = 2, 32, 16, 16

    key = jax.random.PRNGKey(0)
    ks = jax.random.split(key, 8)

    x_nchw = jax.random.normal(ks[0], (N, C, H, W), dtype=jnp.float32)

    # Deterministic synthetic parameters (3 separable-conv layers).
    dw_w = 0.05 * jax.random.normal(ks[1], (3, 3, 3, C), dtype=jnp.float32)   # [layer, kh, kw, c]
    dw_b = 0.05 * jax.random.normal(ks[2], (3, C), dtype=jnp.float32)
    pw_w = 0.05 * jax.random.normal(ks[3], (3, C, C), dtype=jnp.float32)      # [layer, c_in, c_out]
    pw_b = 0.05 * jax.random.normal(ks[4], (3, C), dtype=jnp.float32)

    # BatchNorm2d (inference) parameters -> folded scale / shift.
    gamma = 1.0 + 0.1 * jax.random.normal(ks[5], (3, C), dtype=jnp.float32)
    beta = 0.1 * jax.random.normal(ks[6], (3, C), dtype=jnp.float32)
    running_mean = 0.1 * jax.random.normal(ks[7], (3, C), dtype=jnp.float32)
    running_var = jnp.full((3, C), 1.0, dtype=jnp.float32)
    eps = 1e-5
    bn_scale = gamma / jnp.sqrt(running_var + eps)
    bn_shift = beta - running_mean * bn_scale

    # Pure-JAX reference.
    x_nhwc = jnp.transpose(x_nchw, (0, 2, 3, 1))
    ref = reference_nhwc(x_nhwc, dw_w, dw_b, pw_w, pw_b, bn_scale, bn_shift)
    ref = jnp.transpose(ref, (0, 3, 1, 2))

    params = (dw_w, dw_b, pw_w, pw_b, bn_scale, bn_shift)

    configs = [
        ("fused_taps_one_block", dict()),                               # default: K=9C matmul, grid=(1,)
        ("dw_then_pw_path", dict(fuse_taps=False)),                     # large-C code path
        ("two_blocks_v7x_split", dict(images_per_block=1)),             # 2 grid steps (2 TCs on v7x)
    ]
    for name, kw in configs:
        run = jax.jit(functools.partial(xception_middle_flow_block, **kw))
        out = jax.block_until_ready(run(x_nchw, *params))
        assert out.shape == (N, C, H, W), (name, out.shape)
        assert bool(jnp.all(jnp.isfinite(out))), name
        err = float(jnp.max(jnp.abs(out - ref)))
        assert jnp.allclose(out, ref, atol=2e-3, rtol=2e-3), (name, err)

    print("KERNEL_OK")
</pallas_src>

<mosaic_0001>
module attributes {stable_mosaic.version = 11 : i64} {
  func.func @_fused_tap_kernel(%arg0: i32, %arg1: memref<32x512xf32, #tpu.memory_space<vmem>>, %arg2: memref<3x32x288xf32, #tpu.memory_space<vmem>>, %arg3: memref<3x32x1xf32, #tpu.memory_space<vmem>>, %arg4: memref<9x1x512xf32, #tpu.memory_space<vmem>>, %arg5: memref<32x512xf32, #tpu.memory_space<vmem>>, %arg6: memref<288x512xf32, #tpu.memory_space<vmem>>) attributes {dimension_semantics = [#tpu.dimension_semantics<parallel>], iteration_bounds = array<i64: 1>, scalar_prefetch = 0 : i64, scratch_operands = 1 : i64, tpu.core_type = #tpu.core_type<tc>, window_params = [{transform_indices = @transform_0, window_bounds = array<i64: 32, 512>}, {pipeline_mode = #tpu.pipeline_mode<synchronous>, transform_indices = @transform_1, window_bounds = array<i64: 3, 32, 288>}, {pipeline_mode = #tpu.pipeline_mode<synchronous>, transform_indices = @transform_2, window_bounds = array<i64: 3, 32, 1>}, {pipeline_mode = #tpu.pipeline_mode<synchronous>, transform_indices = @transform_3, window_bounds = array<i64: 9, 1, 512>}, {transform_indices = @transform_4, window_bounds = array<i64: 32, 512>}]} {
    %c0 = arith.constant 0 : index
    %c0_0 = arith.constant 0 : index
    %0 = vector.load %arg1[%c0, %c0_0] : memref<32x512xf32, #tpu.memory_space<vmem>>, vector<32x512xf32>
    %c0_1 = arith.constant 0 : index
    %c0_2 = arith.constant 0 : index
    %c0_3 = arith.constant 0 : index
    %1 = vector.load %arg4[%c0_1, %c0_2, %c0_3] : memref<9x1x512xf32, #tpu.memory_space<vmem>>, vector<1x1x512xf32>
    %2 = vector.shape_cast %1 : vector<1x1x512xf32> to vector<1x512xf32>
    %c1 = arith.constant 1 : index
    %c0_4 = arith.constant 0 : index
    %c0_5 = arith.constant 0 : index
    %3 = vector.load %arg4[%c1, %c0_4, %c0_5] : memref<9x1x512xf32, #tpu.memory_space<vmem>>, vector<1x1x512xf32>
    %4 = vector.shape_cast %3 : vector<1x1x512xf32> to vector<1x512xf32>
    %c2 = arith.constant 2 : index
    %c0_6 = arith.constant 0 : index
    %c0_7 = arith.constant 0 : index
    %5 = vector.load %arg4[%c2, %c0_6, %c0_7] : memref<9x1x512xf32, #tpu.memory_space<vmem>>, vector<1x1x512xf32>
    %6 = vector.shape_cast %5 : vector<1x1x512xf32> to vector<1x512xf32>
    %c3 = arith.constant 3 : index
    %c0_8 = arith.constant 0 : index
    %c0_9 = arith.constant 0 : index
    %7 = vector.load %arg4[%c3, %c0_8, %c0_9] : memref<9x1x512xf32, #tpu.memory_space<vmem>>, vector<1x1x512xf32>
    %8 = vector.shape_cast %7 : vector<1x1x512xf32> to vector<1x512xf32>
    %c5 = arith.constant 5 : index
    %c0_10 = arith.constant 0 : index
    %c0_11 = arith.constant 0 : index
    %9 = vector.load %arg4[%c5, %c0_10, %c0_11] : memref<9x1x512xf32, #tpu.memory_space<vmem>>, vector<1x1x512xf32>
    %10 = vector.shape_cast %9 : vector<1x1x512xf32> to vector<1x512xf32>
    %c6 = arith.constant 6 : index
    %c0_12 = arith.constant 0 : index
    %c0_13 = arith.constant 0 : index
    %11 = vector.load %arg4[%c6, %c0_12, %c0_13] : memref<9x1x512xf32, #tpu.memory_space<vmem>>, vector<1x1x512xf32>
    %12 = vector.shape_cast %11 : vector<1x1x512xf32> to vector<1x512xf32>
    %c7 = arith.constant 7 : index
    %c0_14 = arith.constant 0 : index
    %c0_15 = arith.constant 0 : index
    %13 = vector.load %arg4[%c7, %c0_14, %c0_15] : memref<9x1x512xf32, #tpu.memory_space<vmem>>, vector<1x1x512xf32>
    %14 = vector.shape_cast %13 : vector<1x1x512xf32> to vector<1x512xf32>
    %c8 = arith.constant 8 : index
    %c0_16 = arith.constant 0 : index
    %c0_17 = arith.constant 0 : index
    %15 = vector.load %arg4[%c8, %c0_16, %c0_17] : memref<9x1x512xf32, #tpu.memory_space<vmem>>, vector<1x1x512xf32>
    %16 = vector.shape_cast %15 : vector<1x1x512xf32> to vector<1x512xf32>
    %cst = arith.constant 0.000000e+00 : f32
    %17 = vector.broadcast %cst : f32 to vector<32x512xf32>
    %18 = arith.maximumf %0, %17 : vector<32x512xf32>
    %c17_i32 = arith.constant 17 : i32
    %19 = tpu.dynamic_rotate %18 by %c17_i32 dim 1 : vector<32x512xf32>, i32 -> vector<32x512xf32>
    %20 = vector.broadcast %2 : vector<1x512xf32> to vector<32x512xf32>
    %21 = arith.mulf %19, %20 : vector<32x512xf32>
    %c0_18 = arith.constant 0 : index
    %c0_19 = arith.constant 0 : index
    %22 = vector.load %arg6[%c0_18, %c0_19] : memref<288x512xf32, #tpu.memory_space<vmem>>, vector<32x512xf32>
    tpu.vector_store %arg6[%c0_18, %c0_19], %21 {strides = array<i32>} : memref<288x512xf32, #tpu.memory_space<vmem>>, vector<32x512xf32>,
    %c16_i32 = arith.constant 16 : i32
    %23 = tpu.dynamic_rotate %18 by %c16_i32 dim 1 : vector<32x512xf32>, i32 -> vector<32x512xf32>
    %24 = vector.broadcast %4 : vector<1x512xf32> to vector<32x512xf32>
    %25 = arith.mulf %23, %24 : vector<32x512xf32>
    %c32 = arith.constant 32 : index
    %c0_20 = arith.constant 0 : index
    %26 = vector.load %arg6[%c32, %c0_20] : memref<288x512xf32, #tpu.memory_space<vmem>>, vector<32x512xf32>
    tpu.vector_store %arg6[%c32, %c0_20], %25 {strides = array<i32>} : memref<288x512xf32, #tpu.memory_space<vmem>>, vector<32x512xf32>,
    %c15_i32 = arith.constant 15 : i32
    %27 = tpu.dynamic_rotate %18 by %c15_i32 dim 1 : vector<32x512xf32>, i32 -> vector<32x512xf32>
    %28 = vector.broadcast %6 : vector<1x512xf32> to vector<32x512xf32>
    %29 = arith.mulf %27, %28 : vector<32x512xf32>
    %c64 = arith.constant 64 : index
    %c0_21 = arith.constant 0 : index
    %30 = vector.load %arg6[%c64, %c0_21] : memref<288x512xf32, #tpu.memory_space<vmem>>, vector<32x512xf32>
    tpu.vector_store %arg6[%c64, %c0_21], %29 {strides = array<i32>} : memref<288x512xf32, #tpu.memory_space<vmem>>, vector<32x512xf32>,
    %c1_i32 = arith.constant 1 : i32
    %31 = tpu.dynamic_rotate %18 by %c1_i32 dim 1 : vector<32x512xf32>, i32 -> vector<32x512xf32>
    %32 = vector.broadcast %8 : vector<1x512xf32> to vector<32x512xf32>
    %33 = arith.mulf %31, %32 : vector<32x512xf32>
    %c96 = arith.constant 96 : index
    %c0_22 = arith.constant 0 : index
    %34 = vector.load %arg6[%c96, %c0_22] : memref<288x512xf32, #tpu.memory_space<vmem>>, vector<32x512xf32>
    tpu.vector_store %arg6[%c96, %c0_22], %33 {strides = array<i32>} : memref<288x512xf32, #tpu.memory_space<vmem>>, vector<32x512xf32>,
    %c128 = arith.constant 128 : index
    %c0_23 = arith.constant 0 : index
    %35 = vector.load %arg6[%c128, %c0_23] : memref<288x512xf32, #tpu.memory_space<vmem>>, vector<32x512xf32>
    tpu.vector_store %arg6[%c128, %c0_23], %18 {strides = array<i32>} : memref<288x512xf32, #tpu.memory_space<vmem>>, vector<32x512xf32>,
    %c511_i32 = arith.constant 511 : i32
    %36 = tpu.dynamic_rotate %18 by %c511_i32 dim 1 : vector<32x512xf32>, i32 -> vector<32x512xf32>
    %37 = vector.broadcast %10 : vector<1x512xf32> to vector<32x512xf32>
    %38 = arith.mulf %36, %37 : vector<32x512xf32>
    %c160 = arith.constant 160 : index
    %c0_24 = arith.constant 0 : index
    %39 = vector.load %arg6[%c160, %c0_24] : memref<288x512xf32, #tpu.memory_space<vmem>>, vector<32x512xf32>
    tpu.vector_store %arg6[%c160, %c0_24], %38 {strides = array<i32>} : memref<288x512xf32, #tpu.memory_space<vmem>>, vector<32x512xf32>,
    %c497_i32 = arith.constant 497 : i32
    %40 = tpu.dynamic_rotate %18 by %c497_i32 dim 1 : vector<32x512xf32>, i32 -> vector<32x512xf32>
    %41 = vector.broadcast %12 : vector<1x512xf32> to vector<32x512xf32>
    %42 = arith.mulf %40, %41 : vector<32x512xf32>
    %c192 = arith.constant 192 : index
    %c0_25 = arith.constant 0 : index
    %43 = vector.load %arg6[%c192, %c0_25] : memref<288x512xf32, #tpu.memory_space<vmem>>, vector<32x512xf32>
    tpu.vector_store %arg6[%c192, %c0_25], %42 {strides = array<i32>} : memref<288x512xf32, #tpu.memory_space<vmem>>, vector<32x512xf32>,
    %c496_i32 = arith.constant 496 : i32
    %44 = tpu.dynamic_rotate %18 by %c496_i32 dim 1 : vector<32x512xf32>, i32 -> vector<32x512xf32>
    %45 = vector.broadcast %14 : vector<1x512xf32> to vector<32x512xf32>
    %46 = arith.mulf %44, %45 : vector<32x512xf32>
    %c224 = arith.constant 224 : index
    %c0_26 = arith.constant 0 : index
    %47 = vector.load %arg6[%c224, %c0_26] : memref<288x512xf32, #tpu.memory_space<vmem>>, vector<32x512xf32>
    tpu.vector_store %arg6[%c224, %c0_26], %46 {strides = array<i32>} : memref<288x512xf32, #tpu.memory_space<vmem>>, vector<32x512xf32>,
    %c495_i32 = arith.constant 495 : i32
    %48 = tpu.dynamic_rotate %18 by %c495_i32 dim 1 : vector<32x512xf32>, i32 -> vector<32x512xf32>
    %49 = vector.broadcast %16 : vector<1x512xf32> to vector<32x512xf32>
    %50 = arith.mulf %48, %49 : vector<32x512xf32>
    %c256 = arith.constant 256 : index
    %c0_27 = arith.constant 0 : index
    %51 = vector.load %arg6[%c256, %c0_27] : memref<288x512xf32, #tpu.memory_space<vmem>>, vector<32x512xf32>
    tpu.vector_store %arg6[%c256, %c0_27], %50 {strides = array<i32>} : memref<288x512xf32, #tpu.memory_space<vmem>>, vector<32x512xf32>,
    %c0_28 = arith.constant 0 : index
    %c0_29 = arith.constant 0 : index
    %c0_30 = arith.constant 0 : index
    %52 = vector.load %arg2[%c0_28, %c0_29, %c0_30] : memref<3x32x288xf32, #tpu.memory_space<vmem>>, vector<1x32x288xf32>
    %53 = vector.shape_cast %52 : vector<1x32x288xf32> to vector<32x288xf32>
    %c0_31 = arith.constant 0 : index
    %c0_32 = arith.constant 0 : index
    %54 = vector.load %arg6[%c0_31, %c0_32] : memref<288x512xf32, #tpu.memory_space<vmem>>, vector<288x512xf32>
    %cst_33 = arith.constant dense<0.000000e+00> : vector<32x512xf32>
    %55 = tpu.matmul %53, %54, %cst_33 {dimension_numbers = #tpu.dot_dimension_numbers<[1], [0], [0], [1], [0, 0, 1, 1], [], []>} : vector<32x288xf32>, vector<288x512xf32>, vector<32x512xf32> -> vector<32x512xf32>
    %c0_34 = arith.constant 0 : index
    %c0_35 = arith.constant 0 : index
    %c0_36 = arith.constant 0 : index
    %56 = vector.load %arg3[%c0_34, %c0_35, %c0_36] : memref<3x32x1xf32, #tpu.memory_space<vmem>>, vector<1x32x1xf32>
    %57 = vector.shape_cast %56 : vector<1x32x1xf32> to vector<32x1xf32>
    %58 = vector.broadcast %57 : vector<32x1xf32> to vector<32x512xf32>
    %59 = arith.addf %55, %58 : vector<32x512xf32>
    %cst_37 = arith.constant 0.000000e+00 : f32
    %60 = vector.broadcast %cst_37 : f32 to vector<32x512xf32>
    %61 = arith.maximumf %59, %60 : vector<32x512xf32>
    %c17_i32_38 = arith.constant 17 : i32
    %62 = tpu.dynamic_rotate %61 by %c17_i32_38 dim 1 : vector<32x512xf32>, i32 -> vector<32x512xf32>
    %63 = vector.broadcast %2 : vector<1x512xf32> to vector<32x512xf32>
    %64 = arith.mulf %62, %63 : vector<32x512xf32>
    %c0_39 = arith.constant 0 : index
    %c0_40 = arith.constant 0 : index
    %65 = vector.load %arg6[%c0_39, %c0_40] : memref<288x512xf32, #tpu.memory_space<vmem>>, vector<32x512xf32>
    tpu.vector_store %arg6[%c0_39, %c0_40], %64 {strides = array<i32>} : memref<288x512xf32, #tpu.memory_space<vmem>>, vector<32x512xf32>,
    %c16_i32_41 = arith.constant 16 : i32
    %66 = tpu.dynamic_rotate %61 by %c16_i32_41 dim 1 : vector<32x512xf32>, i32 -> vector<32x512xf32>
    %67 = vector.broadcast %4 : vector<1x512xf32> to vector<32x512xf32>
    %68 = arith.mulf %66, %67 : vector<32x512xf32>
    %c32_42 = arith.constant 32 : index
    %c0_43 = arith.constant 0 : index
    %69 = vector.load %arg6[%c32_42, %c0_43] : memref<288x512xf32, #tpu.memory_space<vmem>>, vector<32x512xf32>
    tpu.vector_store %arg6[%c32_42, %c0_43], %68 {strides = array<i32>} : memref<288x512xf32, #tpu.memory_space<vmem>>, vector<32x512xf32>,
    %c15_i32_44 = arith.constant 15 : i32
    %70 = tpu.dynamic_rotate %61 by %c15_i32_44 dim 1 : vector<32x512xf32>, i32 -> vector<32x512xf32>
    %71 = vector.broadcast %6 : vector<1x512xf32> to vector<32x512xf32>
    %72 = arith.mulf %70, %71 : vector<32x512xf32>
    %c64_45 = arith.constant 64 : index
    %c0_46 = arith.constant 0 : index
    %73 = vector.load %arg6[%c64_45, %c0_46] : memref<288x512xf32, #tpu.memory_space<vmem>>, vector<32x512xf32>
    tpu.vector_store %arg6[%c64_45, %c0_46], %72 {strides = array<i32>} : memref<288x512xf32, #tpu.memory_space<vmem>>, vector<32x512xf32>,
    %c1_i32_47 = arith.constant 1 : i32
    %74 = tpu.dynamic_rotate %61 by %c1_i32_47 dim 1 : vector<32x512xf32>, i32 -> vector<32x512xf32>
    %75 = vector.broadcast %8 : vector<1x512xf32> to vector<32x512xf32>
    %76 = arith.mulf %74, %75 : vector<32x512xf32>
    %c96_48 = arith.constant 96 : index
    %c0_49 = arith.constant 0 : index
    %77 = vector.load %arg6[%c96_48, %c0_49] : memref<288x512xf32, #tpu.memory_space<vmem>>, vector<32x512xf32>
    tpu.vector_store %arg6[%c96_48, %c0_49], %76 {strides = array<i32>} : memref<288x512xf32, #tpu.memory_space<vmem>>, vector<32x512xf32>,
    %c128_50 = arith.constant 128 : index
    %c0_51 = arith.constant 0 : index
    %78 = vector.load %arg6[%c128_50, %c0_51] : memref<288x512xf32, #tpu.memory_space<vmem>>, vector<32x512xf32>
    tpu.vector_store %arg6[%c128_50, %c0_51], %61 {strides = array<i32>} : memref<288x512xf32, #tpu.memory_space<vmem>>, vector<32x512xf32>,
    %c511_i32_52 = arith.constant 511 : i32
    %79 = tpu.dynamic_rotate %61 by %c511_i32_52 dim 1 : vector<32x512xf32>, i32 -> vector<32x512xf32>
    %80 = vector.broadcast %10 : vector<1x512xf32> to vector<32x512xf32>
    %81 = arith.mulf %79, %80 : vector<32x512xf32>
    %c160_53 = arith.constant 160 : index
    %c0_54 = arith.constant 0 : index
    %82 = vector.load %arg6[%c160_53, %c0_54] : memref<288x512xf32, #tpu.memory_space<vmem>>, vector<32x512xf32>
    tpu.vector_store %arg6[%c160_53, %c0_54], %81 {strides = array<i32>} : memref<288x512xf32, #tpu.memory_space<vmem>>, vector<32x512xf32>,
    %c497_i32_55 = arith.constant 497 : i32
    %83 = tpu.dynamic_rotate %61 by %c497_i32_55 dim 1 : vector<32x512xf32>, i32 -> vector<32x512xf32>
    %84 = vector.broadcast %12 : vector<1x512xf32> to vector<32x512xf32>
    %85 = arith.mulf %83, %84 : vector<32x512xf32>
    %c192_56 = arith.constant 192 : index
    %c0_57 = arith.constant 0 : index
    %86 = vector.load %arg6[%c192_56, %c0_57] : memref<288x512xf32, #tpu.memory_space<vmem>>, vector<32x512xf32>
    tpu.vector_store %arg6[%c192_56, %c0_57], %85 {strides = array<i32>} : memref<288x512xf32, #tpu.memory_space<vmem>>, vector<32x512xf32>,
    %c496_i32_58 = arith.constant 496 : i32
    %87 = tpu.dynamic_rotate %61 by %c496_i32_58 dim 1 : vector<32x512xf32>, i32 -> vector<32x512xf32>
    %88 = vector.broadcast %14 : vector<1x512xf32> to vector<32x512xf32>
    %89 = arith.mulf %87, %88 : vector<32x512xf32>
    %c224_59 = arith.constant 224 : index
    %c0_60 = arith.constant 0 : index
    %90 = vector.load %arg6[%c224_59, %c0_60] : memref<288x512xf32, #tpu.memory_space<vmem>>, vector<32x512xf32>
    tpu.vector_store %arg6[%c224_59, %c0_60], %89 {strides = array<i32>} : memref<288x512xf32, #tpu.memory_space<vmem>>, vector<32x512xf32>,
    %c495_i32_61 = arith.constant 495 : i32
    %91 = tpu.dynamic_rotate %61 by %c495_i32_61 dim 1 : vector<32x512xf32>, i32 -> vector<32x512xf32>
    %92 = vector.broadcast %16 : vector<1x512xf32> to vector<32x512xf32>
    %93 = arith.mulf %91, %92 : vector<32x512xf32>
    %c256_62 = arith.constant 256 : index
    %c0_63 = arith.constant 0 : index
    %94 = vector.load %arg6[%c256_62, %c0_63] : memref<288x512xf32, #tpu.memory_space<vmem>>, vector<32x512xf32>
    tpu.vector_store %arg6[%c256_62, %c0_63], %93 {strides = array<i32>} : memref<288x512xf32, #tpu.memory_space<vmem>>, vector<32x512xf32>,
    %c1_64 = arith.constant 1 : index
    %c0_65 = arith.constant 0 : index
    %c0_66 = arith.constant 0 : index
    %95 = vector.load %arg2[%c1_64, %c0_65, %c0_66] : memref<3x32x288xf32, #tpu.memory_space<vmem>>, vector<1x32x288xf32>
    %96 = vector.shape_cast %95 : vector<1x32x288xf32> to vector<32x288xf32>
    %c0_67 = arith.constant 0 : index
    %c0_68 = arith.constant 0 : index
    %97 = vector.load %arg6[%c0_67, %c0_68] : memref<288x512xf32, #tpu.memory_space<vmem>>, vector<288x512xf32>
    %cst_69 = arith.constant dense<0.000000e+00> : vector<32x512xf32>
    %98 = tpu.matmul %96, %97, %cst_69 {dimension_numbers = #tpu.dot_dimension_numbers<[1], [0], [0], [1], [0, 0, 1, 1], [], []>} : vector<32x288xf32>, vector<288x512xf32>, vector<32x512xf32> -> vector<32x512xf32>
    %c1_70 = arith.constant 1 : index
    %c0_71 = arith.constant 0 : index
    %c0_72 = arith.constant 0 : index
    %99 = vector.load %arg3[%c1_70, %c0_71, %c0_72] : memref<3x32x1xf32, #tpu.memory_space<vmem>>, vector<1x32x1xf32>
    %100 = vector.shape_cast %99 : vector<1x32x1xf32> to vector<32x1xf32>
    %101 = vector.broadcast %100 : vector<32x1xf32> to vector<32x512xf32>
    %102 = arith.addf %98, %101 : vector<32x512xf32>
    %cst_73 = arith.constant 0.000000e+00 : f32
    %103 = vector.broadcast %cst_73 : f32 to vector<32x512xf32>
    %104 = arith.maximumf %102, %103 : vector<32x512xf32>
    %c17_i32_74 = arith.constant 17 : i32
    %105 = tpu.dynamic_rotate %104 by %c17_i32_74 dim 1 : vector<32x512xf32>, i32 -> vector<32x512xf32>
    %106 = vector.broadcast %2 : vector<1x512xf32> to vector<32x512xf32>
    %107 = arith.mulf %105, %106 : vector<32x512xf32>
    %c0_75 = arith.constant 0 : index
    %c0_76 = arith.constant 0 : index
    %108 = vector.load %arg6[%c0_75, %c0_76] : memref<288x512xf32, #tpu.memory_space<vmem>>, vector<32x512xf32>
    tpu.vector_store %arg6[%c0_75, %c0_76], %107 {strides = array<i32>} : memref<288x512xf32, #tpu.memory_space<vmem>>, vector<32x512xf32>,
    %c16_i32_77 = arith.constant 16 : i32
    %109 = tpu.dynamic_rotate %104 by %c16_i32_77 dim 1 : vector<32x512xf32>, i32 -> vector<32x512xf32>
    %110 = vector.broadcast %4 : vector<1x512xf32> to vector<32x512xf32>
    %111 = arith.mulf %109, %110 : vector<32x512xf32>
    %c32_78 = arith.constant 32 : index
    %c0_79 = arith.constant 0 : index
    %112 = vector.load %arg6[%c32_78, %c0_79] : memref<288x512xf32, #tpu.memory_space<vmem>>, vector<32x512xf32>
    tpu.vector_store %arg6[%c32_78, %c0_79], %111 {strides = array<i32>} : memref<288x512xf32, #tpu.memory_space<vmem>>, vector<32x512xf32>,
    %c15_i32_80 = arith.constant 15 : i32
    %113 = tpu.dynamic_rotate %104 by %c15_i32_80 dim 1 : vector<32x512xf32>, i32 -> vector<32x512xf32>
    %114 = vector.broadcast %6 : vector<1x512xf32> to vector<32x512xf32>
    %115 = arith.mulf %113, %114 : vector<32x512xf32>
    %c64_81 = arith.constant 64 : index
    %c0_82 = arith.constant 0 : index
    %116 = vector.load %arg6[%c64_81, %c0_82] : memref<288x512xf32, #tpu.memory_space<vmem>>, vector<32x512xf32>
    tpu.vector_store %arg6[%c64_81, %c0_82], %115 {strides = array<i32>} : memref<288x512xf32, #tpu.memory_space<vmem>>, vector<32x512xf32>,
    %c1_i32_83 = arith.constant 1 : i32
    %117 = tpu.dynamic_rotate %104 by %c1_i32_83 dim 1 : vector<32x512xf32>, i32 -> vector<32x512xf32>
    %118 = vector.broadcast %8 : vector<1x512xf32> to vector<32x512xf32>
    %119 = arith.mulf %117, %118 : vector<32x512xf32>
    %c96_84 = arith.constant 96 : index
    %c0_85 = arith.constant 0 : index
    %120 = vector.load %arg6[%c96_84, %c0_85] : memref<288x512xf32, #tpu.memory_space<vmem>>, vector<32x512xf32>
    tpu.vector_store %arg6[%c96_84, %c0_85], %119 {strides = array<i32>} : memref<288x512xf32, #tpu.memory_space<vmem>>, vector<32x512xf32>,
    %c128_86 = arith.constant 128 : index
    %c0_87 = arith.constant 0 : index
    %121 = vector.load %arg6[%c128_86, %c0_87] : memref<288x512xf32, #tpu.memory_space<vmem>>, vector<32x512xf32>
    tpu.vector_store %arg6[%c128_86, %c0_87], %104 {strides = array<i32>} : memref<288x512xf32, #tpu.memory_space<vmem>>, vector<32x512xf32>,
    %c511_i32_88 = arith.constant 511 : i32
    %122 = tpu.dynamic_rotate %104 by %c511_i32_88 dim 1 : vector<32x512xf32>, i32 -> vector<32x512xf32>
    %123 = vector.broadcast %10 : vector<1x512xf32> to vector<32x512xf32>
    %124 = arith.mulf %122, %123 : vector<32x512xf32>
    %c160_89 = arith.constant 160 : index
    %c0_90 = arith.constant 0 : index
    %125 = vector.load %arg6[%c160_89, %c0_90] : memref<288x512xf32, #tpu.memory_space<vmem>>, vector<32x512xf32>
    tpu.vector_store %arg6[%c160_89, %c0_90], %124 {strides = array<i32>} : memref<288x512xf32, #tpu.memory_space<vmem>>, vector<32x512xf32>,
    %c497_i32_91 = arith.constant 497 : i32
    %126 = tpu.dynamic_rotate %104 by %c497_i32_91 dim 1 : vector<32x512xf32>, i32 -> vector<32x512xf32>
    %127 = vector.broadcast %12 : vector<1x512xf32> to vector<32x512xf32>
    %128 = arith.mulf %126, %127 : vector<32x512xf32>
    %c192_92 = arith.constant 192 : index
    %c0_93 = arith.constant 0 : index
    %129 = vector.load %arg6[%c192_92, %c0_93] : memref<288x512xf32, #tpu.memory_space<vmem>>, vector<32x512xf32>
    tpu.vector_store %arg6[%c192_92, %c0_93], %128 {strides = array<i32>} : memref<288x512xf32, #tpu.memory_space<vmem>>, vector<32x512xf32>,
    %c496_i32_94 = arith.constant 496 : i32
    %130 = tpu.dynamic_rotate %104 by %c496_i32_94 dim 1 : vector<32x512xf32>, i32 -> vector<32x512xf32>
    %131 = vector.broadcast %14 : vector<1x512xf32> to vector<32x512xf32>
    %132 = arith.mulf %130, %131 : vector<32x512xf32>
    %c224_95 = arith.constant 224 : index
    %c0_96 = arith.constant 0 : index
    %133 = vector.load %arg6[%c224_95, %c0_96] : memref<288x512xf32, #tpu.memory_space<vmem>>, vector<32x512xf32>
    tpu.vector_store %arg6[%c224_95, %c0_96], %132 {strides = array<i32>} : memref<288x512xf32, #tpu.memory_space<vmem>>, vector<32x512xf32>,
    %c495_i32_97 = arith.constant 495 : i32
    %134 = tpu.dynamic_rotate %104 by %c495_i32_97 dim 1 : vector<32x512xf32>, i32 -> vector<32x512xf32>
    %135 = vector.broadcast %16 : vector<1x512xf32> to vector<32x512xf32>
    %136 = arith.mulf %134, %135 : vector<32x512xf32>
    %c256_98 = arith.constant 256 : index
    %c0_99 = arith.constant 0 : index
    %137 = vector.load %arg6[%c256_98, %c0_99] : memref<288x512xf32, #tpu.memory_space<vmem>>, vector<32x512xf32>
    tpu.vector_store %arg6[%c256_98, %c0_99], %136 {strides = array<i32>} : memref<288x512xf32, #tpu.memory_space<vmem>>, vector<32x512xf32>,
    %c2_100 = arith.constant 2 : index
    %c0_101 = arith.constant 0 : index
    %c0_102 = arith.constant 0 : index
    %138 = vector.load %arg2[%c2_100, %c0_101, %c0_102] : memref<3x32x288xf32, #tpu.memory_space<vmem>>, vector<1x32x288xf32>
    %139 = vector.shape_cast %138 : vector<1x32x288xf32> to vector<32x288xf32>
    %c0_103 = arith.constant 0 : index
    %c0_104 = arith.constant 0 : index
    %140 = vector.load %arg6[%c0_103, %c0_104] : memref<288x512xf32, #tpu.memory_space<vmem>>, vector<288x512xf32>
    %cst_105 = arith.constant dense<0.000000e+00> : vector<32x512xf32>
    %141 = tpu.matmul %139, %140, %cst_105 {dimension_numbers = #tpu.dot_dimension_numbers<[1], [0], [0], [1], [0, 0, 1, 1], [], []>} : vector<32x288xf32>, vector<288x512xf32>, vector<32x512xf32> -> vector<32x512xf32>
    %c2_106 = arith.constant 2 : index
    %c0_107 = arith.constant 0 : index
    %c0_108 = arith.constant 0 : index
    %142 = vector.load %arg3[%c2_106, %c0_107, %c0_108] : memref<3x32x1xf32, #tpu.memory_space<vmem>>, vector<1x32x1xf32>
    %143 = vector.shape_cast %142 : vector<1x32x1xf32> to vector<32x1xf32>
    %144 = vector.broadcast %143 : vector<32x1xf32> to vector<32x512xf32>
    %145 = arith.addf %141, %144 : vector<32x512xf32>
    %c0_109 = arith.constant 0 : index
    %c0_110 = arith.constant 0 : index
    %146 = vector.load %arg1[%c0_109, %c0_110] : memref<32x512xf32, #tpu.memory_space<vmem>>, vector<32x512xf32>
    %147 = arith.addf %145, %146 : vector<32x512xf32>
    %c0_111 = arith.constant 0 : index
    %c0_112 = arith.constant 0 : index
    %148 = vector.load %arg5[%c0_111, %c0_112] : memref<32x512xf32, #tpu.memory_space<vmem>>, vector<32x512xf32>
    tpu.vector_store %arg5[%c0_111, %c0_112], %147 {strides = array<i32>} : memref<32x512xf32, #tpu.memory_space<vmem>>, vector<32x512xf32>,
    return
  }
  func.func @transform_0(%arg0: i32) -> (i32, i32) {
    %c0_i32 = arith.constant 0 : i32
    %c0_i32_0 = arith.constant 0 : i32
    return %c0_i32, %arg0 : i32, i32
  }
  func.func @transform_1(%arg0: i32) -> (i32, i32, i32) {
    %c0_i32 = arith.constant 0 : i32
    %c0_i32_0 = arith.constant 0 : i32
    %c0_i32_1 = arith.constant 0 : i32
    %c0_i32_2 = arith.constant 0 : i32
    return %c0_i32, %c0_i32_0, %c0_i32_1 : i32, i32, i32
  }
  func.func @transform_2(%arg0: i32) -> (i32, i32, i32) {
    %c0_i32 = arith.constant 0 : i32
    %c0_i32_0 = arith.constant 0 : i32
    %c0_i32_1 = arith.constant 0 : i32
    %c0_i32_2 = arith.constant 0 : i32
    return %c0_i32, %c0_i32_0, %c0_i32_1 : i32, i32, i32
  }
  func.func @transform_3(%arg0: i32) -> (i32, i32, i32) {
    %c0_i32 = arith.constant 0 : i32
    %c0_i32_0 = arith.constant 0 : i32
    %c0_i32_1 = arith.constant 0 : i32
    %c0_i32_2 = arith.constant 0 : i32
    return %c0_i32, %c0_i32_0, %c0_i32_1 : i32, i32, i32
  }
  func.func @transform_4(%arg0: i32) -> (i32, i32) {
    %c0_i32 = arith.constant 0 : i32
    %c0_i32_0 = arith.constant 0 : i32
    return %c0_i32, %arg0 : i32, i32
  }
}

</mosaic_0001>

<llo_original>
// kernel: xception_middle_flow_block.1
$region0: #{xception_middle_flow_block.1}
  #allocation0 [shape = 'u32[]', space=smem, size = 0x4, offset = 0x4, fixed_abs, tag = 'smem constant byte address 0x4 - core index']
  #allocation1 [shape = 'u32[144,128]{1,0:T(1,128)}', space=vmem, size = 0x12000, scoped, tag = 'internal scratch']
  #allocation2 [shape = 'f32[288,512]{1,0:T(8,128)}', space=vmem, size = 0x90000, scoped, tag = 'scratch operand']
  %s0 = inlined_call_operand.hbm [shape: f32[32,512], index: 0, kind: input, shape index: {}]
  %s1 = inlined_call_operand.hbm [shape: f32[3,32,288], index: 1, kind: input, shape index: {}]
  %s2 = inlined_call_operand.hbm [shape: f32[3,32,1], index: 2, kind: input, shape index: {}]
  %s3 = inlined_call_operand.hbm [shape: f32[9,1,512], index: 3, kind: input, shape index: {}]
  %s4 = inlined_call_operand.hbm [shape: f32[32,512], index: 4, kind: output, shape index: {}]
  %s5 = sld [smem:[#allocation0]]
  $region42: #{xception_middle_flow_block.1} parent=0
    _
  %s7 = ssub.s32 1, %s5
  %s8 = scalar_select 0, %s7, %s5
  $region1: #{xception_middle_flow_block.1} parent=0
    #allocation3 [shape = 'u8[65536]{0}', space=vmem, size = 0x10000, scoped, tag = 'input window, operand 0, single buffered']
    #allocation4 [shape = 's32[1]{0}', space=sflag, size = 0x4, scoped, tag = 'scoped memory for xception_middle_flow_block.1']
    #allocation5 [shape = 's32[1]{0}', space=sflag, size = 0x4, scoped, tag = 'scoped memory for xception_middle_flow_block.1']
    #allocation6 [shape = 'u8[147456]{0}', space=vmem, size = 0x24000, scoped, tag = 'input window, operand 1, single buffered']
    #allocation7 [shape = 's32[1]{0}', space=sflag, size = 0x4, scoped, tag = 'scoped memory for xception_middle_flow_block.1']
    #allocation8 [shape = 'u8[49152]{0}', space=vmem, size = 0xc000, scoped, tag = 'input window, operand 2, single buffered']
    #allocation9 [shape = 'u8[18432]{0}', space=vmem, size = 0x4800, scoped, tag = 'input window, operand 3, single buffered']
    #allocation10 [shape = 's32[1]{0}', space=sflag, size = 0x4, scoped, tag = 'scoped memory for xception_middle_flow_block.1']
    #allocation11 [shape = 'u8[65536]{0}', space=vmem, size = 0x10000, scoped, tag = 'output window, operand 0, single buffered']
    %9 = vsyncpa [#allocation4], 0
    %10 = vsyncpa [#allocation7], 0
    %11 = vsyncpa [#allocation10], 0
    %12 = vsyncpa [#allocation5], 0
    // Predicated region
    $region2: #{xception_middle_flow_block.1} parent=1 // pred_check
      _
    $region3: #{xception_middle_flow_block.1} parent=1 // pred_check_branch
      %14 = sbr.rel (0) target = $region5
    $region4: #{xception_middle_flow_block.1} parent=1 // pred_region
      %s16 = ssub.s32 2048, 2048
      %17 = vsyncadd [#allocation4], %s16
      %s18 = sshll.u32 [#allocation3], 4
      %s19 = int_to_ptr.vmem [resolvable:$true] %s18
      %24 = dma.hbm_to_vmem [thread:$0]  %s0, 2048, %s19, [#allocation4], 512, 512, 32
    $region5: #{xception_middle_flow_block.1} parent=1 // pred_fallthru
      _
    // Predicated region
    $region6: #{xception_middle_flow_block.1} parent=1 // pred_check
      _
    $region7: #{xception_middle_flow_block.1} parent=1 // pred_check_branch
      %26 = sbr.rel (0) target = $region9
    $region8: #{xception_middle_flow_block.1} parent=1 // pred_region
      %s28 = ssub.s32 4608, 4608
      %29 = vsyncadd [#allocation7], %s28
      %s30 = sshll.u32 [#allocation6], 4
      %s31 = int_to_ptr.vmem [resolvable:$true] %s30
      %36 = dma.hbm_to_vmem [thread:$0]  %s1, 4608, %s31, [#allocation7], 384, 384, 24
    $region9: #{xception_middle_flow_block.1} parent=1 // pred_fallthru
      _
    // Predicated region
    $region10: #{xception_middle_flow_block.1} parent=1 // pred_check
      _
    $region11: #{xception_middle_flow_block.1} parent=1 // pred_check_branch
      %38 = sbr.rel (0) target = $region13
    $region12: #{xception_middle_flow_block.1} parent=1 // pred_region
      %s40 = ssub.s32 1536, 1536
      %41 = vsyncadd [#allocation7], %s40
      %s42 = sshll.u32 [#allocation8], 4
      %s43 = int_to_ptr.vmem [resolvable:$true] %s42
      %48 = dma.hbm_to_vmem [thread:$0]  %s2, 1536, %s43, [#allocation7], 128, 128, 8
    $region13: #{xception_middle_flow_block.1} parent=1 // pred_fallthru
      _
    // Predicated region
    $region14: #{xception_middle_flow_block.1} parent=1 // pred_check
      _
    $region15: #{xception_middle_flow_block.1} parent=1 // pred_check_branch
      %50 = sbr.rel (0) target = $region17
    $region16: #{xception_middle_flow_block.1} parent=1 // pred_region
      %s52 = ssub.s32 576, 576
      %53 = vsyncadd [#allocation10], %s52
      %s54 = sshll.u32 [#allocation9], 4
      %s55 = int_to_ptr.vmem [resolvable:$true] %s54
      %60 = dma.hbm_to_vmem [thread:$0]  %s3, 576, %s55, [#allocation10], 64, 64, 4
    $region17: #{xception_middle_flow_block.1} parent=1 // pred_fallthru
      _
    // Predicated region
    $region18: #{xception_middle_flow_block.1} parent=1 // pred_check
      _
    $region19: #{xception_middle_flow_block.1} parent=1 // pred_check_branch
      %62 = sbr.rel (0) target = $region21
    $region20: #{xception_middle_flow_block.1} parent=1 // pred_region
      %63 = dma.done [#allocation4], 2048
    $region21: #{xception_middle_flow_block.1} parent=1 // pred_fallthru
      _
    // Predicated region
    $region22: #{xception_middle_flow_block.1} parent=1 // pred_check
      _
    $region23: #{xception_middle_flow_block.1} parent=1 // pred_check_branch
      %65 = sbr.rel (0) target = $region25
    $region24: #{xception_middle_flow_block.1} parent=1 // pred_region
      %66 = dma.done [#allocation7], 4608
    $region25: #{xception_middle_flow_block.1} parent=1 // pred_fallthru
      _
    // Predicated region
    $region26: #{xception_middle_flow_block.1} parent=1 // pred_check
      _
    $region27: #{xception_middle_flow_block.1} parent=1 // pred_check_branch
      %68 = sbr.rel (0) target = $region29
    $region28: #{xception_middle_flow_block.1} parent=1 // pred_region
      %69 = dma.done [#allocation7], 1536
    $region29: #{xception_middle_flow_block.1} parent=1 // pred_fallthru
      _
    // Predicated region
    $region30: #{xception_middle_flow_block.1} parent=1 // pred_check
      _
    $region31: #{xception_middle_flow_block.1} parent=1 // pred_check_branch
      %71 = sbr.rel (0) target = $region33
    $region32: #{xception_middle_flow_block.1} parent=1 // pred_region
      %72 = dma.done [#allocation10], 576
    $region33: #{xception_middle_flow_block.1} parent=1 // pred_fallthru
      _
    %v73 = vld [vmem:[#allocation3] sm:$0xff]
    %v74 = vld [vmem:[#allocation3 + $0x8] sm:$0xff]
    %v75 = vld [vmem:[#allocation3 + $0x10] sm:$0xff]
    %v76 = vld [vmem:[#allocation3 + $0x18] sm:$0xff]
    %v77 = vld [vmem:[#allocation3 + $0x20] sm:$0xff]
    %v78 = vld [vmem:[#allocation3 + $0x28] sm:$0xff]
    %v79 = vld [vmem:[#allocation3 + $0x30] sm:$0xff]
    %v80 = vld [vmem:[#allocation3 + $0x38] sm:$0xff]
    %v81 = vld [vmem:[#allocation3 + $0x40] sm:$0xff]
    %v82 = vld [vmem:[#allocation3 + $0x48] sm:$0xff]
    %v83 = vld [vmem:[#allocation3 + $0x50] sm:$0xff]
    %v84 = vld [vmem:[#allocation3 + $0x58] sm:$0xff]
    %v85 = vld [vmem:[#allocation3 + $0x60] sm:$0xff]
    %v86 = vld [vmem:[#allocation3 + $0x68] sm:$0xff]
    %v87 = vld [vmem:[#allocation3 + $0x70] sm:$0xff]
    %v88 = vld [vmem:[#allocation3 + $0x78] sm:$0xff]
    %v89 = vld [vmem:[#allocation9] sm:$0xf]
    %s90 = scalar_lea.vmem [#allocation9], 4
    %v91 = vld [vmem:[%s90] sm:$0xf]
    %s92 = scalar_lea.vmem [#allocation9], 8
    %v93 = vld [vmem:[%s92] sm:$0xf]
    %s94 = scalar_lea.vmem [#allocation9], 12
    %v95 = vld [vmem:[%s94] sm:$0xf]
    %s96 = scalar_lea.vmem [#allocation9], 20
    %v97 = vld [vmem:[%s96] sm:$0xf]
    %s98 = scalar_lea.vmem [#allocation9], 24
    %v99 = vld [vmem:[%s98] sm:$0xf]
    %s100 = scalar_lea.vmem [#allocation9], 28
    %v101 = vld [vmem:[%s100] sm:$0xf]
    %s102 = scalar_lea.vmem [#allocation9], 32
    %v103 = vld [vmem:[%s102] sm:$0xf]
    %v104 = vmax.f32 %v73, 0.0
    %v105 = vmax.f32 %v74, 0.0
    %v106 = vmax.f32 %v75, 0.0
    %v107 = vmax.f32 %v76, 0.0
    %v108 = vmax.f32 %v77, 0.0
    %v109 = vmax.f32 %v78, 0.0
    %v110 = vmax.f32 %v79, 0.0
    %v111 = vmax.f32 %v80, 0.0
    %v112 = vmax.f32 %v81, 0.0
    %v113 = vmax.f32 %v82, 0.0
    %v114 = vmax.f32 %v83, 0.0
    %v115 = vmax.f32 %v84, 0.0
    %v116 = vmax.f32 %v85, 0.0
    %v117 = vmax.f32 %v86, 0.0
    %v118 = vmax.f32 %v87, 0.0
    %v119 = vmax.f32 %v88, 0.0
    %120 = vrot.lane.b32.xlu0 %v104, 17
    %v121 = vpop.permute.xlu0 %120
    %122 = vrot.lane.b32.xlu0 %v108, 17
    %v123 = vpop.permute.xlu0 %122
    %124 = vrot.lane.b32.xlu0 %v112, 17
    %v125 = vpop.permute.xlu0 %124
    %126 = vrot.lane.b32.xlu0 %v116, 17
    %v127 = vpop.permute.xlu0 %126
    %128 = vrot.lane.b32.xlu0 %v105, 17
    %v129 = vpop.permute.xlu0 %128
    %130 = vrot.lane.b32.xlu0 %v109, 17
    %v131 = vpop.permute.xlu0 %130
    %132 = vrot.lane.b32.xlu0 %v113, 17
    %v133 = vpop.permute.xlu0 %132
    %134 = vrot.lane.b32.xlu0 %v117, 17
    %v135 = vpop.permute.xlu0 %134
    %136 = vrot.lane.b32.xlu0 %v106, 17
    %v137 = vpop.permute.xlu0 %136
    %138 = vrot.lane.b32.xlu0 %v110, 17
    %v139 = vpop.permute.xlu0 %138
    %140 = vrot.lane.b32.xlu0 %v114, 17
    %v141 = vpop.permute.xlu0 %140
    %142 = vrot.lane.b32.xlu0 %v118, 17
    %v143 = vpop.permute.xlu0 %142
    %144 = vrot.lane.b32.xlu0 %v107, 17
    %v145 = vpop.permute.xlu0 %144
    %146 = vrot.lane.b32.xlu0 %v111, 17
    %v147 = vpop.permute.xlu0 %146
    %148 = vrot.lane.b32.xlu0 %v115, 17
    %v149 = vpop.permute.xlu0 %148
    %150 = vrot.lane.b32.xlu0 %v119, 17
    %v151 = vpop.permute.xlu0 %150
    %v152 = vlaneseq
    %v153 = vand.u32 %v152, 127
    %vm154 = vcmp.lt.s32.totalorder %v153, 17
    %v155 = vsel %vm154, %v137, %v145
    %v156 = vsel %vm154, %v139, %v147
    %v157 = vsel %vm154, %v141, %v149
    %v158 = vsel %vm154, %v143, %v151
    %v159 = vsel %vm154, %v129, %v137
    %v160 = vsel %vm154, %v131, %v139
    %v161 = vsel %vm154, %v133, %v141
    %v162 = vsel %vm154, %v135, %v143
    %v163 = vsel %vm154, %v121, %v129
    %v164 = vsel %vm154, %v123, %v131
    %v165 = vsel %vm154, %v125, %v133
    %v166 = vsel %vm154, %v127, %v135
    %v167 = vsel %vm154, %v145, %v121
    %v168 = vsel %vm154, %v147, %v123
    %v169 = vsel %vm154, %v149, %v125
    %v170 = vsel %vm154, %v151, %v127
    %v172 = vlaneseq
    %v173 = vshrl.u32 %v172, 7
    %v174 = vsub.s32 0, %v173
    %v175 = vrot.slane %v89, %v174
    %v176 = vlaneseq
    %v177 = vshrl.u32 %v176, 7
    %v178 = vsub.s32 1, %v177
    %v179 = vrot.slane %v89, %v178
    %v180 = vlaneseq
    %v181 = vshrl.u32 %v180, 7
    %v182 = vsub.s32 2, %v181
    %v183 = vrot.slane %v89, %v182
    %v184 = vlaneseq
    %v185 = vshrl.u32 %v184, 7
    %v186 = vsub.s32 3, %v185
    %v187 = vrot.slane %v89, %v186
    %v192 = vmul.f32 %v167, %v175
    %v193 = vmul.f32 %v163, %v179
    %v194 = vmul.f32 %v159, %v183
    %v195 = vmul.f32 %v155, %v187
    %v196 = vmul.f32 %v168, %v175
    %v197 = vmul.f32 %v164, %v179
    %v198 = vmul.f32 %v160, %v183
    %v199 = vmul.f32 %v156, %v187
    %v200 = vmul.f32 %v169, %v175
    %v201 = vmul.f32 %v165, %v179
    %v202 = vmul.f32 %v161, %v183
    %v203 = vmul.f32 %v157, %v187
    %v204 = vmul.f32 %v170, %v175
    %v205 = vmul.f32 %v166, %v179
    %v206 = vmul.f32 %v162, %v183
    %v207 = vmul.f32 %v158, %v187
    %208 = vst [vmem:[#allocation2] sm:$0xff] %v192
    %209 = vst [vmem:[#allocation2 + $0x8] sm:$0xff] %v193
    %210 = vst [vmem:[#allocation2 + $0x10] sm:$0xff] %v194
    %211 = vst [vmem:[#allocation2 + $0x18] sm:$0xff] %v195
    %212 = vst [vmem:[#allocation2 + $0x20] sm:$0xff] %v196
    %213 = vst [vmem:[#allocation2 + $0x28] sm:$0xff] %v197
    %214 = vst [vmem:[#allocation2 + $0x30] sm:$0xff] %v198
    %215 = vst [vmem:[#allocation2 + $0x38] sm:$0xff] %v199
    %216 = vst [vmem:[#allocation2 + $0x40] sm:$0xff] %v200
    %217 = vst [vmem:[#allocation2 + $0x48] sm:$0xff] %v201
    %218 = vst [vmem:[#allocation2 + $0x50] sm:$0xff] %v202
    %219 = vst [vmem:[#allocation2 + $0x58] sm:$0xff] %v203
    %220 = vst [vmem:[#allocation2 + $0x60] sm:$0xff] %v204
    %221 = vst [vmem:[#allocation2 + $0x68] sm:$0xff] %v205
    %222 = vst [vmem:[#allocation2 + $0x70] sm:$0xff] %v206
    %223 = vst [vmem:[#allocation2 + $0x78] sm:$0xff] %v207
    %224 = vrot.lane.b32.xlu0 %v104, 16
    %v225 = vpop.permute.xlu0 %224
    %226 = vrot.lane.b32.xlu0 %v108, 16
    %v227 = vpop.permute.xlu0 %226
    %228 = vrot.lane.b32.xlu0 %v112, 16
    %v229 = vpop.permute.xlu0 %228
    %230 = vrot.lane.b32.xlu0 %v116, 16
    %v231 = vpop.permute.xlu0 %230
    %232 = vrot.lane.b32.xlu0 %v105, 16
    %v233 = vpop.permute.xlu0 %232
    %234 = vrot.lane.b32.xlu0 %v109, 16
    %v235 = vpop.permute.xlu0 %234
    %236 = vrot.lane.b32.xlu0 %v113, 16
    %v237 = vpop.permute.xlu0 %236
    %238 = vrot.lane.b32.xlu0 %v117, 16
    %v239 = vpop.permute.xlu0 %238
    %240 = vrot.lane.b32.xlu0 %v106, 16
    %v241 = vpop.permute.xlu0 %240
    %242 = vrot.lane.b32.xlu0 %v110, 16
    %v243 = vpop.permute.xlu0 %242
    %244 = vrot.lane.b32.xlu0 %v114, 16
    %v245 = vpop.permute.xlu0 %244
    %246 = vrot.lane.b32.xlu0 %v118, 16
    %v247 = vpop.permute.xlu0 %246
    %248 = vrot.lane.b32.xlu0 %v107, 16
    %v249 = vpop.permute.xlu0 %248
    %250 = vrot.lane.b32.xlu0 %v111, 16
    %v251 = vpop.permute.xlu0 %250
    %252 = vrot.lane.b32.xlu0 %v115, 16
    %v253 = vpop.permute.xlu0 %252
    %254 = vrot.lane.b32.xlu0 %v119, 16
    %v255 = vpop.permute.xlu0 %254
    %vm256 = vcmp.lt.s32.totalorder %v153, 16
    %v257 = vsel %vm256, %v241, %v249
    %v258 = vsel %vm256, %v243, %v251
    %v259 = vsel %vm256, %v245, %v253
    %v260 = vsel %vm256, %v247, %v255
    %v261 = vsel %vm256, %v233, %v241
    %v262 = vsel %vm256, %v235, %v243
    %v263 = vsel %vm256, %v237, %v245
    %v264 = vsel %vm256, %v239, %v247
    %v265 = vsel %vm256, %v225, %v233
    %v266 = vsel %vm256, %v227, %v235
    %v267 = vsel %vm256, %v229, %v237
    %v268 = vsel %vm256, %v231, %v239
    %v269 = vsel %vm256, %v249, %v225
    %v270 = vsel %vm256, %v251, %v227
    %v271 = vsel %vm256, %v253, %v229
    %v272 = vsel %vm256, %v255, %v231
    %v274 = vlaneseq
    %v275 = vshrl.u32 %v274, 7
    %v276 = vsub.s32 0, %v275
    %v277 = vrot.slane %v91, %v276
    %v278 = vlaneseq
    %v279 = vshrl.u32 %v278, 7
    %v280 = vsub.s32 1, %v279
    %v281 = vrot.slane %v91, %v280
    %v282 = vlaneseq
    %v283 = vshrl.u32 %v282, 7
    %v284 = vsub.s32 2, %v283
    %v285 = vrot.slane %v91, %v284
    %v286 = vlaneseq
    %v287 = vshrl.u32 %v286, 7
    %v288 = vsub.s32 3, %v287
    %v289 = vrot.slane %v91, %v288
    %v294 = vmul.f32 %v269, %v277
    %v295 = vmul.f32 %v265, %v281
    %v296 = vmul.f32 %v261, %v285
    %v297 = vmul.f32 %v257, %v289
    %v298 = vmul.f32 %v270, %v277
    %v299 = vmul.f32 %v266, %v281
    %v300 = vmul.f32 %v262, %v285
    %v301 = vmul.f32 %v258, %v289
    %v302 = vmul.f32 %v271, %v277
    %v303 = vmul.f32 %v267, %v281
    %v304 = vmul.f32 %v263, %v285
    %v305 = vmul.f32 %v259, %v289
    %v306 = vmul.f32 %v272, %v277
    %v307 = vmul.f32 %v268, %v281
    %v308 = vmul.f32 %v264, %v285
    %v309 = vmul.f32 %v260, %v289
    %310 = vst [vmem:[#allocation2 + $0x80] sm:$0xff] %v294
    %311 = vst [vmem:[#allocation2 + $0x88] sm:$0xff] %v295
    %312 = vst [vmem:[#allocation2 + $0x90] sm:$0xff] %v296
    %313 = vst [vmem:[#allocation2 + $0x98] sm:$0xff] %v297
    %314 = vst [vmem:[#allocation2 + $0xa0] sm:$0xff] %v298
    %315 = vst [vmem:[#allocation2 + $0xa8] sm:$0xff] %v299
    %316 = vst [vmem:[#allocation2 + $0xb0] sm:$0xff] %v300
    %317 = vst [vmem:[#allocation2 + $0xb8] sm:$0xff] %v301
    %318 = vst [vmem:[#allocation2 + $0xc0] sm:$0xff] %v302
    %319 = vst [vmem:[#allocation2 + $0xc8] sm:$0xff] %v303
    %320 = vst [vmem:[#allocation2 + $0xd0] sm:$0xff] %v304
    %321 = vst [vmem:[#allocation2 + $0xd8] sm:$0xff] %v305
    %322 = vst [vmem:[#allocation2 + $0xe0] sm:$0xff] %v306
    %323 = vst [vmem:[#allocation2 + $0xe8] sm:$0xff] %v307
    %324 = vst [vmem:[#allocation2 + $0xf0] sm:$0xff] %v308
    %325 = vst [vmem:[#allocation2 + $0xf8] sm:$0xff] %v309
    %326 = vrot.lane.b32.xlu0 %v104, 15
    %v327 = vpop.permute.xlu0 %326
    %328 = vrot.lane.b32.xlu0 %v108, 15
    %v329 = vpop.permute.xlu0 %328
    %330 = vrot.lane.b32.xlu0 %v112, 15
    %v331 = vpop.permute.xlu0 %330
    %332 = vrot.lane.b32.xlu0 %v116, 15
    %v333 = vpop.permute.xlu0 %332
    %334 = vrot.lane.b32.xlu0 %v105, 15
    %v335 = vpop.permute.xlu0 %334
    %336 = vrot.lane.b32.xlu0 %v109, 15
    %v337 = vpop.permute.xlu0 %336
    %338 = vrot.lane.b32.xlu0 %v113, 15
    %v339 = vpop.permute.xlu0 %338
    %340 = vrot.lane.b32.xlu0 %v117, 15
    %v341 = vpop.permute.xlu0 %340
    %342 = vrot.lane.b32.xlu0 %v106, 15
    %v343 = vpop.permute.xlu0 %342
    %344 = vrot.lane.b32.xlu0 %v110, 15
    %v345 = vpop.permute.xlu0 %344
    %346 = vrot.lane.b32.xlu0 %v114, 15
    %v347 = vpop.permute.xlu0 %346
    %348 = vrot.lane.b32.xlu0 %v118, 15
    %v349 = vpop.permute.xlu0 %348
    %350 = vrot.lane.b32.xlu0 %v107, 15
    %v351 = vpop.permute.xlu0 %350
    %352 = vrot.lane.b32.xlu0 %v111, 15
    %v353 = vpop.permute.xlu0 %352
    %354 = vrot.lane.b32.xlu0 %v115, 15
    %v355 = vpop.permute.xlu0 %354
    %356 = vrot.lane.b32.xlu0 %v119, 15
    %v357 = vpop.permute.xlu0 %356
    %vm358 = vcmp.lt.s32.totalorder %v153, 15
    %v359 = vsel %vm358, %v343, %v351
    %v360 = vsel %vm358, %v345, %v353
    %v361 = vsel %vm358, %v347, %v355
    %v362 = vsel %vm358, %v349, %v357
    %v363 = vsel %vm358, %v335, %v343
    %v364 = vsel %vm358, %v337, %v345
    %v365 = vsel %vm358, %v339, %v347
    %v366 = vsel %vm358, %v341, %v349
    %v367 = vsel %vm358, %v327, %v335
    %v368 = vsel %vm358, %v329, %v337
    %v369 = vsel %vm358, %v331, %v339
    %v370 = vsel %vm358, %v333, %v341
    %v371 = vsel %vm358, %v351, %v327
    %v372 = vsel %vm358, %v353, %v329
    %v373 = vsel %vm358, %v355, %v331
    %v374 = vsel %vm358, %v357, %v333
    %v376 = vlaneseq
    %v377 = vshrl.u32 %v376, 7
    %v378 = vsub.s32 0, %v377
    %v379 = vrot.slane %v93, %v378
    %v380 = vlaneseq
    %v381 = vshrl.u32 %v380, 7
    %v382 = vsub.s32 1, %v381
    %v383 = vrot.slane %v93, %v382
    %v384 = vlaneseq
    %v385 = vshrl.u32 %v384, 7
    %v386 = vsub.s32 2, %v385
    %v387 = vrot.slane %v93, %v386
    %v388 = vlaneseq
    %v389 = vshrl.u32 %v388, 7
    %v390 = vsub.s32 3, %v389
    %v391 = vrot.slane %v93, %v390
    %v396 = vmul.f32 %v371, %v379
    %v397 = vmul.f32 %v367, %v383
    %v398 = vmul.f32 %v363, %v387
    %v399 = vmul.f32 %v359, %v391
    %v400 = vmul.f32 %v372, %v379
    %v401 = vmul.f32 %v368, %v383
    %v402 = vmul.f32 %v364, %v387
    %v403 = vmul.f32 %v360, %v391
    %v404 = vmul.f32 %v373, %v379
    %v405 = vmul.f32 %v369, %v383
    %v406 = vmul.f32 %v365, %v387
    %v407 = vmul.f32 %v361, %v391
    %v408 = vmul.f32 %v374, %v379
    %v409 = vmul.f32 %v370, %v383
    %v410 = vmul.f32 %v366, %v387
    %v411 = vmul.f32 %v362, %v391
    %412 = vst [vmem:[#allocation2 + $0x100] sm:$0xff] %v396
    %413 = vst [vmem:[#allocation2 + $0x108] sm:$0xff] %v397
    %414 = vst [vmem:[#allocation2 + $0x110] sm:$0xff] %v398
    %415 = vst [vmem:[#allocation2 + $0x118] sm:$0xff] %v399
    %416 = vst [vmem:[#allocation2 + $0x120] sm:$0xff] %v400
    %417 = vst [vmem:[#allocation2 + $0x128] sm:$0xff] %v401
    %418 = vst [vmem:[#allocation2 + $0x130] sm:$0xff] %v402
    %419 = vst [vmem:[#allocation2 + $0x138] sm:$0xff] %v403
    %420 = vst [vmem:[#allocation2 + $0x140] sm:$0xff] %v404
    %421 = vst [vmem:[#allocation2 + $0x148] sm:$0xff] %v405
    %422 = vst [vmem:[#allocation2 + $0x150] sm:$0xff] %v406
    %423 = vst [vmem:[#allocation2 + $0x158] sm:$0xff] %v407
    %424 = vst [vmem:[#allocation2 + $0x160] sm:$0xff] %v408
    %425 = vst [vmem:[#allocation2 + $0x168] sm:$0xff] %v409
    %426 = vst [vmem:[#allocation2 + $0x170] sm:$0xff] %v410
    %427 = vst [vmem:[#allocation2 + $0x178] sm:$0xff] %v411
    %428 = vrot.lane.b32.xlu0 %v104, 1
    %v429 = vpop.permute.xlu0 %428
    %430 = vrot.lane.b32.xlu0 %v108, 1
    %v431 = vpop.permute.xlu0 %430
    %432 = vrot.lane.b32.xlu0 %v112, 1
    %v433 = vpop.permute.xlu0 %432
    %434 = vrot.lane.b32.xlu0 %v116, 1
    %v435 = vpop.permute.xlu0 %434
    %436 = vrot.lane.b32.xlu0 %v105, 1
    %v437 = vpop.permute.xlu0 %436
    %438 = vrot.lane.b32.xlu0 %v109, 1
    %v439 = vpop.permute.xlu0 %438
    %440 = vrot.lane.b32.xlu0 %v113, 1
    %v441 = vpop.permute.xlu0 %440
    %442 = vrot.lane.b32.xlu0 %v117, 1
    %v443 = vpop.permute.xlu0 %442
    %444 = vrot.lane.b32.xlu0 %v106, 1
    %v445 = vpop.permute.xlu0 %444
    %446 = vrot.lane.b32.xlu0 %v110, 1
    %v447 = vpop.permute.xlu0 %446
    %448 = vrot.lane.b32.xlu0 %v114, 1
    %v449 = vpop.permute.xlu0 %448
    %450 = vrot.lane.b32.xlu0 %v118, 1
    %v451 = vpop.permute.xlu0 %450
    %452 = vrot.lane.b32.xlu0 %v107, 1
    %v453 = vpop.permute.xlu0 %452
    %454 = vrot.lane.b32.xlu0 %v111, 1
    %v455 = vpop.permute.xlu0 %454
    %456 = vrot.lane.b32.xlu0 %v115, 1
    %v457 = vpop.permute.xlu0 %456
    %458 = vrot.lane.b32.xlu0 %v119, 1
    %v459 = vpop.permute.xlu0 %458
    %vm460 = vcmp.lt.s32.totalorder %v153, 1
    %v461 = vsel %vm460, %v445, %v453
    %v462 = vsel %vm460, %v447, %v455
    %v463 = vsel %vm460, %v449, %v457
    %v464 = vsel %vm460, %v451, %v459
    %v465 = vsel %vm460, %v437, %v445
    %v466 = vsel %vm460, %v439, %v447
    %v467 = vsel %vm460, %v441, %v449
    %v468 = vsel %vm460, %v443, %v451
    %v469 = vsel %vm460, %v429, %v437
    %v470 = vsel %vm460, %v431, %v439
    %v471 = vsel %vm460, %v433, %v441
    %v472 = vsel %vm460, %v435, %v443
    %v473 = vsel %vm460, %v453, %v429
    %v474 = vsel %vm460, %v455, %v431
    %v475 = vsel %vm460, %v457, %v433
    %v476 = vsel %vm460, %v459, %v435
    %v478 = vlaneseq
    %v479 = vshrl.u32 %v478, 7
    %v480 = vsub.s32 0, %v479
    %v481 = vrot.slane %v95, %v480
    %v482 = vlaneseq
    %v483 = vshrl.u32 %v482, 7
    %v484 = vsub.s32 1, %v483
    %v485 = vrot.slane %v95, %v484
    %v486 = vlaneseq
    %v487 = vshrl.u32 %v486, 7
    %v488 = vsub.s32 2, %v487
    %v489 = vrot.slane %v95, %v488
    %v490 = vlaneseq
    %v491 = vshrl.u32 %v490, 7
    %v492 = vsub.s32 3, %v491
    %v493 = vrot.slane %v95, %v492
    %v498 = vmul.f32 %v473, %v481
    %v499 = vmul.f32 %v469, %v485
    %v500 = vmul.f32 %v465, %v489
    %v501 = vmul.f32 %v461, %v493
    %v502 = vmul.f32 %v474, %v481
    %v503 = vmul.f32 %v470, %v485
    %v504 = vmul.f32 %v466, %v489
    %v505 = vmul.f32 %v462, %v493
    %v506 = vmul.f32 %v475, %v481
    %v507 = vmul.f32 %v471, %v485
    %v508 = vmul.f32 %v467, %v489
    %v509 = vmul.f32 %v463, %v493
    %v510 = vmul.f32 %v476, %v481
    %v511 = vmul.f32 %v472, %v485
    %v512 = vmul.f32 %v468, %v489
    %v513 = vmul.f32 %v464, %v493
    %514 = vst [vmem:[#allocation2 + $0x180] sm:$0xff] %v498
    %515 = vst [vmem:[#allocation2 + $0x188] sm:$0xff] %v499
    %516 = vst [vmem:[#allocation2 + $0x190] sm:$0xff] %v500
    %517 = vst [vmem:[#allocation2 + $0x198] sm:$0xff] %v501
    %518 = vst [vmem:[#allocation2 + $0x1a0] sm:$0xff] %v502
    %519 = vst [vmem:[#allocation2 + $0x1a8] sm:$0xff] %v503
    %520 = vst [vmem:[#allocation2 + $0x1b0] sm:$0xff] %v504
    %521 = vst [vmem:[#allocation2 + $0x1b8] sm:$0xff] %v505
    %522 = vst [vmem:[#allocation2 + $0x1c0] sm:$0xff] %v506
    %523 = vst [vmem:[#allocation2 + $0x1c8] sm:$0xff] %v507
    %524 = vst [vmem:[#allocation2 + $0x1d0] sm:$0xff] %v508
    %525 = vst [vmem:[#allocation2 + $0x1d8] sm:$0xff] %v509
    %526 = vst [vmem:[#allocation2 + $0x1e0] sm:$0xff] %v510
    %527 = vst [vmem:[#allocation2 + $0x1e8] sm:$0xff] %v511
    %528 = vst [vmem:[#allocation2 + $0x1f0] sm:$0xff] %v512
    %529 = vst [vmem:[#allocation2 + $0x1f8] sm:$0xff] %v513
    %530 = vst [vmem:[#allocation2 + $0x200] sm:$0xff] %v104
    %531 = vst [vmem:[#allocation2 + $0x208] sm:$0xff] %v105
    %532 = vst [vmem:[#allocation2 + $0x210] sm:$0xff] %v106
    %533 = vst [vmem:[#allocation2 + $0x218] sm:$0xff] %v107
    %534 = vst [vmem:[#allocation2 + $0x220] sm:$0xff] %v108
    %535 = vst [vmem:[#allocation2 + $0x228] sm:$0xff] %v109
    %536 = vst [vmem:[#allocation2 + $0x230] sm:$0xff] %v110
    %537 = vst [vmem:[#allocation2 + $0x238] sm:$0xff] %v111
    %538 = vst [vmem:[#allocation2 + $0x240] sm:$0xff] %v112
    %539 = vst [vmem:[#allocation2 + $0x248] sm:$0xff] %v113
    %540 = vst [vmem:[#allocation2 + $0x250] sm:$0xff] %v114
    %541 = vst [vmem:[#allocation2 + $0x258] sm:$0xff] %v115
    %542 = vst [vmem:[#allocation2 + $0x260] sm:$0xff] %v116
    %543 = vst [vmem:[#allocation2 + $0x268] sm:$0xff] %v117
    %544 = vst [vmem:[#allocation2 + $0x270] sm:$0xff] %v118
    %545 = vst [vmem:[#allocation2 + $0x278] sm:$0xff] %v119
    %546 = vrot.lane.b32.xlu0 %v104, 127
    %v547 = vpop.permute.xlu0 %546
    %548 = vrot.lane.b32.xlu0 %v108, 127
    %v549 = vpop.permute.xlu0 %548
    %550 = vrot.lane.b32.xlu0 %v112, 127
    %v551 = vpop.permute.xlu0 %550
    %552 = vrot.lane.b32.xlu0 %v116, 127
    %v553 = vpop.permute.xlu0 %552
    %554 = vrot.lane.b32.xlu0 %v105, 127
    %v555 = vpop.permute.xlu0 %554
    %556 = vrot.lane.b32.xlu0 %v109, 127
    %v557 = vpop.permute.xlu0 %556
    %558 = vrot.lane.b32.xlu0 %v113, 127
    %v559 = vpop.permute.xlu0 %558
    %560 = vrot.lane.b32.xlu0 %v117, 127
    %v561 = vpop.permute.xlu0 %560
    %562 = vrot.lane.b32.xlu0 %v106, 127
    %v563 = vpop.permute.xlu0 %562
    %564 = vrot.lane.b32.xlu0 %v110, 127
    %v565 = vpop.permute.xlu0 %564
    %566 = vrot.lane.b32.xlu0 %v114, 127
    %v567 = vpop.permute.xlu0 %566
    %568 = vrot.lane.b32.xlu0 %v118, 127
    %v569 = vpop.permute.xlu0 %568
    %570 = vrot.lane.b32.xlu0 %v107, 127
    %v571 = vpop.permute.xlu0 %570
    %572 = vrot.lane.b32.xlu0 %v111, 127
    %v573 = vpop.permute.xlu0 %572
    %574 = vrot.lane.b32.xlu0 %v115, 127
    %v575 = vpop.permute.xlu0 %574
    %576 = vrot.lane.b32.xlu0 %v119, 127
    %v577 = vpop.permute.xlu0 %576
    %vm578 = vcmp.lt.s32.totalorder %v153, 127
    %v579 = vsel %vm578, %v563, %v571
    %v580 = vsel %vm578, %v565, %v573
    %v581 = vsel %vm578, %v567, %v575
    %v582 = vsel %vm578, %v569, %v577
    %v583 = vsel %vm578, %v555, %v563
    %v584 = vsel %vm578, %v557, %v565
    %v585 = vsel %vm578, %v559, %v567
    %v586 = vsel %vm578, %v561, %v569
    %v587 = vsel %vm578, %v547, %v555
    %v588 = vsel %vm578, %v549, %v557
    %v589 = vsel %vm578, %v551, %v559
    %v590 = vsel %vm578, %v553, %v561
    %v591 = vsel %vm578, %v571, %v547
    %v592 = vsel %vm578, %v573, %v549
    %v593 = vsel %vm578, %v575, %v551
    %v594 = vsel %vm578, %v577, %v553
    %v596 = vlaneseq
    %v597 = vshrl.u32 %v596, 7
    %v598 = vsub.s32 0, %v597
    %v599 = vrot.slane %v97, %v598
    %v600 = vlaneseq
    %v601 = vshrl.u32 %v600, 7
    %v602 = vsub.s32 1, %v601
    %v603 = vrot.slane %v97, %v602
    %v604 = vlaneseq
    %v605 = vshrl.u32 %v604, 7
    %v606 = vsub.s32 2, %v605
    %v607 = vrot.slane %v97, %v606
    %v608 = vlaneseq
    %v609 = vshrl.u32 %v608, 7
    %v610 = vsub.s32 3, %v609
    %v611 = vrot.slane %v97, %v610
    %v616 = vmul.f32 %v587, %v599
    %v617 = vmul.f32 %v583, %v603
    %v618 = vmul.f32 %v579, %v607
    %v619 = vmul.f32 %v591, %v611
    %v620 = vmul.f32 %v588, %v599
    %v621 = vmul.f32 %v584, %v603
    %v622 = vmul.f32 %v580, %v607
    %v623 = vmul.f32 %v592, %v611
    %v624 = vmul.f32 %v589, %v599
    %v625 = vmul.f32 %v585, %v603
    %v626 = vmul.f32 %v581, %v607
    %v627 = vmul.f32 %v593, %v611
    %v628 = vmul.f32 %v590, %v599
    %v629 = vmul.f32 %v586, %v603
    %v630 = vmul.f32 %v582, %v607
    %v631 = vmul.f32 %v594, %v611
    %632 = vst [vmem:[#allocation2 + $0x280] sm:$0xff] %v616
    %633 = vst [vmem:[#allocation2 + $0x288] sm:$0xff] %v617
    %634 = vst [vmem:[#allocation2 + $0x290] sm:$0xff] %v618
    %635 = vst [vmem:[#allocation2 + $0x298] sm:$0xff] %v619
    %636 = vst [vmem:[#allocation2 + $0x2a0] sm:$0xff] %v620
    %637 = vst [vmem:[#allocation2 + $0x2a8] sm:$0xff] %v621
    %638 = vst [vmem:[#allocation2 + $0x2b0] sm:$0xff] %v622
    %639 = vst [vmem:[#allocation2 + $0x2b8] sm:$0xff] %v623
    %640 = vst [vmem:[#allocation2 + $0x2c0] sm:$0xff] %v624
    %641 = vst [vmem:[#allocation2 + $0x2c8] sm:$0xff] %v625
    %642 = vst [vmem:[#allocation2 + $0x2d0] sm:$0xff] %v626
    %643 = vst [vmem:[#allocation2 + $0x2d8] sm:$0xff] %v627
    %644 = vst [vmem:[#allocation2 + $0x2e0] sm:$0xff] %v628
    %645 = vst [vmem:[#allocation2 + $0x2e8] sm:$0xff] %v629
    %646 = vst [vmem:[#allocation2 + $0x2f0] sm:$0xff] %v630
    %647 = vst [vmem:[#allocation2 + $0x2f8] sm:$0xff] %v631
    %648 = vrot.lane.b32.xlu0 %v104, 113
    %v649 = vpop.permute.xlu0 %648
    %650 = vrot.lane.b32.xlu0 %v108, 113
    %v651 = vpop.permute.xlu0 %650
    %652 = vrot.lane.b32.xlu0 %v112, 113
    %v653 = vpop.permute.xlu0 %652
    %654 = vrot.lane.b32.xlu0 %v116, 113
    %v655 = vpop.permute.xlu0 %654
    %656 = vrot.lane.b32.xlu0 %v105, 113
    %v657 = vpop.permute.xlu0 %656
    %658 = vrot.lane.b32.xlu0 %v109, 113
    %v659 = vpop.permute.xlu0 %658
    %660 = vrot.lane.b32.xlu0 %v113, 113
    %v661 = vpop.permute.xlu0 %660
    %662 = vrot.lane.b32.xlu0 %v117, 113
    %v663 = vpop.permute.xlu0 %662
    %664 = vrot.lane.b32.xlu0 %v106, 113
    %v665 = vpop.permute.xlu0 %664
    %666 = vrot.lane.b32.xlu0 %v110, 113
    %v667 = vpop.permute.xlu0 %666
    %668 = vrot.lane.b32.xlu0 %v114, 113
    %v669 = vpop.permute.xlu0 %668
    %670 = vrot.lane.b32.xlu0 %v118, 113
    %v671 = vpop.permute.xlu0 %670
    %672 = vrot.lane.b32.xlu0 %v107, 113
    %v673 = vpop.permute.xlu0 %672
    %674 = vrot.lane.b32.xlu0 %v111, 113
    %v675 = vpop.permute.xlu0 %674
    %676 = vrot.lane.b32.xlu0 %v115, 113
    %v677 = vpop.permute.xlu0 %676
    %678 = vrot.lane.b32.xlu0 %v119, 113
    %v679 = vpop.permute.xlu0 %678
    %vm680 = vcmp.lt.s32.totalorder %v153, 113
    %v681 = vsel %vm680, %v665, %v673
    %v682 = vsel %vm680, %v667, %v675
    %v683 = vsel %vm680, %v669, %v677
    %v684 = vsel %vm680, %v671, %v679
    %v685 = vsel %vm680, %v657, %v665
    %v686 = vsel %vm680, %v659, %v667
    %v687 = vsel %vm680, %v661, %v669
    %v688 = vsel %vm680, %v663, %v671
    %v689 = vsel %vm680, %v649, %v657
    %v690 = vsel %vm680, %v651, %v659
    %v691 = vsel %vm680, %v653, %v661
    %v692 = vsel %vm680, %v655, %v663
    %v693 = vsel %vm680, %v673, %v649
    %v694 = vsel %vm680, %v675, %v651
    %v695 = vsel %vm680, %v677, %v653
    %v696 = vsel %vm680, %v679, %v655
    %v698 = vlaneseq
    %v699 = vshrl.u32 %v698, 7
    %v700 = vsub.s32 0, %v699
    %v701 = vrot.slane %v99, %v700
    %v702 = vlaneseq
    %v703 = vshrl.u32 %v702, 7
    %v704 = vsub.s32 1, %v703
    %v705 = vrot.slane %v99, %v704
    %v706 = vlaneseq
    %v707 = vshrl.u32 %v706, 7
    %v708 = vsub.s32 2, %v707
    %v709 = vrot.slane %v99, %v708
    %v710 = vlaneseq
    %v711 = vshrl.u32 %v710, 7
    %v712 = vsub.s32 3, %v711
    %v713 = vrot.slane %v99, %v712
    %v718 = vmul.f32 %v689, %v701
    %v719 = vmul.f32 %v685, %v705
    %v720 = vmul.f32 %v681, %v709
    %v721 = vmul.f32 %v693, %v713
    %v722 = vmul.f32 %v690, %v701
    %v723 = vmul.f32 %v686, %v705
    %v724 = vmul.f32 %v682, %v709
    %v725 = vmul.f32 %v694, %v713
    %v726 = vmul.f32 %v691, %v701
    %v727 = vmul.f32 %v687, %v705
    %v728 = vmul.f32 %v683, %v709
    %v729 = vmul.f32 %v695, %v713
    %v730 = vmul.f32 %v692, %v701
    %v731 = vmul.f32 %v688, %v705
    %v732 = vmul.f32 %v684, %v709
    %v733 = vmul.f32 %v696, %v713
    %734 = vst [vmem:[#allocation2 + $0x300] sm:$0xff] %v718
    %735 = vst [vmem:[#allocation2 + $0x308] sm:$0xff] %v719
    %736 = vst [vmem:[#allocation2 + $0x310] sm:$0xff] %v720
    %737 = vst [vmem:[#allocation2 + $0x318] sm:$0xff] %v721
    %738 = vst [vmem:[#allocation2 + $0x320] sm:$0xff] %v722
    %739 = vst [vmem:[#allocation2 + $0x328] sm:$0xff] %v723
    %740 = vst [vmem:[#allocation2 + $0x330] sm:$0xff] %v724
    %741 = vst [vmem:[#allocation2 + $0x338] sm:$0xff] %v725
    %742 = vst [vmem:[#allocation2 + $0x340] sm:$0xff] %v726
    %743 = vst [vmem:[#allocation2 + $0x348] sm:$0xff] %v727
    %744 = vst [vmem:[#allocation2 + $0x350] sm:$0xff] %v728
    %745 = vst [vmem:[#allocation2 + $0x358] sm:$0xff] %v729
    %746 = vst [vmem:[#allocation2 + $0x360] sm:$0xff] %v730
    %747 = vst [vmem:[#allocation2 + $0x368] sm:$0xff] %v731
    %748 = vst [vmem:[#allocation2 + $0x370] sm:$0xff] %v732
    %749 = vst [vmem:[#allocation2 + $0x378] sm:$0xff] %v733
    %750 = vrot.lane.b32.xlu0 %v104, 112
    %v751 = vpop.permute.xlu0 %750
    %752 = vrot.lane.b32.xlu0 %v108, 112
    %v753 = vpop.permute.xlu0 %752
    %754 = vrot.lane.b32.xlu0 %v112, 112
    %v755 = vpop.permute.xlu0 %754
    %756 = vrot.lane.b32.xlu0 %v116, 112
    %v757 = vpop.permute.xlu0 %756
    %758 = vrot.lane.b32.xlu0 %v105, 112
    %v759 = vpop.permute.xlu0 %758
    %760 = vrot.lane.b32.xlu0 %v109, 112
    %v761 = vpop.permute.xlu0 %760
    %762 = vrot.lane.b32.xlu0 %v113, 112
    %v763 = vpop.permute.xlu0 %762
    %764 = vrot.lane.b32.xlu0 %v117, 112
    %v765 = vpop.permute.xlu0 %764
    %766 = vrot.lane.b32.xlu0 %v106, 112
    %v767 = vpop.permute.xlu0 %766
    %768 = vrot.lane.b32.xlu0 %v110, 112
    %v769 = vpop.permute.xlu0 %768
    %770 = vrot.lane.b32.xlu0 %v114, 112
    %v771 = vpop.permute.xlu0 %770
    %772 = vrot.lane.b32.xlu0 %v118, 112
    %v773 = vpop.permute.xlu0 %772
    %774 = vrot.lane.b32.xlu0 %v107, 112
    %v775 = vpop.permute.xlu0 %774
    %776 = vrot.lane.b32.xlu0 %v111, 112
    %v777 = vpop.permute.xlu0 %776
    %778 = vrot.lane.b32.xlu0 %v115, 112
    %v779 = vpop.permute.xlu0 %778
    %780 = vrot.lane.b32.xlu0 %v119, 112
    %v781 = vpop.permute.xlu0 %780
    %vm782 = vcmp.lt.s32.totalorder %v153, 112
    %v783 = vsel %vm782, %v767, %v775
    %v784 = vsel %vm782, %v769, %v777
    %v785 = vsel %vm782, %v771, %v779
    %v786 = vsel %vm782, %v773, %v781
    %v787 = vsel %vm782, %v759, %v767
    %v788 = vsel %vm782, %v761, %v769
    %v789 = vsel %vm782, %v763, %v771
    %v790 = vsel %vm782, %v765, %v773
    %v791 = vsel %vm782, %v751, %v759
    %v792 = vsel %vm782, %v753, %v761
    %v793 = vsel %vm782, %v755, %v763
    %v794 = vsel %vm782, %v757, %v765
    %v795 = vsel %vm782, %v775, %v751
    %v796 = vsel %vm782, %v777, %v753
    %v797 = vsel %vm782, %v779, %v755
    %v798 = vsel %vm782, %v781, %v757
    %v800 = vlaneseq
    %v801 = vshrl.u32 %v800, 7
    %v802 = vsub.s32 0, %v801
    %v803 = vrot.slane %v101, %v802
    %v804 = vlaneseq
    %v805 = vshrl.u32 %v804, 7
    %v806 = vsub.s32 1, %v805
    %v807 = vrot.slane %v101, %v806
    %v808 = vlaneseq
    %v809 = vshrl.u32 %v808, 7
    %v810 = vsub.s32 2, %v809
    %v811 = vrot.slane %v101, %v810
    %v812 = vlaneseq
    %v813 = vshrl.u32 %v812, 7
    %v814 = vsub.s32 3, %v813
    %v815 = vrot.slane %v101, %v814
    %v820 = vmul.f32 %v791, %v803
    %v821 = vmul.f32 %v787, %v807
    %v822 = vmul.f32 %v783, %v811
    %v823 = vmul.f32 %v795, %v815
    %v824 = vmul.f32 %v792, %v803
    %v825 = vmul.f32 %v788, %v807
    %v826 = vmul.f32 %v784, %v811
    %v827 = vmul.f32 %v796, %v815
    %v828 = vmul.f32 %v793, %v803
    %v829 = vmul.f32 %v789, %v807
    %v830 = vmul.f32 %v785, %v811
    %v831 = vmul.f32 %v797, %v815
    %v832 = vmul.f32 %v794, %v803
    %v833 = vmul.f32 %v790, %v807
    %v834 = vmul.f32 %v786, %v811
    %v835 = vmul.f32 %v798, %v815
    %836 = vst [vmem:[#allocation2 + $0x380] sm:$0xff] %v820
    %837 = vst [vmem:[#allocation2 + $0x388] sm:$0xff] %v821
    %838 = vst [vmem:[#allocation2 + $0x390] sm:$0xff] %v822
    %839 = vst [vmem:[#allocation2 + $0x398] sm:$0xff] %v823
    %840 = vst [vmem:[#allocation2 + $0x3a0] sm:$0xff] %v824
    %841 = vst [vmem:[#allocation2 + $0x3a8] sm:$0xff] %v825
    %842 = vst [vmem:[#allocation2 + $0x3b0] sm:$0xff] %v826
    %843 = vst [vmem:[#allocation2 + $0x3b8] sm:$0xff] %v827
    %844 = vst [vmem:[#allocation2 + $0x3c0] sm:$0xff] %v828
    %845 = vst [vmem:[#allocation2 + $0x3c8] sm:$0xff] %v829
    %846 = vst [vmem:[#allocation2 + $0x3d0] sm:$0xff] %v830
    %847 = vst [vmem:[#allocation2 + $0x3d8] sm:$0xff] %v831
    %848 = vst [vmem:[#allocation2 + $0x3e0] sm:$0xff] %v832
    %849 = vst [vmem:[#allocation2 + $0x3e8] sm:$0xff] %v833
    %850 = vst [vmem:[#allocation2 + $0x3f0] sm:$0xff] %v834
    %851 = vst [vmem:[#allocation2 + $0x3f8] sm:$0xff] %v835
    %852 = vrot.lane.b32.xlu0 %v104, 111
    %v853 = vpop.permute.xlu0 %852
    %854 = vrot.lane.b32.xlu0 %v108, 111
    %v855 = vpop.permute.xlu0 %854
    %856 = vrot.lane.b32.xlu0 %v112, 111
    %v857 = vpop.permute.xlu0 %856
    %858 = vrot.lane.b32.xlu0 %v116, 111
    %v859 = vpop.permute.xlu0 %858
    %860 = vrot.lane.b32.xlu0 %v105, 111
    %v861 = vpop.permute.xlu0 %860
    %862 = vrot.lane.b32.xlu0 %v109, 111
    %v863 = vpop.permute.xlu0 %862
    %864 = vrot.lane.b32.xlu0 %v113, 111
    %v865 = vpop.permute.xlu0 %864
    %866 = vrot.lane.b32.xlu0 %v117, 111
    %v867 = vpop.permute.xlu0 %866
    %868 = vrot.lane.b32.xlu0 %v106, 111
    %v869 = vpop.permute.xlu0 %868
    %870 = vrot.lane.b32.xlu0 %v110, 111
    %v871 = vpop.permute.xlu0 %870
    %872 = vrot.lane.b32.xlu0 %v114, 111
    %v873 = vpop.permute.xlu0 %872
    %874 = vrot.lane.b32.xlu0 %v118, 111
    %v875 = vpop.permute.xlu0 %874
    %876 = vrot.lane.b32.xlu0 %v107, 111
    %v877 = vpop.permute.xlu0 %876
    %878 = vrot.lane.b32.xlu0 %v111, 111
    %v879 = vpop.permute.xlu0 %878
    %880 = vrot.lane.b32.xlu0 %v115, 111
    %v881 = vpop.permute.xlu0 %880
    %882 = vrot.lane.b32.xlu0 %v119, 111
    %v883 = vpop.permute.xlu0 %882
    %vm884 = vcmp.lt.s32.totalorder %v153, 111
    %v885 = vsel %vm884, %v869, %v877
    %v886 = vsel %vm884, %v871, %v879
    %v887 = vsel %vm884, %v873, %v881
    %v888 = vsel %vm884, %v875, %v883
    %v889 = vsel %vm884, %v861, %v869
    %v890 = vsel %vm884, %v863, %v871
    %v891 = vsel %vm884, %v865, %v873
    %v892 = vsel %vm884, %v867, %v875
    %v893 = vsel %vm884, %v853, %v861
    %v894 = vsel %vm884, %v855, %v863
    %v895 = vsel %vm884, %v857, %v865
    %v896 = vsel %vm884, %v859, %v867
    %v897 = vsel %vm884, %v877, %v853
    %v898 = vsel %vm884, %v879, %v855
    %v899 = vsel %vm884, %v881, %v857
    %v900 = vsel %vm884, %v883, %v859
    %v902 = vlaneseq
    %v903 = vshrl.u32 %v902, 7
    %v904 = vsub.s32 0, %v903
    %v905 = vrot.slane %v103, %v904
    %v906 = vlaneseq
    %v907 = vshrl.u32 %v906, 7
    %v908 = vsub.s32 1, %v907
    %v909 = vrot.slane %v103, %v908
    %v910 = vlaneseq
    %v911 = vshrl.u32 %v910, 7
    %v912 = vsub.s32 2, %v911
    %v913 = vrot.slane %v103, %v912
    %v914 = vlaneseq
    %v915 = vshrl.u32 %v914, 7
    %v916 = vsub.s32 3, %v915
    %v917 = vrot.slane %v103, %v916
    %v922 = vmul.f32 %v893, %v905
    %v923 = vmul.f32 %v889, %v909
    %v924 = vmul.f32 %v885, %v913
    %v925 = vmul.f32 %v897, %v917
    %v926 = vmul.f32 %v894, %v905
    %v927 = vmul.f32 %v890, %v909
    %v928 = vmul.f32 %v886, %v913
    %v929 = vmul.f32 %v898, %v917
    %v930 = vmul.f32 %v895, %v905
    %v931 = vmul.f32 %v891, %v909
    %v932 = vmul.f32 %v887, %v913
    %v933 = vmul.f32 %v899, %v917
    %v934 = vmul.f32 %v896, %v905
    %v935 = vmul.f32 %v892, %v909
    %v936 = vmul.f32 %v888, %v913
    %v937 = vmul.f32 %v900, %v917
    %938 = vst [vmem:[#allocation2 + $0x400] sm:$0xff] %v922
    %939 = vst [vmem:[#allocation2 + $0x408] sm:$0xff] %v923
    %940 = vst [vmem:[#allocation2 + $0x410] sm:$0xff] %v924
    %941 = vst [vmem:[#allocation2 + $0x418] sm:$0xff] %v925
    %942 = vst [vmem:[#allocation2 + $0x420] sm:$0xff] %v926
    %943 = vst [vmem:[#allocation2 + $0x428] sm:$0xff] %v927
    %944 = vst [vmem:[#allocation2 + $0x430] sm:$0xff] %v928
    %945 = vst [vmem:[#allocation2 + $0x438] sm:$0xff] %v929
    %946 = vst [vmem:[#allocation2 + $0x440] sm:$0xff] %v930
    %947 = vst [vmem:[#allocation2 + $0x448] sm:$0xff] %v931
    %948 = vst [vmem:[#allocation2 + $0x450] sm:$0xff] %v932
    %949 = vst [vmem:[#allocation2 + $0x458] sm:$0xff] %v933
    %950 = vst [vmem:[#allocation2 + $0x460] sm:$0xff] %v934
    %951 = vst [vmem:[#allocation2 + $0x468] sm:$0xff] %v935
    %952 = vst [vmem:[#allocation2 + $0x470] sm:$0xff] %v936
    %953 = vst [vmem:[#allocation2 + $0x478] sm:$0xff] %v937
    %v954 = vld [vmem:[#allocation6] sm:$0xff]
    %v955 = vld [vmem:[#allocation6 + $0x8] sm:$0xff]
    %v956 = vld [vmem:[#allocation6 + $0x10] sm:$0xff]
    %v957 = vld [vmem:[#allocation6 + $0x18] sm:$0xff]
    %v958 = vld [vmem:[#allocation6 + $0x20] sm:$0xff]
    %v959 = vld [vmem:[#allocation6 + $0x28] sm:$0xff]
    %v960 = vld [vmem:[#allocation6 + $0x30] sm:$0xff]
    %v961 = vld [vmem:[#allocation6 + $0x38] sm:$0xff]
    %v962 = vld [vmem:[#allocation6 + $0x40] sm:$0xff]
    %v963 = vld [vmem:[#allocation6 + $0x48] sm:$0xff]
    %v964 = vld [vmem:[#allocation6 + $0x50] sm:$0xff]
    %v965 = vld [vmem:[#allocation6 + $0x58] sm:$0xff]
    %v966 = vld [vmem:[#allocation2] sm:$0xff]
    %v967 = vld [vmem:[#allocation2 + $0x8] sm:$0xff]
    %v968 = vld [vmem:[#allocation2 + $0x10] sm:$0xff]
    %v969 = vld [vmem:[#allocation2 + $0x18] sm:$0xff]
    %v970 = vld [vmem:[#allocation2 + $0x20] sm:$0xff]
    %v971 = vld [vmem:[#allocation2 + $0x28] sm:$0xff]
    %v972 = vld [vmem:[#allocation2 + $0x30] sm:$0xff]
    %v973 = vld [vmem:[#allocation2 + $0x38] sm:$0xff]
    %v974 = vld [vmem:[#allocation2 + $0x40] sm:$0xff]
    %v975 = vld [vmem:[#allocation2 + $0x48] sm:$0xff]
    %v976 = vld [vmem:[#allocation2 + $0x50] sm:$0xff]
    %v977 = vld [vmem:[#allocation2 + $0x58] sm:$0xff]
    %v978 = vld [vmem:[#allocation2 + $0x60] sm:$0xff]
    %v979 = vld [vmem:[#allocation2 + $0x68] sm:$0xff]
    %v980 = vld [vmem:[#allocation2 + $0x70] sm:$0xff]
    %v981 = vld [vmem:[#allocation2 + $0x78] sm:$0xff]
    %v982 = vld [vmem:[#allocation2 + $0x80] sm:$0xff]
    %v983 = vld [vmem:[#allocation2 + $0x88] sm:$0xff]
    %v984 = vld [vmem:[#allocation2 + $0x90] sm:$0xff]
    %v985 = vld [vmem:[#allocation2 + $0x98] sm:$0xff]
    %v986 = vld [vmem:[#allocation2 + $0xa0] sm:$0xff]
    %v987 = vld [vmem:[#allocation2 + $0xa8] sm:$0xff]
    %v988 = vld [vmem:[#allocation2 + $0xb0] sm:$0xff]
    %v989 = vld [vmem:[#allocation2 + $0xb8] sm:$0xff]
    %v990 = vld [vmem:[#allocation2 + $0xc0] sm:$0xff]
    %v991 = vld [vmem:[#allocation2 + $0xc8] sm:$0xff]
    %v992 = vld [vmem:[#allocation2 + $0xd0] sm:$0xff]
    %v993 = vld [vmem:[#allocation2 + $0xd8] sm:$0xff]
    %v994 = vld [vmem:[#allocation2 + $0xe0] sm:$0xff]
    %v995 = vld [vmem:[#allocation2 + $0xe8] sm:$0xff]
    %v996 = vld [vmem:[#allocation2 + $0xf0] sm:$0xff]
    %v997 = vld [vmem:[#allocation2 + $0xf8] sm:$0xff]
    %v998 = vld [vmem:[#allocation2 + $0x100] sm:$0xff]
    %v999 = vld [vmem:[#allocation2 + $0x108] sm:$0xff]
    %v1000 = vld [vmem:[#allocation2 + $0x110] sm:$0xff]
    %v1001 = vld [vmem:[#allocation2 + $0x118] sm:$0xff]
    %v1002 = vld [vmem:[#allocation2 + $0x120] sm:$0xff]
    %v1003 = vld [vmem:[#allocation2 + $0x128] sm:$0xff]
    %v1004 = vld [vmem:[#allocation2 + $0x130] sm:$0xff]
    %v1005 = vld [vmem:[#allocation2 + $0x138] sm:$0xff]
    %v1006 = vld [vmem:[#allocation2 + $0x140] sm:$0xff]
    %v1007 = vld [vmem:[#allocation2 + $0x148] sm:$0xff]
    %v1008 = vld [vmem:[#allocation2 + $0x150] sm:$0xff]
    %v1009 = vld [vmem:[#allocation2 + $0x158] sm:$0xff]
    %v1010 = vld [vmem:[#allocation2 + $0x160] sm:$0xff]
    %v1011 = vld [vmem:[#allocation2 + $0x168] sm:$0xff]
    %v1012 = vld [vmem:[#allocation2 + $0x170] sm:$0xff]
    %v1013 = vld [vmem:[#allocation2 + $0x178] sm:$0xff]
    %v1014 = vld [vmem:[#allocation2 + $0x180] sm:$0xff]
    %v1015 = vld [vmem:[#allocation2 + $0x188] sm:$0xff]
    %v1016 = vld [vmem:[#allocation2 + $0x190] sm:$0xff]
    %v1017 = vld [vmem:[#allocation2 + $0x198] sm:$0xff]
    %v1018 = vld [vmem:[#allocation2 + $0x1a0] sm:$0xff]
    %v1019 = vld [vmem:[#allocation2 + $0x1a8] sm:$0xff]
    %v1020 = vld [vmem:[#allocation2 + $0x1b0] sm:$0xff]
    %v1021 = vld [vmem:[#allocation2 + $0x1b8] sm:$0xff]
    %v1022 = vld [vmem:[#allocation2 + $0x1c0] sm:$0xff]
    %v1023 = vld [vmem:[#allocation2 + $0x1c8] sm:$0xff]
    %v1024 = vld [vmem:[#allocation2 + $0x1d0] sm:$0xff]
    %v1025 = vld [vmem:[#allocation2 + $0x1d8] sm:$0xff]
    %v1026 = vld [vmem:[#allocation2 + $0x1e0] sm:$0xff]
    %v1027 = vld [vmem:[#allocation2 + $0x1e8] sm:$0xff]
    %v1028 = vld [vmem:[#allocation2 + $0x1f0] sm:$0xff]
    %v1029 = vld [vmem:[#allocation2 + $0x1f8] sm:$0xff]
    %v1030 = vld [vmem:[#allocation2 + $0x200] sm:$0xff]
    %v1031 = vld [vmem:[#allocation2 + $0x208] sm:$0xff]
    %v1032 = vld [vmem:[#allocation2 + $0x210] sm:$0xff]
    %v1033 = vld [vmem:[#allocation2 + $0x218] sm:$0xff]
    %v1034 = vld [vmem:[#allocation2 + $0x220] sm:$0xff]
    %v1035 = vld [vmem:[#allocation2 + $0x228] sm:$0xff]
    %v1036 = vld [vmem:[#allocation2 + $0x230] sm:$0xff]
    %v1037 = vld [vmem:[#allocation2 + $0x238] sm:$0xff]
    %v1038 = vld [vmem:[#allocation2 + $0x240] sm:$0xff]
    %v1039 = vld [vmem:[#allocation2 + $0x248] sm:$0xff]
    %v1040 = vld [vmem:[#allocation2 + $0x250] sm:$0xff]
    %v1041 = vld [vmem:[#allocation2 + $0x258] sm:$0xff]
    %v1042 = vld [vmem:[#allocation2 + $0x260] sm:$0xff]
    %v1043 = vld [vmem:[#allocation2 + $0x268] sm:$0xff]
    %v1044 = vld [vmem:[#allocation2 + $0x270] sm:$0xff]
    %v1045 = vld [vmem:[#allocation2 + $0x278] sm:$0xff]
    %v1046 = vld [vmem:[#allocation2 + $0x280] sm:$0xff]
    %v1047 = vld [vmem:[#allocation2 + $0x288] sm:$0xff]
    %v1048 = vld [vmem:[#allocation2 + $0x290] sm:$0xff]
    %v1049 = vld [vmem:[#allocation2 + $0x298] sm:$0xff]
    %v1050 = vld [vmem:[#allocation2 + $0x2a0] sm:$0xff]
    %v1051 = vld [vmem:[#allocation2 + $0x2a8] sm:$0xff]
    %v1052 = vld [vmem:[#allocation2 + $0x2b0] sm:$0xff]
    %v1053 = vld [vmem:[#allocation2 + $0x2b8] sm:$0xff]
    %v1054 = vld [vmem:[#allocation2 + $0x2c0] sm:$0xff]
    %v1055 = vld [vmem:[#allocation2 + $0x2c8] sm:$0xff]
    %v1056 = vld [vmem:[#allocation2 + $0x2d0] sm:$0xff]
    %v1057 = vld [vmem:[#allocation2 + $0x2d8] sm:$0xff]
    %v1058 = vld [vmem:[#allocation2 + $0x2e0] sm:$0xff]
    %v1059 = vld [vmem:[#allocation2 + $0x2e8] sm:$0xff]
    %v1060 = vld [vmem:[#allocation2 + $0x2f0] sm:$0xff]
    %v1061 = vld [vmem:[#allocation2 + $0x2f8] sm:$0xff]
    %v1062 = vld [vmem:[#allocation2 + $0x300] sm:$0xff]
    %v1063 = vld [vmem:[#allocation2 + $0x308] sm:$0xff]
    %v1064 = vld [vmem:[#allocation2 + $0x310] sm:$0xff]
    %v1065 = vld [vmem:[#allocation2 + $0x318] sm:$0xff]
    %v1066 = vld [vmem:[#allocation2 + $0x320] sm:$0xff]
    %v1067 = vld [vmem:[#allocation2 + $0x328] sm:$0xff]
    %v1068 = vld [vmem:[#allocation2 + $0x330] sm:$0xff]
    %v1069 = vld [vmem:[#allocation2 + $0x338] sm:$0xff]
    %v1070 = vld [vmem:[#allocation2 + $0x340] sm:$0xff]
    %v1071 = vld [vmem:[#allocation2 + $0x348] sm:$0xff]
    %v1072 = vld [vmem:[#allocation2 + $0x350] sm:$0xff]
    %v1073 = vld [vmem:[#allocation2 + $0x358] sm:$0xff]
    %v1074 = vld [vmem:[#allocation2 + $0x360] sm:$0xff]
    %v1075 = vld [vmem:[#allocation2 + $0x368] sm:$0xff]
    %v1076 = vld [vmem:[#allocation2 + $0x370] sm:$0xff]
    %v1077 = vld [vmem:[#allocation2 + $0x378] sm:$0xff]
    %v1078 = vld [vmem:[#allocation2 + $0x380] sm:$0xff]
    %v1079 = vld [vmem:[#allocation2 + $0x388] sm:$0xff]
    %v1080 = vld [vmem:[#allocation2 + $0x390] sm:$0xff]
    %v1081 = vld [vmem:[#allocation2 + $0x398] sm:$0xff]
    %v1082 = vld [vmem:[#allocation2 + $0x3a0] sm:$0xff]
    %v1083 = vld [vmem:[#allocation2 + $0x3a8] sm:$0xff]
    %v1084 = vld [vmem:[#allocation2 + $0x3b0] sm:$0xff]
    %v1085 = vld [vmem:[#allocation2 + $0x3b8] sm:$0xff]
    %v1086 = vld [vmem:[#allocation2 + $0x3c0] sm:$0xff]
    %v1087 = vld [vmem:[#allocation2 + $0x3c8] sm:$0xff]
    %v1088 = vld [vmem:[#allocation2 + $0x3d0] sm:$0xff]
    %v1089 = vld [vmem:[#allocation2 + $0x3d8] sm:$0xff]
    %v1090 = vld [vmem:[#allocation2 + $0x3e0] sm:$0xff]
    %v1091 = vld [vmem:[#allocation2 + $0x3e8] sm:$0xff]
    %v1092 = vld [vmem:[#allocation2 + $0x3f0] sm:$0xff]
    %v1093 = vld [vmem:[#allocation2 + $0x3f8] sm:$0xff]
    %v1094 = vld [vmem:[#allocation2 + $0x400] sm:$0xff]
    %v1095 = vld [vmem:[#allocation2 + $0x408] sm:$0xff]
    %v1096 = vld [vmem:[#allocation2 + $0x410] sm:$0xff]
    %v1097 = vld [vmem:[#allocation2 + $0x418] sm:$0xff]
    %v1098 = vld [vmem:[#allocation2 + $0x420] sm:$0xff]
    %v1099 = vld [vmem:[#allocation2 + $0x428] sm:$0xff]
    %v1100 = vld [vmem:[#allocation2 + $0x430] sm:$0xff]
    %v1101 = vld [vmem:[#allocation2 + $0x438] sm:$0xff]
    %v1102 = vld [vmem:[#allocation2 + $0x440] sm:$0xff]
    %v1103 = vld [vmem:[#allocation2 + $0x448] sm:$0xff]
    %v1104 = vld [vmem:[#allocation2 + $0x450] sm:$0xff]
    %v1105 = vld [vmem:[#allocation2 + $0x458] sm:$0xff]
    %v1106 = vld [vmem:[#allocation2 + $0x460] sm:$0xff]
    %v1107 = vld [vmem:[#allocation2 + $0x468] sm:$0xff]
    %v1108 = vld [vmem:[#allocation2 + $0x470] sm:$0xff]
    %v1109 = vld [vmem:[#allocation2 + $0x478] sm:$0xff]
    %v1110 = vld [vmem:[#allocation8] sm:$0xff]
    %v1111 = vld [vmem:[#allocation8 + $0x8] sm:$0xff]
    %v1112 = vld [vmem:[#allocation8 + $0x10] sm:$0xff]
    %v1113 = vld [vmem:[#allocation8 + $0x18] sm:$0xff]
    %1115 = vset.pattern.permute.xlu0 0
    %1116 = vperm.xlu0 %1115, %v1110
    %v1117 = vpop.permute.xlu0 %1116
    %1120 = vset.pattern.permute.xlu0 0
    %1121 = vperm.xlu0 %1120, %v1111
    %v1122 = vpop.permute.xlu0 %1121
    %1125 = vset.pattern.permute.xlu0 0
    %1126 = vperm.xlu0 %1125, %v1112
    %v1127 = vpop.permute.xlu0 %1126
    %1130 = vset.pattern.permute.xlu0 0
    %1131 = vperm.xlu0 %1130, %v1113
    %v1132 = vpop.permute.xlu0 %1131
    %vm1134 = vcmask 261120
    %v1136 = vsel %vm1134, %v956, 0
    %v1139 = vsel %vm1134, %v959, 0
    %v1142 = vsel %vm1134, %v962, 0
    %v1145 = vsel %vm1134, %v965, 0
    %1147 = vmatprep.subr.mxu0 %v967
    %1148 = vmatpush1.msra.mxu0 %v966
    %1149 = vmatprep.subr.mxu0 %v971
    %1150 = vmatpush1.msra.mxu0 %v970
    %1151 = vmatprep.subr.mxu0 %v975
    %1152 = vmatpush1.msra.mxu0 %v974
    %1153 = vmatprep.subr.mxu0 %v979
    %1154 = vmatpush1.msra.mxu0 %v978
    %1155 = vmatprep.subr.mxu0 %v983
    %1156 = vmatpush1.msra.mxu0 %v982
    %1157 = vmatprep.subr.mxu0 %v987
    %1158 = vmatpush1.msra.mxu0 %v986
    %1159 = vmatprep.subr.mxu0 %v991
    %1160 = vmatpush1.msra.mxu0 %v990
    %1161 = vmatprep.subr.mxu0 %v995
    %1162 = vmatpush1.msra.mxu0 %v994
    %1163 = vmatprep.subr.mxu0 %v999
    %1164 = vmatpush1.msra.mxu0 %v998
    %1165 = vmatprep.subr.mxu0 %v1003
    %1166 = vmatpush1.msra.mxu0 %v1002
    %1167 = vmatprep.subr.mxu0 %v1007
    %1168 = vmatpush1.msra.mxu0 %v1006
    %1169 = vmatprep.subr.mxu0 %v1011
    %1170 = vmatpush1.msra.mxu0 %v1010
    %1171 = vmatprep.subr.mxu0 %v1015
    %1172 = vmatpush1.msra.mxu0 %v1014
    %1173 = vmatprep.subr.mxu0 %v1019
    %1174 = vmatpush1.msra.mxu0 %v1018
    %1175 = vmatprep.subr.mxu0 %v1023
    %1176 = vmatpush1.msra.mxu0 %v1022
    %1177 = vmatprep.subr.mxu0 %v1027
    %1178 = vmatpush1.msra.mxu0 %v1026
    %1179 = vmatprep.subr.mxu0 %v1031
    %1180 = vmatpush1.msra.mxu0 %v1030
    %1181 = vmatprep.subr.mxu0 %v1035
    %1182 = vmatpush1.msra.mxu0 %v1034
    %1183 = vmatprep.subr.mxu0 %v1039
    %1184 = vmatpush1.msra.mxu0 %v1038
    %1185 = vmatprep.subr.mxu0 %v1043
    %1186 = vmatpush1.msra.mxu0 %v1042
    %1187 = vmatprep.subr.mxu0 %v1047
    %1188 = vmatpush1.msra.mxu0 %v1046
    %1189 = vmatprep.subr.mxu0 %v1051
    %1190 = vmatpush1.msra.mxu0 %v1050
    %1191 = vmatprep.subr.mxu0 %v1055
    %1192 = vmatpush1.msra.mxu0 %v1054
    %1193 = vmatprep.subr.mxu0 %v1059
    %1194 = vmatpush1.msra.mxu0 %v1058
    %1195 = vmatprep.subr.mxu0 %v1063
    %1196 = vmatpush1.msra.mxu0 %v1062
    %1197 = vmatprep.subr.mxu0 %v1067
    %1198 = vmatpush1.msra.mxu0 %v1066
    %1199 = vmatprep.subr.mxu0 %v1071
    %1200 = vmatpush1.msra.mxu0 %v1070
    %1201 = vmatprep.subr.mxu0 %v1075
    %1202 = vmatpush1.msra.mxu0 %v1074
    %1203 = vmatprep.subr.mxu0 %v1079
    %1204 = vmatpush1.msra.mxu0 %v1078
    %1205 = vmatprep.subr.mxu0 %v1083
    %1206 = vmatpush1.msra.mxu0 %v1082
    %1207 = vmatprep.subr.mxu0 %v1087
    %1208 = vmatpush1.msra.mxu0 %v1086
    %1209 = vmatprep.subr.mxu0 %v1091
    %1210 = vmatpush1.msra.mxu0 %v1090
    %1211 = vmatprep.mubr.f32.mxu0 %v955
    %1212 = vmatmul.mubr.f32.gmra.mrb[0].mxu0 %v954
    %v1213 = vpop.f32.mrb[0].mxu0
    %v1214 = vadd.f32 %v1117, %v1213
    %v1215 = vpop.f32.mrb[0].mxu0
    %v1216 = vadd.f32 %v1117, %v1215
    %1217 = vmatprep.mubr.f32.mxu0 %v958
    %1218 = vmatmul.mubr.f32.gmra.mrb[0].mxu0 %v957
    %v1219 = vpop.f32.mrb[0].mxu0
    %v1220 = vadd.f32 %v1122, %v1219
    %v1221 = vpop.f32.mrb[0].mxu0
    %v1222 = vadd.f32 %v1122, %v1221
    %1223 = vmatprep.mubr.f32.mxu0 %v961
    %1224 = vmatmul.mubr.f32.gmra.mrb[0].mxu0 %v960
    %v1225 = vpop.f32.mrb[0].mxu0
    %v1226 = vadd.f32 %v1127, %v1225
    %v1227 = vpop.f32.mrb[0].mxu0
    %v1228 = vadd.f32 %v1127, %v1227
    %1229 = vmatprep.mubr.f32.mxu0 %v964
    %1230 = vmatmul.mubr.f32.gmra.mrb[0].mxu0 %v963
    %v1231 = vpop.f32.mrb[0].mxu0
    %v1232 = vadd.f32 %v1132, %v1231
    %v1233 = vpop.f32.mrb[0].mxu0
    %v1234 = vadd.f32 %v1132, %v1233
    %1235 = vdwg.mxu0
    %1236 = vmatprep.subr.mxu0 %v1095
    %1237 = vmatpush1.msra.mxu0 %v1094
    %1238 = vmatprep.subr.mxu0 %v1099
    %1239 = vmatpush1.msra.mxu0 %v1098
    %1240 = vmatprep.subr.mxu0 %v1103
    %1241 = vmatpush1.msra.mxu0 %v1102
    %1242 = vmatprep.subr.mxu0 %v1107
    %1243 = vmatpush1.msra.mxu0 %v1106
    %1244 = vmatprep.subr.mxu0 0.0
    %1245 = vmatpush1.msra.mxu0 0.0
    %1246 = vmatprep.subr.mxu0 0.0
    %1247 = vmatpush1.msra.mxu0 0.0
    %1248 = vmatprep.subr.mxu0 0.0
    %1249 = vmatpush1.msra.mxu0 0.0
    %1250 = vmatprep.subr.mxu0 0.0
    %1251 = vmatpush1.msra.mxu0 0.0
    %1252 = vmatprep.subr.mxu0 0.0
    %1253 = vmatpush1.msra.mxu0 0.0
    %1254 = vmatprep.subr.mxu0 0.0
    %1255 = vmatpush1.msra.mxu0 0.0
    %1256 = vmatprep.subr.mxu0 0.0
    %1257 = vmatpush1.msra.mxu0 0.0
    %1258 = vmatprep.subr.mxu0 0.0
    %1259 = vmatpush1.msra.mxu0 0.0
    %1260 = vmatprep.subr.mxu0 0.0
    %1261 = vmatpush1.msra.mxu0 0.0
    %1262 = vmatprep.subr.mxu0 0.0
    %1263 = vmatpush1.msra.mxu0 0.0
    %1264 = vmatprep.subr.mxu0 0.0
    %1265 = vmatpush1.msra.mxu0 0.0
    %1266 = vmatprep.subr.mxu0 0.0
    %1267 = vmatpush1.msra.mxu0 0.0
    %1268 = vmatprep.subr.mxu0 0.0
    %1269 = vmatpush1.msra.mxu0 0.0
    %1270 = vmatprep.subr.mxu0 0.0
    %1271 = vmatpush1.msra.mxu0 0.0
    %1272 = vmatprep.subr.mxu0 0.0
    %1273 = vmatpush1.msra.mxu0 0.0
    %1274 = vmatprep.subr.mxu0 0.0
    %1275 = vmatpush1.msra.mxu0 0.0
    %1276 = vmatprep.subr.mxu0 0.0
    %1277 = vmatpush1.msra.mxu0 0.0
    %1278 = vmatprep.subr.mxu0 0.0
    %1279 = vmatpush1.msra.mxu0 0.0
    %1280 = vmatprep.subr.mxu0 0.0
    %1281 = vmatpush1.msra.mxu0 0.0
    %1282 = vmatprep.subr.mxu0 0.0
    %1283 = vmatpush1.msra.mxu0 0.0
    %1284 = vmatprep.subr.mxu0 0.0
    %1285 = vmatpush1.msra.mxu0 0.0
    %1286 = vmatprep.subr.mxu0 0.0
    %1287 = vmatpush1.msra.mxu0 0.0
    %1288 = vmatprep.subr.mxu0 0.0
    %1289 = vmatpush1.msra.mxu0 0.0
    %1290 = vmatprep.subr.mxu0 0.0
    %1291 = vmatpush1.msra.mxu0 0.0
    %1292 = vmatprep.subr.mxu0 0.0
    %1293 = vmatpush1.msra.mxu0 0.0
    %1294 = vmatprep.subr.mxu0 0.0
    %1295 = vmatpush1.msra.mxu0 0.0
    %1296 = vmatprep.subr.mxu0 0.0
    %1297 = vmatpush1.msra.mxu0 0.0
    %1298 = vmatprep.subr.mxu0 0.0
    %1299 = vmatpush1.msra.mxu0 0.0
    %1300 = vmatprep.mubr.f32.mxu0 0.0
    %1301 = vmatmul.mubr.f32.gmra.mrb[0].mxu0 %v1136
    %v1302 = vpop.f32.mrb[0].mxu0
    %v1303 = vadd.f32 %v1214, %v1302
    %v1304 = vpop.f32.mrb[0].mxu0
    %v1305 = vadd.f32 %v1216, %v1304
    %1306 = vmatprep.mubr.f32.mxu0 0.0
    %1307 = vmatmul.mubr.f32.gmra.mrb[0].mxu0 %v1139
    %v1308 = vpop.f32.mrb[0].mxu0
    %v1309 = vadd.f32 %v1220, %v1308
    %v1310 = vpop.f32.mrb[0].mxu0
    %v1311 = vadd.f32 %v1222, %v1310
    %1312 = vmatprep.mubr.f32.mxu0 0.0
    %1313 = vmatmul.mubr.f32.gmra.mrb[0].mxu0 %v1142
    %v1314 = vpop.f32.mrb[0].mxu0
    %v1315 = vadd.f32 %v1226, %v1314
    %v1316 = vpop.f32.mrb[0].mxu0
    %v1317 = vadd.f32 %v1228, %v1316
    %1318 = vmatprep.mubr.f32.mxu0 0.0
    %1319 = vmatmul.mubr.f32.gmra.mrb[0].mxu0 %v1145
    %v1320 = vpop.f32.mrb[0].mxu0
    %v1321 = vadd.f32 %v1232, %v1320
    %v1322 = vpop.f32.mrb[0].mxu0
    %v1323 = vadd.f32 %v1234, %v1322
    %1324 = vdwg.mxu0
    %1325 = vmatprep.subr.mxu0 %v969
    %1326 = vmatpush1.msra.mxu0 %v968
    %1327 = vmatprep.subr.mxu0 %v973
    %1328 = vmatpush1.msra.mxu0 %v972
    %1329 = vmatprep.subr.mxu0 %v977
    %1330 = vmatpush1.msra.mxu0 %v976
    %1331 = vmatprep.subr.mxu0 %v981
    %1332 = vmatpush1.msra.mxu0 %v980
    %1333 = vmatprep.subr.mxu0 %v985
    %1334 = vmatpush1.msra.mxu0 %v984
    %1335 = vmatprep.subr.mxu0 %v989
    %1336 = vmatpush1.msra.mxu0 %v988
    %1337 = vmatprep.subr.mxu0 %v993
    %1338 = vmatpush1.msra.mxu0 %v992
    %1339 = vmatprep.subr.mxu0 %v997
    %1340 = vmatpush1.msra.mxu0 %v996
    %1341 = vmatprep.subr.mxu0 %v1001
    %1342 = vmatpush1.msra.mxu0 %v1000
    %1343 = vmatprep.subr.mxu0 %v1005
    %1344 = vmatpush1.msra.mxu0 %v1004
    %1345 = vmatprep.subr.mxu0 %v1009
    %1346 = vmatpush1.msra.mxu0 %v1008
    %1347 = vmatprep.subr.mxu0 %v1013
    %1348 = vmatpush1.msra.mxu0 %v1012
    %1349 = vmatprep.subr.mxu0 %v1017
    %1350 = vmatpush1.msra.mxu0 %v1016
    %1351 = vmatprep.subr.mxu0 %v1021
    %1352 = vmatpush1.msra.mxu0 %v1020
    %1353 = vmatprep.subr.mxu0 %v1025
    %1354 = vmatpush1.msra.mxu0 %v1024
    %1355 = vmatprep.subr.mxu0 %v1029
    %1356 = vmatpush1.msra.mxu0 %v1028
    %1357 = vmatprep.subr.mxu0 %v1033
    %1358 = vmatpush1.msra.mxu0 %v1032
    %1359 = vmatprep.subr.mxu0 %v1037
    %1360 = vmatpush1.msra.mxu0 %v1036
    %1361 = vmatprep.subr.mxu0 %v1041
    %1362 = vmatpush1.msra.mxu0 %v1040
    %1363 = vmatprep.subr.mxu0 %v1045
    %1364 = vmatpush1.msra.mxu0 %v1044
    %1365 = vmatprep.subr.mxu0 %v1049
    %1366 = vmatpush1.msra.mxu0 %v1048
    %1367 = vmatprep.subr.mxu0 %v1053
    %1368 = vmatpush1.msra.mxu0 %v1052
    %1369 = vmatprep.subr.mxu0 %v1057
    %1370 = vmatpush1.msra.mxu0 %v1056
    %1371 = vmatprep.subr.mxu0 %v1061
    %1372 = vmatpush1.msra.mxu0 %v1060
    %1373 = vmatprep.subr.mxu0 %v1065
    %1374 = vmatpush1.msra.mxu0 %v1064
    %1375 = vmatprep.subr.mxu0 %v1069
    %1376 = vmatpush1.msra.mxu0 %v1068
    %1377 = vmatprep.subr.mxu0 %v1073
    %1378 = vmatpush1.msra.mxu0 %v1072
    %1379 = vmatprep.subr.mxu0 %v1077
    %1380 = vmatpush1.msra.mxu0 %v1076
    %1381 = vmatprep.subr.mxu0 %v1081
    %1382 = vmatpush1.msra.mxu0 %v1080
    %1383 = vmatprep.subr.mxu0 %v1085
    %1384 = vmatpush1.msra.mxu0 %v1084
    %1385 = vmatprep.subr.mxu0 %v1089
    %1386 = vmatpush1.msra.mxu0 %v1088
    %1387 = vmatprep.subr.mxu0 %v1093
    %1388 = vmatpush1.msra.mxu0 %v1092
    %1389 = vmatprep.mubr.f32.mxu0 %v955
    %1390 = vmatmul.mubr.f32.gmra.mrb[0].mxu0 %v954
    %v1391 = vpop.f32.mrb[0].mxu0
    %v1392 = vadd.f32 %v1117, %v1391
    %v1393 = vpop.f32.mrb[0].mxu0
    %v1394 = vadd.f32 %v1117, %v1393
    %1395 = vmatprep.mubr.f32.mxu0 %v958
    %1396 = vmatmul.mubr.f32.gmra.mrb[0].mxu0 %v957
    %v1397 = vpop.f32.mrb[0].mxu0
    %v1398 = vadd.f32 %v1122, %v1397
    %v1399 = vpop.f32.mrb[0].mxu0
    %v1400 = vadd.f32 %v1122, %v1399
    %1401 = vmatprep.mubr.f32.mxu0 %v961
    %1402 = vmatmul.mubr.f32.gmra.mrb[0].mxu0 %v960
    %v1403 = vpop.f32.mrb[0].mxu0
    %v1404 = vadd.f32 %v1127, %v1403
    %v1405 = vpop.f32.mrb[0].mxu0
    %v1406 = vadd.f32 %v1127, %v1405
    %1407 = vmatprep.mubr.f32.mxu0 %v964
    %1408 = vmatmul.mubr.f32.gmra.mrb[0].mxu0 %v963
    %v1409 = vpop.f32.mrb[0].mxu0
    %v1410 = vadd.f32 %v1132, %v1409
    %v1411 = vpop.f32.mrb[0].mxu0
    %v1412 = vadd.f32 %v1132, %v1411
    %1413 = vdwg.mxu0
    %1414 = vmatprep.subr.mxu0 %v1097
    %1415 = vmatpush1.msra.mxu0 %v1096
    %1416 = vmatprep.subr.mxu0 %v1101
    %1417 = vmatpush1.msra.mxu0 %v1100
    %1418 = vmatprep.subr.mxu0 %v1105
    %1419 = vmatpush1.msra.mxu0 %v1104
    %1420 = vmatprep.subr.mxu0 %v1109
    %1421 = vmatpush1.msra.mxu0 %v1108
    %1422 = vmatprep.subr.mxu0 0.0
    %1423 = vmatpush1.msra.mxu0 0.0
    %1424 = vmatprep.subr.mxu0 0.0
    %1425 = vmatpush1.msra.mxu0 0.0
    %1426 = vmatprep.subr.mxu0 0.0
    %1427 = vmatpush1.msra.mxu0 0.0
    %1428 = vmatprep.subr.mxu0 0.0
    %1429 = vmatpush1.msra.mxu0 0.0
    %1430 = vmatprep.subr.mxu0 0.0
    %1431 = vmatpush1.msra.mxu0 0.0
    %1432 = vmatprep.subr.mxu0 0.0
    %1433 = vmatpush1.msra.mxu0 0.0
    %1434 = vmatprep.subr.mxu0 0.0
    %1435 = vmatpush1.msra.mxu0 0.0
    %1436 = vmatprep.subr.mxu0 0.0
    %1437 = vmatpush1.msra.mxu0 0.0
    %1438 = vmatprep.subr.mxu0 0.0
    %1439 = vmatpush1.msra.mxu0 0.0
    %1440 = vmatprep.subr.mxu0 0.0
    %1441 = vmatpush1.msra.mxu0 0.0
    %1442 = vmatprep.subr.mxu0 0.0
    %1443 = vmatpush1.msra.mxu0 0.0
    %1444 = vmatprep.subr.mxu0 0.0
    %1445 = vmatpush1.msra.mxu0 0.0
    %1446 = vmatprep.subr.mxu0 0.0
    %1447 = vmatpush1.msra.mxu0 0.0
    %1448 = vmatprep.subr.mxu0 0.0
    %1449 = vmatpush1.msra.mxu0 0.0
    %1450 = vmatprep.subr.mxu0 0.0
    %1451 = vmatpush1.msra.mxu0 0.0
    %1452 = vmatprep.subr.mxu0 0.0
    %1453 = vmatpush1.msra.mxu0 0.0
    %1454 = vmatprep.subr.mxu0 0.0
    %1455 = vmatpush1.msra.mxu0 0.0
    %1456 = vmatprep.subr.mxu0 0.0
    %1457 = vmatpush1.msra.mxu0 0.0
    %1458 = vmatprep.subr.mxu0 0.0
    %1459 = vmatpush1.msra.mxu0 0.0
    %1460 = vmatprep.subr.mxu0 0.0
    %1461 = vmatpush1.msra.mxu0 0.0
    %1462 = vmatprep.subr.mxu0 0.0
    %1463 = vmatpush1.msra.mxu0 0.0
    %1464 = vmatprep.subr.mxu0 0.0
    %1465 = vmatpush1.msra.mxu0 0.0
    %1466 = vmatprep.subr.mxu0 0.0
    %1467 = vmatpush1.msra.mxu0 0.0
    %1468 = vmatprep.subr.mxu0 0.0
    %1469 = vmatpush1.msra.mxu0 0.0
    %1470 = vmatprep.subr.mxu0 0.0
    %1471 = vmatpush1.msra.mxu0 0.0
    %1472 = vmatprep.subr.mxu0 0.0
    %1473 = vmatpush1.msra.mxu0 0.0
    %1474 = vmatprep.subr.mxu0 0.0
    %1475 = vmatpush1.msra.mxu0 0.0
    %1476 = vmatprep.subr.mxu0 0.0
    %1477 = vmatpush1.msra.mxu0 0.0
    %1478 = vmatprep.mubr.f32.mxu0 0.0
    %1479 = vmatmul.mubr.f32.gmra.mrb[0].mxu0 %v1136
    %v1480 = vpop.f32.mrb[0].mxu0
    %v1481 = vadd.f32 %v1392, %v1480
    %v1482 = vpop.f32.mrb[0].mxu0
    %v1483 = vadd.f32 %v1394, %v1482
    %1484 = vmatprep.mubr.f32.mxu0 0.0
    %1485 = vmatmul.mubr.f32.gmra.mrb[0].mxu0 %v1139
    %v1486 = vpop.f32.mrb[0].mxu0
    %v1487 = vadd.f32 %v1398, %v1486
    %v1488 = vpop.f32.mrb[0].mxu0
    %v1489 = vadd.f32 %v1400, %v1488
    %1490 = vmatprep.mubr.f32.mxu0 0.0
    %1491 = vmatmul.mubr.f32.gmra.mrb[0].mxu0 %v1142
    %v1492 = vpop.f32.mrb[0].mxu0
    %v1493 = vadd.f32 %v1404, %v1492
    %v1494 = vpop.f32.mrb[0].mxu0
    %v1495 = vadd.f32 %v1406, %v1494
    %1496 = vmatprep.mubr.f32.mxu0 0.0
    %1497 = vmatmul.mubr.f32.gmra.mrb[0].mxu0 %v1145
    %v1498 = vpop.f32.mrb[0].mxu0
    %v1499 = vadd.f32 %v1410, %v1498
    %v1500 = vpop.f32.mrb[0].mxu0
    %v1501 = vadd.f32 %v1412, %v1500
    %1502 = vdwg.mxu0
    %v1503 = vmax.f32 %v1303, 0.0
    %v1504 = vmax.f32 %v1305, 0.0
    %v1505 = vmax.f32 %v1481, 0.0
    %v1506 = vmax.f32 %v1483, 0.0
    %v1507 = vmax.f32 %v1309, 0.0
    %v1508 = vmax.f32 %v1311, 0.0
    %v1509 = vmax.f32 %v1487, 0.0
    %v1510 = vmax.f32 %v1489, 0.0
    %v1511 = vmax.f32 %v1315, 0.0
    %v1512 = vmax.f32 %v1317, 0.0
    %v1513 = vmax.f32 %v1493, 0.0
    %v1514 = vmax.f32 %v1495, 0.0
    %v1515 = vmax.f32 %v1321, 0.0
    %v1516 = vmax.f32 %v1323, 0.0
    %v1517 = vmax.f32 %v1499, 0.0
    %v1518 = vmax.f32 %v1501, 0.0
    %1519 = vrot.lane.b32.xlu0 %v1503, 17
    %v1520 = vpop.permute.xlu0 %1519
    %1521 = vrot.lane.b32.xlu0 %v1507, 17
    %v1522 = vpop.permute.xlu0 %1521
    %1523 = vrot.lane.b32.xlu0 %v1511, 17
    %v1524 = vpop.permute.xlu0 %1523
    %1525 = vrot.lane.b32.xlu0 %v1515, 17
    %v1526 = vpop.permute.xlu0 %1525
    %1527 = vrot.lane.b32.xlu0 %v1504, 17
    %v1528 = vpop.permute.xlu0 %1527
    %1529 = vrot.lane.b32.xlu0 %v1508, 17
    %v1530 = vpop.permute.xlu0 %1529
    %1531 = vrot.lane.b32.xlu0 %v1512, 17
    %v1532 = vpop.permute.xlu0 %1531
    %1533 = vrot.lane.b32.xlu0 %v1516, 17
    %v1534 = vpop.permute.xlu0 %1533
    %1535 = vrot.lane.b32.xlu0 %v1505, 17
    %v1536 = vpop.permute.xlu0 %1535
    %1537 = vrot.lane.b32.xlu0 %v1509, 17
    %v1538 = vpop.permute.xlu0 %1537
    %1539 = vrot.lane.b32.xlu0 %v1513, 17
    %v1540 = vpop.permute.xlu0 %1539
    %1541 = vrot.lane.b32.xlu0 %v1517, 17
    %v1542 = vpop.permute.xlu0 %1541
    %1543 = vrot.lane.b32.xlu0 %v1506, 17
    %v1544 = vpop.permute.xlu0 %1543
    %1545 = vrot.lane.b32.xlu0 %v1510, 17
    %v1546 = vpop.permute.xlu0 %1545
    %1547 = vrot.lane.b32.xlu0 %v1514, 17
    %v1548 = vpop.permute.xlu0 %1547
    %1549 = vrot.lane.b32.xlu0 %v1518, 17
    %v1550 = vpop.permute.xlu0 %1549
    %v1551 = vsel %vm154, %v1536, %v1544
    %v1552 = vsel %vm154, %v1538, %v1546
    %v1553 = vsel %vm154, %v1540, %v1548
    %v1554 = vsel %vm154, %v1542, %v1550
    %v1555 = vsel %vm154, %v1528, %v1536
    %v1556 = vsel %vm154, %v1530, %v1538
    %v1557 = vsel %vm154, %v1532, %v1540
    %v1558 = vsel %vm154, %v1534, %v1542
    %v1559 = vsel %vm154, %v1520, %v1528
    %v1560 = vsel %vm154, %v1522, %v1530
    %v1561 = vsel %vm154, %v1524, %v1532
    %v1562 = vsel %vm154, %v1526, %v1534
    %v1563 = vsel %vm154, %v1544, %v1520
    %v1564 = vsel %vm154, %v1546, %v1522
    %v1565 = vsel %vm154, %v1548, %v1524
    %v1566 = vsel %vm154, %v1550, %v1526
    %v1567 = vmul.f32 %v1563, %v175
    %v1568 = vmul.f32 %v1559, %v179
    %v1569 = vmul.f32 %v1555, %v183
    %v1570 = vmul.f32 %v1551, %v187
    %v1571 = vmul.f32 %v1564, %v175
    %v1572 = vmul.f32 %v1560, %v179
    %v1573 = vmul.f32 %v1556, %v183
    %v1574 = vmul.f32 %v1552, %v187
    %v1575 = vmul.f32 %v1565, %v175
    %v1576 = vmul.f32 %v1561, %v179
    %v1577 = vmul.f32 %v1557, %v183
    %v1578 = vmul.f32 %v1553, %v187
    %v1579 = vmul.f32 %v1566, %v175
    %v1580 = vmul.f32 %v1562, %v179
    %v1581 = vmul.f32 %v1558, %v183
    %v1582 = vmul.f32 %v1554, %v187
    %1583 = vst [vmem:[#allocation2] sm:$0xff] %v1567
    %1584 = vst [vmem:[#allocation2 + $0x8] sm:$0xff] %v1568
    %1585 = vst [vmem:[#allocation2 + $0x10] sm:$0xff] %v1569
    %1586 = vst [vmem:[#allocation2 + $0x18] sm:$0xff] %v1570
    %1587 = vst [vmem:[#allocation2 + $0x20] sm:$0xff] %v1571
    %1588 = vst [vmem:[#allocation2 + $0x28] sm:$0xff] %v1572
    %1589 = vst [vmem:[#allocation2 + $0x30] sm:$0xff] %v1573
    %1590 = vst [vmem:[#allocation2 + $0x38] sm:$0xff] %v1574
    %1591 = vst [vmem:[#allocation2 + $0x40] sm:$0xff] %v1575
    %1592 = vst [vmem:[#allocation2 + $0x48] sm:$0xff] %v1576
    %1593 = vst [vmem:[#allocation2 + $0x50] sm:$0xff] %v1577
    %1594 = vst [vmem:[#allocation2 + $0x58] sm:$0xff] %v1578
    %1595 = vst [vmem:[#allocation2 + $0x60] sm:$0xff] %v1579
    %1596 = vst [vmem:[#allocation2 + $0x68] sm:$0xff] %v1580
    %1597 = vst [vmem:[#allocation2 + $0x70] sm:$0xff] %v1581
    %1598 = vst [vmem:[#allocation2 + $0x78] sm:$0xff] %v1582
    %1599 = vrot.lane.b32.xlu0 %v1503, 16
    %v1600 = vpop.permute.xlu0 %1599
    %1601 = vrot.lane.b32.xlu0 %v1507, 16
    %v1602 = vpop.permute.xlu0 %1601
    %1603 = vrot.lane.b32.xlu0 %v1511, 16
    %v1604 = vpop.permute.xlu0 %1603
    %1605 = vrot.lane.b32.xlu0 %v1515, 16
    %v1606 = vpop.permute.xlu0 %1605
    %1607 = vrot.lane.b32.xlu0 %v1504, 16
    %v1608 = vpop.permute.xlu0 %1607
    %1609 = vrot.lane.b32.xlu0 %v1508, 16
    %v1610 = vpop.permute.xlu0 %1609
    %1611 = vrot.lane.b32.xlu0 %v1512, 16
    %v1612 = vpop.permute.xlu0 %1611
    %1613 = vrot.lane.b32.xlu0 %v1516, 16
    %v1614 = vpop.permute.xlu0 %1613
    %1615 = vrot.lane.b32.xlu0 %v1505, 16
    %v1616 = vpop.permute.xlu0 %1615
    %1617 = vrot.lane.b32.xlu0 %v1509, 16
    %v1618 = vpop.permute.xlu0 %1617
    %1619 = vrot.lane.b32.xlu0 %v1513, 16
    %v1620 = vpop.permute.xlu0 %1619
    %1621 = vrot.lane.b32.xlu0 %v1517, 16
    %v1622 = vpop.permute.xlu0 %1621
    %1623 = vrot.lane.b32.xlu0 %v1506, 16
    %v1624 = vpop.permute.xlu0 %1623
    %1625 = vrot.lane.b32.xlu0 %v1510, 16
    %v1626 = vpop.permute.xlu0 %1625
    %1627 = vrot.lane.b32.xlu0 %v1514, 16
    %v1628 = vpop.permute.xlu0 %1627
    %1629 = vrot.lane.b32.xlu0 %v1518, 16
    %v1630 = vpop.permute.xlu0 %1629
    %v1631 = vsel %vm256, %v1616, %v1624
    %v1632 = vsel %vm256, %v1618, %v1626
    %v1633 = vsel %vm256, %v1620, %v1628
    %v1634 = vsel %vm256, %v1622, %v1630
    %v1635 = vsel %vm256, %v1608, %v1616
    %v1636 = vsel %vm256, %v1610, %v1618
    %v1637 = vsel %vm256, %v1612, %v1620
    %v1638 = vsel %vm256, %v1614, %v1622
    %v1639 = vsel %vm256, %v1600, %v1608
    %v1640 = vsel %vm256, %v1602, %v1610
    %v1641 = vsel %vm256, %v1604, %v1612
    %v1642 = vsel %vm256, %v1606, %v1614
    %v1643 = vsel %vm256, %v1624, %v1600
    %v1644 = vsel %vm256, %v1626, %v1602
    %v1645 = vsel %vm256, %v1628, %v1604
    %v1646 = vsel %vm256, %v1630, %v1606
    %v1647 = vmul.f32 %v1643, %v277
    %v1648 = vmul.f32 %v1639, %v281
    %v1649 = vmul.f32 %v1635, %v285
    %v1650 = vmul.f32 %v1631, %v289
    %v1651 = vmul.f32 %v1644, %v277
    %v1652 = vmul.f32 %v1640, %v281
    %v1653 = vmul.f32 %v1636, %v285
    %v1654 = vmul.f32 %v1632, %v289
    %v1655 = vmul.f32 %v1645, %v277
    %v1656 = vmul.f32 %v1641, %v281
    %v1657 = vmul.f32 %v1637, %v285
    %v1658 = vmul.f32 %v1633, %v289
    %v1659 = vmul.f32 %v1646, %v277
    %v1660 = vmul.f32 %v1642, %v281
    %v1661 = vmul.f32 %v1638, %v285
    %v1662 = vmul.f32 %v1634, %v289
    %1663 = vst [vmem:[#allocation2 + $0x80] sm:$0xff] %v1647
    %1664 = vst [vmem:[#allocation2 + $0x88] sm:$0xff] %v1648
    %1665 = vst [vmem:[#allocation2 + $0x90] sm:$0xff] %v1649
    %1666 = vst [vmem:[#allocation2 + $0x98] sm:$0xff] %v1650
    %1667 = vst [vmem:[#allocation2 + $0xa0] sm:$0xff] %v1651
    %1668 = vst [vmem:[#allocation2 + $0xa8] sm:$0xff] %v1652
    %1669 = vst [vmem:[#allocation2 + $0xb0] sm:$0xff] %v1653
    %1670 = vst [vmem:[#allocation2 + $0xb8] sm:$0xff] %v1654
    %1671 = vst [vmem:[#allocation2 + $0xc0] sm:$0xff] %v1655
    %1672 = vst [vmem:[#allocation2 + $0xc8] sm:$0xff] %v1656
    %1673 = vst [vmem:[#allocation2 + $0xd0] sm:$0xff] %v1657
    %1674 = vst [vmem:[#allocation2 + $0xd8] sm:$0xff] %v1658
    %1675 = vst [vmem:[#allocation2 + $0xe0] sm:$0xff] %v1659
    %1676 = vst [vmem:[#allocation2 + $0xe8] sm:$0xff] %v1660
    %1677 = vst [vmem:[#allocation2 + $0xf0] sm:$0xff] %v1661
    %1678 = vst [vmem:[#allocation2 + $0xf8] sm:$0xff] %v1662
    %1679 = vrot.lane.b32.xlu0 %v1503, 15
    %v1680 = vpop.permute.xlu0 %1679
    %1681 = vrot.lane.b32.xlu0 %v1507, 15
    %v1682 = vpop.permute.xlu0 %1681
    %1683 = vrot.lane.b32.xlu0 %v1511, 15
    %v1684 = vpop.permute.xlu0 %1683
    %1685 = vrot.lane.b32.xlu0 %v1515, 15
    %v1686 = vpop.permute.xlu0 %1685
    %1687 = vrot.lane.b32.xlu0 %v1504, 15
    %v1688 = vpop.permute.xlu0 %1687
    %1689 = vrot.lane.b32.xlu0 %v1508, 15
    %v1690 = vpop.permute.xlu0 %1689
    %1691 = vrot.lane.b32.xlu0 %v1512, 15
    %v1692 = vpop.permute.xlu0 %1691
    %1693 = vrot.lane.b32.xlu0 %v1516, 15
    %v1694 = vpop.permute.xlu0 %1693
    %1695 = vrot.lane.b32.xlu0 %v1505, 15
    %v1696 = vpop.permute.xlu0 %1695
    %1697 = vrot.lane.b32.xlu0 %v1509, 15
    %v1698 = vpop.permute.xlu0 %1697
    %1699 = vrot.lane.b32.xlu0 %v1513, 15
    %v1700 = vpop.permute.xlu0 %1699
    %1701 = vrot.lane.b32.xlu0 %v1517, 15
    %v1702 = vpop.permute.xlu0 %1701
    %1703 = vrot.lane.b32.xlu0 %v1506, 15
    %v1704 = vpop.permute.xlu0 %1703
    %1705 = vrot.lane.b32.xlu0 %v1510, 15
    %v1706 = vpop.permute.xlu0 %1705
    %1707 = vrot.lane.b32.xlu0 %v1514, 15
    %v1708 = vpop.permute.xlu0 %1707
    %1709 = vrot.lane.b32.xlu0 %v1518, 15
    %v1710 = vpop.permute.xlu0 %1709
    %v1711 = vsel %vm358, %v1696, %v1704
    %v1712 = vsel %vm358, %v1698, %v1706
    %v1713 = vsel %vm358, %v1700, %v1708
    %v1714 = vsel %vm358, %v1702, %v1710
    %v1715 = vsel %vm358, %v1688, %v1696
    %v1716 = vsel %vm358, %v1690, %v1698
    %v1717 = vsel %vm358, %v1692, %v1700
    %v1718 = vsel %vm358, %v1694, %v1702
    %v1719 = vsel %vm358, %v1680, %v1688
    %v1720 = vsel %vm358, %v1682, %v1690
    %v1721 = vsel %vm358, %v1684, %v1692
    %v1722 = vsel %vm358, %v1686, %v1694
    %v1723 = vsel %vm358, %v1704, %v1680
    %v1724 = vsel %vm358, %v1706, %v1682
    %v1725 = vsel %vm358, %v1708, %v1684
    %v1726 = vsel %vm358, %v1710, %v1686
    %v1727 = vmul.f32 %v1723, %v379
    %v1728 = vmul.f32 %v1719, %v383
    %v1729 = vmul.f32 %v1715, %v387
    %v1730 = vmul.f32 %v1711, %v391
    %v1731 = vmul.f32 %v1724, %v379
    %v1732 = vmul.f32 %v1720, %v383
    %v1733 = vmul.f32 %v1716, %v387
    %v1734 = vmul.f32 %v1712, %v391
    %v1735 = vmul.f32 %v1725, %v379
    %v1736 = vmul.f32 %v1721, %v383
    %v1737 = vmul.f32 %v1717, %v387
    %v1738 = vmul.f32 %v1713, %v391
    %v1739 = vmul.f32 %v1726, %v379
    %v1740 = vmul.f32 %v1722, %v383
    %v1741 = vmul.f32 %v1718, %v387
    %v1742 = vmul.f32 %v1714, %v391
    %1743 = vst [vmem:[#allocation2 + $0x100] sm:$0xff] %v1727
    %1744 = vst [vmem:[#allocation2 + $0x108] sm:$0xff] %v1728
    %1745 = vst [vmem:[#allocation2 + $0x110] sm:$0xff] %v1729
    %1746 = vst [vmem:[#allocation2 + $0x118] sm:$0xff] %v1730
    %1747 = vst [vmem:[#allocation2 + $0x120] sm:$0xff] %v1731
    %1748 = vst [vmem:[#allocation2 + $0x128] sm:$0xff] %v1732
    %1749 = vst [vmem:[#allocation2 + $0x130] sm:$0xff] %v1733
    %1750 = vst [vmem:[#allocation2 + $0x138] sm:$0xff] %v1734
    %1751 = vst [vmem:[#allocation2 + $0x140] sm:$0xff] %v1735
    %1752 = vst [vmem:[#allocation2 + $0x148] sm:$0xff] %v1736
    %1753 = vst [vmem:[#allocation2 + $0x150] sm:$0xff] %v1737
    %1754 = vst [vmem:[#allocation2 + $0x158] sm:$0xff] %v1738
    %1755 = vst [vmem:[#allocation2 + $0x160] sm:$0xff] %v1739
    %1756 = vst [vmem:[#allocation2 + $0x168] sm:$0xff] %v1740
    %1757 = vst [vmem:[#allocation2 + $0x170] sm:$0xff] %v1741
    %1758 = vst [vmem:[#allocation2 + $0x178] sm:$0xff] %v1742
    %1759 = vrot.lane.b32.xlu0 %v1503, 1
    %v1760 = vpop.permute.xlu0 %1759
    %1761 = vrot.lane.b32.xlu0 %v1507, 1
    %v1762 = vpop.permute.xlu0 %1761
    %1763 = vrot.lane.b32.xlu0 %v1511, 1
    %v1764 = vpop.permute.xlu0 %1763
    %1765 = vrot.lane.b32.xlu0 %v1515, 1
    %v1766 = vpop.permute.xlu0 %1765
    %1767 = vrot.lane.b32.xlu0 %v1504, 1
    %v1768 = vpop.permute.xlu0 %1767
    %1769 = vrot.lane.b32.xlu0 %v1508, 1
    %v1770 = vpop.permute.xlu0 %1769
    %1771 = vrot.lane.b32.xlu0 %v1512, 1
    %v1772 = vpop.permute.xlu0 %1771
    %1773 = vrot.lane.b32.xlu0 %v1516, 1
    %v1774 = vpop.permute.xlu0 %1773
    %1775 = vrot.lane.b32.xlu0 %v1505, 1
    %v1776 = vpop.permute.xlu0 %1775
    %1777 = vrot.lane.b32.xlu0 %v1509, 1
    %v1778 = vpop.permute.xlu0 %1777
    %1779 = vrot.lane.b32.xlu0 %v1513, 1
    %v1780 = vpop.permute.xlu0 %1779
    %1781 = vrot.lane.b32.xlu0 %v1517, 1
    %v1782 = vpop.permute.xlu0 %1781
    %1783 = vrot.lane.b32.xlu0 %v1506, 1
    %v1784 = vpop.permute.xlu0 %1783
    %1785 = vrot.lane.b32.xlu0 %v1510, 1
    %v1786 = vpop.permute.xlu0 %1785
    %1787 = vrot.lane.b32.xlu0 %v1514, 1
    %v1788 = vpop.permute.xlu0 %1787
    %1789 = vrot.lane.b32.xlu0 %v1518, 1
    %v1790 = vpop.permute.xlu0 %1789
    %v1791 = vsel %vm460, %v1776, %v1784
    %v1792 = vsel %vm460, %v1778, %v1786
    %v1793 = vsel %vm460, %v1780, %v1788
    %v1794 = vsel %vm460, %v1782, %v1790
    %v1795 = vsel %vm460, %v1768, %v1776
    %v1796 = vsel %vm460, %v1770, %v1778
    %v1797 = vsel %vm460, %v1772, %v1780
    %v1798 = vsel %vm460, %v1774, %v1782
    %v1799 = vsel %vm460, %v1760, %v1768
    %v1800 = vsel %vm460, %v1762, %v1770
    %v1801 = vsel %vm460, %v1764, %v1772
    %v1802 = vsel %vm460, %v1766, %v1774
    %v1803 = vsel %vm460, %v1784, %v1760
    %v1804 = vsel %vm460, %v1786, %v1762
    %v1805 = vsel %vm460, %v1788, %v1764
    %v1806 = vsel %vm460, %v1790, %v1766
    %v1807 = vmul.f32 %v1803, %v481
    %v1808 = vmul.f32 %v1799, %v485
    %v1809 = vmul.f32 %v1795, %v489
    %v1810 = vmul.f32 %v1791, %v493
    %v1811 = vmul.f32 %v1804, %v481
    %v1812 = vmul.f32 %v1800, %v485
    %v1813 = vmul.f32 %v1796, %v489
    %v1814 = vmul.f32 %v1792, %v493
    %v1815 = vmul.f32 %v1805, %v481
    %v1816 = vmul.f32 %v1801, %v485
    %v1817 = vmul.f32 %v1797, %v489
    %v1818 = vmul.f32 %v1793, %v493
    %v1819 = vmul.f32 %v1806, %v481
    %v1820 = vmul.f32 %v1802, %v485
    %v1821 = vmul.f32 %v1798, %v489
    %v1822 = vmul.f32 %v1794, %v493
    %1823 = vst [vmem:[#allocation2 + $0x180] sm:$0xff] %v1807
    %1824 = vst [vmem:[#allocation2 + $0x188] sm:$0xff] %v1808
    %1825 = vst [vmem:[#allocation2 + $0x190] sm:$0xff] %v1809
    %1826 = vst [vmem:[#allocation2 + $0x198] sm:$0xff] %v1810
    %1827 = vst [vmem:[#allocation2 + $0x1a0] sm:$0xff] %v1811
    %1828 = vst [vmem:[#allocation2 + $0x1a8] sm:$0xff] %v1812
    %1829 = vst [vmem:[#allocation2 + $0x1b0] sm:$0xff] %v1813
    %1830 = vst [vmem:[#allocation2 + $0x1b8] sm:$0xff] %v1814
    %1831 = vst [vmem:[#allocation2 + $0x1c0] sm:$0xff] %v1815
    %1832 = vst [vmem:[#allocation2 + $0x1c8] sm:$0xff] %v1816
    %1833 = vst [vmem:[#allocation2 + $0x1d0] sm:$0xff] %v1817
    %1834 = vst [vmem:[#allocation2 + $0x1d8] sm:$0xff] %v1818
    %1835 = vst [vmem:[#allocation2 + $0x1e0] sm:$0xff] %v1819
    %1836 = vst [vmem:[#allocation2 + $0x1e8] sm:$0xff] %v1820
    %1837 = vst [vmem:[#allocation2 + $0x1f0] sm:$0xff] %v1821
    %1838 = vst [vmem:[#allocation2 + $0x1f8] sm:$0xff] %v1822
    %1839 = vst [vmem:[#allocation2 + $0x200] sm:$0xff] %v1503
    %1840 = vst [vmem:[#allocation2 + $0x208] sm:$0xff] %v1504
    %1841 = vst [vmem:[#allocation2 + $0x210] sm:$0xff] %v1505
    %1842 = vst [vmem:[#allocation2 + $0x218] sm:$0xff] %v1506
    %1843 = vst [vmem:[#allocation2 + $0x220] sm:$0xff] %v1507
    %1844 = vst [vmem:[#allocation2 + $0x228] sm:$0xff] %v1508
    %1845 = vst [vmem:[#allocation2 + $0x230] sm:$0xff] %v1509
    %1846 = vst [vmem:[#allocation2 + $0x238] sm:$0xff] %v1510
    %1847 = vst [vmem:[#allocation2 + $0x240] sm:$0xff] %v1511
    %1848 = vst [vmem:[#allocation2 + $0x248] sm:$0xff] %v1512
    %1849 = vst [vmem:[#allocation2 + $0x250] sm:$0xff] %v1513
    %1850 = vst [vmem:[#allocation2 + $0x258] sm:$0xff] %v1514
    %1851 = vst [vmem:[#allocation2 + $0x260] sm:$0xff] %v1515
    %1852 = vst [vmem:[#allocation2 + $0x268] sm:$0xff] %v1516
    %1853 = vst [vmem:[#allocation2 + $0x270] sm:$0xff] %v1517
    %1854 = vst [vmem:[#allocation2 + $0x278] sm:$0xff] %v1518
    %1855 = vrot.lane.b32.xlu0 %v1503, 127
    %v1856 = vpop.permute.xlu0 %1855
    %1857 = vrot.lane.b32.xlu0 %v1507, 127
    %v1858 = vpop.permute.xlu0 %1857
    %1859 = vrot.lane.b32.xlu0 %v1511, 127
    %v1860 = vpop.permute.xlu0 %1859
    %1861 = vrot.lane.b32.xlu0 %v1515, 127
    %v1862 = vpop.permute.xlu0 %1861
    %1863 = vrot.lane.b32.xlu0 %v1504, 127
    %v1864 = vpop.permute.xlu0 %1863
    %1865 = vrot.lane.b32.xlu0 %v1508, 127
    %v1866 = vpop.permute.xlu0 %1865
    %1867 = vrot.lane.b32.xlu0 %v1512, 127
    %v1868 = vpop.permute.xlu0 %1867
    %1869 = vrot.lane.b32.xlu0 %v1516, 127
    %v1870 = vpop.permute.xlu0 %1869
    %1871 = vrot.lane.b32.xlu0 %v1505, 127
    %v1872 = vpop.permute.xlu0 %1871
    %1873 = vrot.lane.b32.xlu0 %v1509, 127
    %v1874 = vpop.permute.xlu0 %1873
    %1875 = vrot.lane.b32.xlu0 %v1513, 127
    %v1876 = vpop.permute.xlu0 %1875
    %1877 = vrot.lane.b32.xlu0 %v1517, 127
    %v1878 = vpop.permute.xlu0 %1877
    %1879 = vrot.lane.b32.xlu0 %v1506, 127
    %v1880 = vpop.permute.xlu0 %1879
    %1881 = vrot.lane.b32.xlu0 %v1510, 127
    %v1882 = vpop.permute.xlu0 %1881
    %1883 = vrot.lane.b32.xlu0 %v1514, 127
    %v1884 = vpop.permute.xlu0 %1883
    %1885 = vrot.lane.b32.xlu0 %v1518, 127
    %v1886 = vpop.permute.xlu0 %1885
    %v1887 = vsel %vm578, %v1872, %v1880
    %v1888 = vsel %vm578, %v1874, %v1882
    %v1889 = vsel %vm578, %v1876, %v1884
    %v1890 = vsel %vm578, %v1878, %v1886
    %v1891 = vsel %vm578, %v1864, %v1872
    %v1892 = vsel %vm578, %v1866, %v1874
    %v1893 = vsel %vm578, %v1868, %v1876
    %v1894 = vsel %vm578, %v1870, %v1878
    %v1895 = vsel %vm578, %v1856, %v1864
    %v1896 = vsel %vm578, %v1858, %v1866
    %v1897 = vsel %vm578, %v1860, %v1868
    %v1898 = vsel %vm578, %v1862, %v1870
    %v1899 = vsel %vm578, %v1880, %v1856
    %v1900 = vsel %vm578, %v1882, %v1858
    %v1901 = vsel %vm578, %v1884, %v1860
    %v1902 = vsel %vm578, %v1886, %v1862
    %v1903 = vmul.f32 %v1895, %v599
    %v1904 = vmul.f32 %v1891, %v603
    %v1905 = vmul.f32 %v1887, %v607
    %v1906 = vmul.f32 %v1899, %v611
    %v1907 = vmul.f32 %v1896, %v599
    %v1908 = vmul.f32 %v1892, %v603
    %v1909 = vmul.f32 %v1888, %v607
    %v1910 = vmul.f32 %v1900, %v611
    %v1911 = vmul.f32 %v1897, %v599
    %v1912 = vmul.f32 %v1893, %v603
    %v1913 = vmul.f32 %v1889, %v607
    %v1914 = vmul.f32 %v1901, %v611
    %v1915 = vmul.f32 %v1898, %v599
    %v1916 = vmul.f32 %v1894, %v603
    %v1917 = vmul.f32 %v1890, %v607
    %v1918 = vmul.f32 %v1902, %v611
    %1919 = vst [vmem:[#allocation2 + $0x280] sm:$0xff] %v1903
    %1920 = vst [vmem:[#allocation2 + $0x288] sm:$0xff] %v1904
    %1921 = vst [vmem:[#allocation2 + $0x290] sm:$0xff] %v1905
    %1922 = vst [vmem:[#allocation2 + $0x298] sm:$0xff] %v1906
    %1923 = vst [vmem:[#allocation2 + $0x2a0] sm:$0xff] %v1907
    %1924 = vst [vmem:[#allocation2 + $0x2a8] sm:$0xff] %v1908
    %1925 = vst [vmem:[#allocation2 + $0x2b0] sm:$0xff] %v1909
    %1926 = vst [vmem:[#allocation2 + $0x2b8] sm:$0xff] %v1910
    %1927 = vst [vmem:[#allocation2 + $0x2c0] sm:$0xff] %v1911
    %1928 = vst [vmem:[#allocation2 + $0x2c8] sm:$0xff] %v1912
    %1929 = vst [vmem:[#allocation2 + $0x2d0] sm:$0xff] %v1913
    %1930 = vst [vmem:[#allocation2 + $0x2d8] sm:$0xff] %v1914
    %1931 = vst [vmem:[#allocation2 + $0x2e0] sm:$0xff] %v1915
    %1932 = vst [vmem:[#allocation2 + $0x2e8] sm:$0xff] %v1916
    %1933 = vst [vmem:[#allocation2 + $0x2f0] sm:$0xff] %v1917
    %1934 = vst [vmem:[#allocation2 + $0x2f8] sm:$0xff] %v1918
    %1935 = vrot.lane.b32.xlu0 %v1503, 113
    %v1936 = vpop.permute.xlu0 %1935
    %1937 = vrot.lane.b32.xlu0 %v1507, 113
    %v1938 = vpop.permute.xlu0 %1937
    %1939 = vrot.lane.b32.xlu0 %v1511, 113
    %v1940 = vpop.permute.xlu0 %1939
    %1941 = vrot.lane.b32.xlu0 %v1515, 113
    %v1942 = vpop.permute.xlu0 %1941
    %1943 = vrot.lane.b32.xlu0 %v1504, 113
    %v1944 = vpop.permute.xlu0 %1943
    %1945 = vrot.lane.b32.xlu0 %v1508, 113
    %v1946 = vpop.permute.xlu0 %1945
    %1947 = vrot.lane.b32.xlu0 %v1512, 113
    %v1948 = vpop.permute.xlu0 %1947
    %1949 = vrot.lane.b32.xlu0 %v1516, 113
    %v1950 = vpop.permute.xlu0 %1949
    %1951 = vrot.lane.b32.xlu0 %v1505, 113
    %v1952 = vpop.permute.xlu0 %1951
    %1953 = vrot.lane.b32.xlu0 %v1509, 113
    %v1954 = vpop.permute.xlu0 %1953
    %1955 = vrot.lane.b32.xlu0 %v1513, 113
    %v1956 = vpop.permute.xlu0 %1955
    %1957 = vrot.lane.b32.xlu0 %v1517, 113
    %v1958 = vpop.permute.xlu0 %1957
    %1959 = vrot.lane.b32.xlu0 %v1506, 113
    %v1960 = vpop.permute.xlu0 %1959
    %1961 = vrot.lane.b32.xlu0 %v1510, 113
    %v1962 = vpop.permute.xlu0 %1961
    %1963 = vrot.lane.b32.xlu0 %v1514, 113
    %v1964 = vpop.permute.xlu0 %1963
    %1965 = vrot.lane.b32.xlu0 %v1518, 113
    %v1966 = vpop.permute.xlu0 %1965
    %v1967 = vsel %vm680, %v1952, %v1960
    %v1968 = vsel %vm680, %v1954, %v1962
    %v1969 = vsel %vm680, %v1956, %v1964
    %v1970 = vsel %vm680, %v1958, %v1966
    %v1971 = vsel %vm680, %v1944, %v1952
    %v1972 = vsel %vm680, %v1946, %v1954
    %v1973 = vsel %vm680, %v1948, %v1956
    %v1974 = vsel %vm680, %v1950, %v1958
    %v1975 = vsel %vm680, %v1936, %v1944
    %v1976 = vsel %vm680, %v1938, %v1946
    %v1977 = vsel %vm680, %v1940, %v1948
    %v1978 = vsel %vm680, %v1942, %v1950
    %v1979 = vsel %vm680, %v1960, %v1936
    %v1980 = vsel %vm680, %v1962, %v1938
    %v1981 = vsel %vm680, %v1964, %v1940
    %v1982 = vsel %vm680, %v1966, %v1942
    %v1983 = vmul.f32 %v1975, %v701
    %v1984 = vmul.f32 %v1971, %v705
    %v1985 = vmul.f32 %v1967, %v709
    %v1986 = vmul.f32 %v1979, %v713
    %v1987 = vmul.f32 %v1976, %v701
    %v1988 = vmul.f32 %v1972, %v705
    %v1989 = vmul.f32 %v1968, %v709
    %v1990 = vmul.f32 %v1980, %v713
    %v1991 = vmul.f32 %v1977, %v701
    %v1992 = vmul.f32 %v1973, %v705
    %v1993 = vmul.f32 %v1969, %v709
    %v1994 = vmul.f32 %v1981, %v713
    %v1995 = vmul.f32 %v1978, %v701
    %v1996 = vmul.f32 %v1974, %v705
    %v1997 = vmul.f32 %v1970, %v709
    %v1998 = vmul.f32 %v1982, %v713
    %1999 = vst [vmem:[#allocation2 + $0x300] sm:$0xff] %v1983
    %2000 = vst [vmem:[#allocation2 + $0x308] sm:$0xff] %v1984
    %2001 = vst [vmem:[#allocation2 + $0x310] sm:$0xff] %v1985
    %2002 = vst [vmem:[#allocation2 + $0x318] sm:$0xff] %v1986
    %2003 = vst [vmem:[#allocation2 + $0x320] sm:$0xff] %v1987
    %2004 = vst [vmem:[#allocation2 + $0x328] sm:$0xff] %v1988
    %2005 = vst [vmem:[#allocation2 + $0x330] sm:$0xff] %v1989
    %2006 = vst [vmem:[#allocation2 + $0x338] sm:$0xff] %v1990
    %2007 = vst [vmem:[#allocation2 + $0x340] sm:$0xff] %v1991
    %2008 = vst [vmem:[#allocation2 + $0x348] sm:$0xff] %v1992
    %2009 = vst [vmem:[#allocation2 + $0x350] sm:$0xff] %v1993
    %2010 = vst [vmem:[#allocation2 + $0x358] sm:$0xff] %v1994
    %2011 = vst [vmem:[#allocation2 + $0x360] sm:$0xff] %v1995
    %2012 = vst [vmem:[#allocation2 + $0x368] sm:$0xff] %v1996
    %2013 = vst [vmem:[#allocation2 + $0x370] sm:$0xff] %v1997
    %2014 = vst [vmem:[#allocation2 + $0x378] sm:$0xff] %v1998
    %2015 = vrot.lane.b32.xlu0 %v1503, 112
    %v2016 = vpop.permute.xlu0 %2015
    %2017 = vrot.lane.b32.xlu0 %v1507, 112
    %v2018 = vpop.permute.xlu0 %2017
    %2019 = vrot.lane.b32.xlu0 %v1511, 112
    %v2020 = vpop.permute.xlu0 %2019
    %2021 = vrot.lane.b32.xlu0 %v1515, 112
    %v2022 = vpop.permute.xlu0 %2021
    %2023 = vrot.lane.b32.xlu0 %v1504, 112
    %v2024 = vpop.permute.xlu0 %2023
    %2025 = vrot.lane.b32.xlu0 %v1508, 112
    %v2026 = vpop.permute.xlu0 %2025
    %2027 = vrot.lane.b32.xlu0 %v1512, 112
    %v2028 = vpop.permute.xlu0 %2027
    %2029 = vrot.lane.b32.xlu0 %v1516, 112
    %v2030 = vpop.permute.xlu0 %2029
    %2031 = vrot.lane.b32.xlu0 %v1505, 112
    %v2032 = vpop.permute.xlu0 %2031
    %2033 = vrot.lane.b32.xlu0 %v1509, 112
    %v2034 = vpop.permute.xlu0 %2033
    %2035 = vrot.lane.b32.xlu0 %v1513, 112
    %v2036 = vpop.permute.xlu0 %2035
    %2037 = vrot.lane.b32.xlu0 %v1517, 112
    %v2038 = vpop.permute.xlu0 %2037
    %2039 = vrot.lane.b32.xlu0 %v1506, 112
    %v2040 = vpop.permute.xlu0 %2039
    %2041 = vrot.lane.b32.xlu0 %v1510, 112
    %v2042 = vpop.permute.xlu0 %2041
    %2043 = vrot.lane.b32.xlu0 %v1514, 112
    %v2044 = vpop.permute.xlu0 %2043
    %2045 = vrot.lane.b32.xlu0 %v1518, 112
    %v2046 = vpop.permute.xlu0 %2045
    %v2047 = vsel %vm782, %v2032, %v2040
    %v2048 = vsel %vm782, %v2034, %v2042
    %v2049 = vsel %vm782, %v2036, %v2044
    %v2050 = vsel %vm782, %v2038, %v2046
    %v2051 = vsel %vm782, %v2024, %v2032
    %v2052 = vsel %vm782, %v2026, %v2034
    %v2053 = vsel %vm782, %v2028, %v2036
    %v2054 = vsel %vm782, %v2030, %v2038
    %v2055 = vsel %vm782, %v2016, %v2024
    %v2056 = vsel %vm782, %v2018, %v2026
    %v2057 = vsel %vm782, %v2020, %v2028
    %v2058 = vsel %vm782, %v2022, %v2030
    %v2059 = vsel %vm782, %v2040, %v2016
    %v2060 = vsel %vm782, %v2042, %v2018
    %v2061 = vsel %vm782, %v2044, %v2020
    %v2062 = vsel %vm782, %v2046, %v2022
    %v2063 = vmul.f32 %v2055, %v803
    %v2064 = vmul.f32 %v2051, %v807
    %v2065 = vmul.f32 %v2047, %v811
    %v2066 = vmul.f32 %v2059, %v815
    %v2067 = vmul.f32 %v2056, %v803
    %v2068 = vmul.f32 %v2052, %v807
    %v2069 = vmul.f32 %v2048, %v811
    %v2070 = vmul.f32 %v2060, %v815
    %v2071 = vmul.f32 %v2057, %v803
    %v2072 = vmul.f32 %v2053, %v807
    %v2073 = vmul.f32 %v2049, %v811
    %v2074 = vmul.f32 %v2061, %v815
    %v2075 = vmul.f32 %v2058, %v803
    %v2076 = vmul.f32 %v2054, %v807
    %v2077 = vmul.f32 %v2050, %v811
    %v2078 = vmul.f32 %v2062, %v815
    %2079 = vst [vmem:[#allocation2 + $0x380] sm:$0xff] %v2063
    %2080 = vst [vmem:[#allocation2 + $0x388] sm:$0xff] %v2064
    %2081 = vst [vmem:[#allocation2 + $0x390] sm:$0xff] %v2065
    %2082 = vst [vmem:[#allocation2 + $0x398] sm:$0xff] %v2066
    %2083 = vst [vmem:[#allocation2 + $0x3a0] sm:$0xff] %v2067
    %2084 = vst [vmem:[#allocation2 + $0x3a8] sm:$0xff] %v2068
    %2085 = vst [vmem:[#allocation2 + $0x3b0] sm:$0xff] %v2069
    %2086 = vst [vmem:[#allocation2 + $0x3b8] sm:$0xff] %v2070
    %2087 = vst [vmem:[#allocation2 + $0x3c0] sm:$0xff] %v2071
    %2088 = vst [vmem:[#allocation2 + $0x3c8] sm:$0xff] %v2072
    %2089 = vst [vmem:[#allocation2 + $0x3d0] sm:$0xff] %v2073
    %2090 = vst [vmem:[#allocation2 + $0x3d8] sm:$0xff] %v2074
    %2091 = vst [vmem:[#allocation2 + $0x3e0] sm:$0xff] %v2075
    %2092 = vst [vmem:[#allocation2 + $0x3e8] sm:$0xff] %v2076
    %2093 = vst [vmem:[#allocation2 + $0x3f0] sm:$0xff] %v2077
    %2094 = vst [vmem:[#allocation2 + $0x3f8] sm:$0xff] %v2078
    %2095 = vrot.lane.b32.xlu0 %v1503, 111
    %v2096 = vpop.permute.xlu0 %2095
    %2097 = vrot.lane.b32.xlu0 %v1507, 111
    %v2098 = vpop.permute.xlu0 %2097
    %2099 = vrot.lane.b32.xlu0 %v1511, 111
    %v2100 = vpop.permute.xlu0 %2099
    %2101 = vrot.lane.b32.xlu0 %v1515, 111
    %v2102 = vpop.permute.xlu0 %2101
    %2103 = vrot.lane.b32.xlu0 %v1504, 111
    %v2104 = vpop.permute.xlu0 %2103
    %2105 = vrot.lane.b32.xlu0 %v1508, 111
    %v2106 = vpop.permute.xlu0 %2105
    %2107 = vrot.lane.b32.xlu0 %v1512, 111
    %v2108 = vpop.permute.xlu0 %2107
    %2109 = vrot.lane.b32.xlu0 %v1516, 111
    %v2110 = vpop.permute.xlu0 %2109
    %2111 = vrot.lane.b32.xlu0 %v1505, 111
    %v2112 = vpop.permute.xlu0 %2111
    %2113 = vrot.lane.b32.xlu0 %v1509, 111
    %v2114 = vpop.permute.xlu0 %2113
    %2115 = vrot.lane.b32.xlu0 %v1513, 111
    %v2116 = vpop.permute.xlu0 %2115
    %2117 = vrot.lane.b32.xlu0 %v1517, 111
    %v2118 = vpop.permute.xlu0 %2117
    %2119 = vrot.lane.b32.xlu0 %v1506, 111
    %v2120 = vpop.permute.xlu0 %2119
    %2121 = vrot.lane.b32.xlu0 %v1510, 111
    %v2122 = vpop.permute.xlu0 %2121
    %2123 = vrot.lane.b32.xlu0 %v1514, 111
    %v2124 = vpop.permute.xlu0 %2123
    %2125 = vrot.lane.b32.xlu0 %v1518, 111
    %v2126 = vpop.permute.xlu0 %2125
    %v2127 = vsel %vm884, %v2112, %v2120
    %v2128 = vsel %vm884, %v2114, %v2122
    %v2129 = vsel %vm884, %v2116, %v2124
    %v2130 = vsel %vm884, %v2118, %v2126
    %v2131 = vsel %vm884, %v2104, %v2112
    %v2132 = vsel %vm884, %v2106, %v2114
    %v2133 = vsel %vm884, %v2108, %v2116
    %v2134 = vsel %vm884, %v2110, %v2118
    %v2135 = vsel %vm884, %v2096, %v2104
    %v2136 = vsel %vm884, %v2098, %v2106
    %v2137 = vsel %vm884, %v2100, %v2108
    %v2138 = vsel %vm884, %v2102, %v2110
    %v2139 = vsel %vm884, %v2120, %v2096
    %v2140 = vsel %vm884, %v2122, %v2098
    %v2141 = vsel %vm884, %v2124, %v2100
    %v2142 = vsel %vm884, %v2126, %v2102
    %v2143 = vmul.f32 %v2135, %v905
    %v2144 = vmul.f32 %v2131, %v909
    %v2145 = vmul.f32 %v2127, %v913
    %v2146 = vmul.f32 %v2139, %v917
    %v2147 = vmul.f32 %v2136, %v905
    %v2148 = vmul.f32 %v2132, %v909
    %v2149 = vmul.f32 %v2128, %v913
    %v2150 = vmul.f32 %v2140, %v917
    %v2151 = vmul.f32 %v2137, %v905
    %v2152 = vmul.f32 %v2133, %v909
    %v2153 = vmul.f32 %v2129, %v913
    %v2154 = vmul.f32 %v2141, %v917
    %v2155 = vmul.f32 %v2138, %v905
    %v2156 = vmul.f32 %v2134, %v909
    %v2157 = vmul.f32 %v2130, %v913
    %v2158 = vmul.f32 %v2142, %v917
    %2159 = vst [vmem:[#allocation2 + $0x400] sm:$0xff] %v2143
    %2160 = vst [vmem:[#allocation2 + $0x408] sm:$0xff] %v2144
    %2161 = vst [vmem:[#allocation2 + $0x410] sm:$0xff] %v2145
    %2162 = vst [vmem:[#allocation2 + $0x418] sm:$0xff] %v2146
    %2163 = vst [vmem:[#allocation2 + $0x420] sm:$0xff] %v2147
    %2164 = vst [vmem:[#allocation2 + $0x428] sm:$0xff] %v2148
    %2165 = vst [vmem:[#allocation2 + $0x430] sm:$0xff] %v2149
    %2166 = vst [vmem:[#allocation2 + $0x438] sm:$0xff] %v2150
    %2167 = vst [vmem:[#allocation2 + $0x440] sm:$0xff] %v2151
    %2168 = vst [vmem:[#allocation2 + $0x448] sm:$0xff] %v2152
    %2169 = vst [vmem:[#allocation2 + $0x450] sm:$0xff] %v2153
    %2170 = vst [vmem:[#allocation2 + $0x458] sm:$0xff] %v2154
    %2171 = vst [vmem:[#allocation2 + $0x460] sm:$0xff] %v2155
    %2172 = vst [vmem:[#allocation2 + $0x468] sm:$0xff] %v2156
    %2173 = vst [vmem:[#allocation2 + $0x470] sm:$0xff] %v2157
    %2174 = vst [vmem:[#allocation2 + $0x478] sm:$0xff] %v2158
    %s2175 = scalar_lea.vmem [#allocation6], 96
    %v2176 = vld [vmem:[%s2175] sm:$0xff]
    %v2177 = vld [vmem:[%s2175 + $0x8] sm:$0xff]
    %v2178 = vld [vmem:[%s2175 + $0x10] sm:$0xff]
    %v2179 = vld [vmem:[%s2175 + $0x18] sm:$0xff]
    %v2180 = vld [vmem:[%s2175 + $0x20] sm:$0xff]
    %v2181 = vld [vmem:[%s2175 + $0x28] sm:$0xff]
    %v2182 = vld [vmem:[%s2175 + $0x30] sm:$0xff]
    %v2183 = vld [vmem:[%s2175 + $0x38] sm:$0xff]
    %v2184 = vld [vmem:[%s2175 + $0x40] sm:$0xff]
    %v2185 = vld [vmem:[%s2175 + $0x48] sm:$0xff]
    %v2186 = vld [vmem:[%s2175 + $0x50] sm:$0xff]
    %v2187 = vld [vmem:[%s2175 + $0x58] sm:$0xff]
    %v2188 = vld [vmem:[#allocation2] sm:$0xff]
    %v2189 = vld [vmem:[#allocation2 + $0x8] sm:$0xff]
    %v2190 = vld [vmem:[#allocation2 + $0x10] sm:$0xff]
    %v2191 = vld [vmem:[#allocation2 + $0x18] sm:$0xff]
    %v2192 = vld [vmem:[#allocation2 + $0x20] sm:$0xff]
    %v2193 = vld [vmem:[#allocation2 + $0x28] sm:$0xff]
    %v2194 = vld [vmem:[#allocation2 + $0x30] sm:$0xff]
    %v2195 = vld [vmem:[#allocation2 + $0x38] sm:$0xff]
    %v2196 = vld [vmem:[#allocation2 + $0x40] sm:$0xff]
    %v2197 = vld [vmem:[#allocation2 + $0x48] sm:$0xff]
    %v2198 = vld [vmem:[#allocation2 + $0x50] sm:$0xff]
    %v2199 = vld [vmem:[#allocation2 + $0x58] sm:$0xff]
    %v2200 = vld [vmem:[#allocation2 + $0x60] sm:$0xff]
    %v2201 = vld [vmem:[#allocation2 + $0x68] sm:$0xff]
    %v2202 = vld [vmem:[#allocation2 + $0x70] sm:$0xff]
    %v2203 = vld [vmem:[#allocation2 + $0x78] sm:$0xff]
    %v2204 = vld [vmem:[#allocation2 + $0x80] sm:$0xff]
    %v2205 = vld [vmem:[#allocation2 + $0x88] sm:$0xff]
    %v2206 = vld [vmem:[#allocation2 + $0x90] sm:$0xff]
    %v2207 = vld [vmem:[#allocation2 + $0x98] sm:$0xff]
    %v2208 = vld [vmem:[#allocation2 + $0xa0] sm:$0xff]
    %v2209 = vld [vmem:[#allocation2 + $0xa8] sm:$0xff]
    %v2210 = vld [vmem:[#allocation2 + $0xb0] sm:$0xff]
    %v2211 = vld [vmem:[#allocation2 + $0xb8] sm:$0xff]
    %v2212 = vld [vmem:[#allocation2 + $0xc0] sm:$0xff]
    %v2213 = vld [vmem:[#allocation2 + $0xc8] sm:$0xff]
    %v2214 = vld [vmem:[#allocation2 + $0xd0] sm:$0xff]
    %v2215 = vld [vmem:[#allocation2 + $0xd8] sm:$0xff]
    %v2216 = vld [vmem:[#allocation2 + $0xe0] sm:$0xff]
    %v2217 = vld [vmem:[#allocation2 + $0xe8] sm:$0xff]
    %v2218 = vld [vmem:[#allocation2 + $0xf0] sm:$0xff]
    %v2219 = vld [vmem:[#allocation2 + $0xf8] sm:$0xff]
    %v2220 = vld [vmem:[#allocation2 + $0x100] sm:$0xff]
    %v2221 = vld [vmem:[#allocation2 + $0x108] sm:$0xff]
    %v2222 = vld [vmem:[#allocation2 + $0x110] sm:$0xff]
    %v2223 = vld [vmem:[#allocation2 + $0x118] sm:$0xff]
    %v2224 = vld [vmem:[#allocation2 + $0x120] sm:$0xff]
    %v2225 = vld [vmem:[#allocation2 + $0x128] sm:$0xff]
    %v2226 = vld [vmem:[#allocation2 + $0x130] sm:$0xff]
    %v2227 = vld [vmem:[#allocation2 + $0x138] sm:$0xff]
    %v2228 = vld [vmem:[#allocation2 + $0x140] sm:$0xff]
    %v2229 = vld [vmem:[#allocation2 + $0x148] sm:$0xff]
    %v2230 = vld [vmem:[#allocation2 + $0x150] sm:$0xff]
    %v2231 = vld [vmem:[#allocation2 + $0x158] sm:$0xff]
    %v2232 = vld [vmem:[#allocation2 + $0x160] sm:$0xff]
    %v2233 = vld [vmem:[#allocation2 + $0x168] sm:$0xff]
    %v2234 = vld [vmem:[#allocation2 + $0x170] sm:$0xff]
    %v2235 = vld [vmem:[#allocation2 + $0x178] sm:$0xff]
    %v2236 = vld [vmem:[#allocation2 + $0x180] sm:$0xff]
    %v2237 = vld [vmem:[#allocation2 + $0x188] sm:$0xff]
    %v2238 = vld [vmem:[#allocation2 + $0x190] sm:$0xff]
    %v2239 = vld [vmem:[#allocation2 + $0x198] sm:$0xff]
    %v2240 = vld [vmem:[#allocation2 + $0x1a0] sm:$0xff]
    %v2241 = vld [vmem:[#allocation2 + $0x1a8] sm:$0xff]
    %v2242 = vld [vmem:[#allocation2 + $0x1b0] sm:$0xff]
    %v2243 = vld [vmem:[#allocation2 + $0x1b8] sm:$0xff]
    %v2244 = vld [vmem:[#allocation2 + $0x1c0] sm:$0xff]
    %v2245 = vld [vmem:[#allocation2 + $0x1c8] sm:$0xff]
    %v2246 = vld [vmem:[#allocation2 + $0x1d0] sm:$0xff]
    %v2247 = vld [vmem:[#allocation2 + $0x1d8] sm:$0xff]
    %v2248 = vld [vmem:[#allocation2 + $0x1e0] sm:$0xff]
    %v2249 = vld [vmem:[#allocation2 + $0x1e8] sm:$0xff]
    %v2250 = vld [vmem:[#allocation2 + $0x1f0] sm:$0xff]
    %v2251 = vld [vmem:[#allocation2 + $0x1f8] sm:$0xff]
    %v2252 = vld [vmem:[#allocation2 + $0x200] sm:$0xff]
    %v2253 = vld [vmem:[#allocation2 + $0x208] sm:$0xff]
    %v2254 = vld [vmem:[#allocation2 + $0x210] sm:$0xff]
    %v2255 = vld [vmem:[#allocation2 + $0x218] sm:$0xff]
    %v2256 = vld [vmem:[#allocation2 + $0x220] sm:$0xff]
    %v2257 = vld [vmem:[#allocation2 + $0x228] sm:$0xff]
    %v2258 = vld [vmem:[#allocation2 + $0x230] sm:$0xff]
    %v2259 = vld [vmem:[#allocation2 + $0x238] sm:$0xff]
    %v2260 = vld [vmem:[#allocation2 + $0x240] sm:$0xff]
    %v2261 = vld [vmem:[#allocation2 + $0x248] sm:$0xff]
    %v2262 = vld [vmem:[#allocation2 + $0x250] sm:$0xff]
    %v2263 = vld [vmem:[#allocation2 + $0x258] sm:$0xff]
    %v2264 = vld [vmem:[#allocation2 + $0x260] sm:$0xff]
    %v2265 = vld [vmem:[#allocation2 + $0x268] sm:$0xff]
    %v2266 = vld [vmem:[#allocation2 + $0x270] sm:$0xff]
    %v2267 = vld [vmem:[#allocation2 + $0x278] sm:$0xff]
    %v2268 = vld [vmem:[#allocation2 + $0x280] sm:$0xff]
    %v2269 = vld [vmem:[#allocation2 + $0x288] sm:$0xff]
    %v2270 = vld [vmem:[#allocation2 + $0x290] sm:$0xff]
    %v2271 = vld [vmem:[#allocation2 + $0x298] sm:$0xff]
    %v2272 = vld [vmem:[#allocation2 + $0x2a0] sm:$0xff]
    %v2273 = vld [vmem:[#allocation2 + $0x2a8] sm:$0xff]
    %v2274 = vld [vmem:[#allocation2 + $0x2b0] sm:$0xff]
    %v2275 = vld [vmem:[#allocation2 + $0x2b8] sm:$0xff]
    %v2276 = vld [vmem:[#allocation2 + $0x2c0] sm:$0xff]
    %v2277 = vld [vmem:[#allocation2 + $0x2c8] sm:$0xff]
    %v2278 = vld [vmem:[#allocation2 + $0x2d0] sm:$0xff]
    %v2279 = vld [vmem:[#allocation2 + $0x2d8] sm:$0xff]
    %v2280 = vld [vmem:[#allocation2 + $0x2e0] sm:$0xff]
    %v2281 = vld [vmem:[#allocation2 + $0x2e8] sm:$0xff]
    %v2282 = vld [vmem:[#allocation2 + $0x2f0] sm:$0xff]
    %v2283 = vld [vmem:[#allocation2 + $0x2f8] sm:$0xff]
    %v2284 = vld [vmem:[#allocation2 + $0x300] sm:$0xff]
    %v2285 = vld [vmem:[#allocation2 + $0x308] sm:$0xff]
    %v2286 = vld [vmem:[#allocation2 + $0x310] sm:$0xff]
    %v2287 = vld [vmem:[#allocation2 + $0x318] sm:$0xff]
    %v2288 = vld [vmem:[#allocation2 + $0x320] sm:$0xff]
    %v2289 = vld [vmem:[#allocation2 + $0x328] sm:$0xff]
    %v2290 = vld [vmem:[#allocation2 + $0x330] sm:$0xff]
    %v2291 = vld [vmem:[#allocation2 + $0x338] sm:$0xff]
    %v2292 = vld [vmem:[#allocation2 + $0x340] sm:$0xff]
    %v2293 = vld [vmem:[#allocation2 + $0x348] sm:$0xff]
    %v2294 = vld [vmem:[#allocation2 + $0x350] sm:$0xff]
    %v2295 = vld [vmem:[#allocation2 + $0x358] sm:$0xff]
    %v2296 = vld [vmem:[#allocation2 + $0x360] sm:$0xff]
    %v2297 = vld [vmem:[#allocation2 + $0x368] sm:$0xff]
    %v2298 = vld [vmem:[#allocation2 + $0x370] sm:$0xff]
    %v2299 = vld [vmem:[#allocation2 + $0x378] sm:$0xff]
    %v2300 = vld [vmem:[#allocation2 + $0x380] sm:$0xff]
    %v2301 = vld [vmem:[#allocation2 + $0x388] sm:$0xff]
    %v2302 = vld [vmem:[#allocation2 + $0x390] sm:$0xff]
    %v2303 = vld [vmem:[#allocation2 + $0x398] sm:$0xff]
    %v2304 = vld [vmem:[#allocation2 + $0x3a0] sm:$0xff]
    %v2305 = vld [vmem:[#allocation2 + $0x3a8] sm:$0xff]
    %v2306 = vld [vmem:[#allocation2 + $0x3b0] sm:$0xff]
    %v2307 = vld [vmem:[#allocation2 + $0x3b8] sm:$0xff]
    %v2308 = vld [vmem:[#allocation2 + $0x3c0] sm:$0xff]
    %v2309 = vld [vmem:[#allocation2 + $0x3c8] sm:$0xff]
    %v2310 = vld [vmem:[#allocation2 + $0x3d0] sm:$0xff]
    %v2311 = vld [vmem:[#allocation2 + $0x3d8] sm:$0xff]
    %v2312 = vld [vmem:[#allocation2 + $0x3e0] sm:$0xff]
    %v2313 = vld [vmem:[#allocation2 + $0x3e8] sm:$0xff]
    %v2314 = vld [vmem:[#allocation2 + $0x3f0] sm:$0xff]
    %v2315 = vld [vmem:[#allocation2 + $0x3f8] sm:$0xff]
    %v2316 = vld [vmem:[#allocation2 + $0x400] sm:$0xff]
    %v2317 = vld [vmem:[#allocation2 + $0x408] sm:$0xff]
    %v2318 = vld [vmem:[#allocation2 + $0x410] sm:$0xff]
    %v2319 = vld [vmem:[#allocation2 + $0x418] sm:$0xff]
    %v2320 = vld [vmem:[#allocation2 + $0x420] sm:$0xff]
    %v2321 = vld [vmem:[#allocation2 + $0x428] sm:$0xff]
    %v2322 = vld [vmem:[#allocation2 + $0x430] sm:$0xff]
    %v2323 = vld [vmem:[#allocation2 + $0x438] sm:$0xff]
    %v2324 = vld [vmem:[#allocation2 + $0x440] sm:$0xff]
    %v2325 = vld [vmem:[#allocation2 + $0x448] sm:$0xff]
    %v2326 = vld [vmem:[#allocation2 + $0x450] sm:$0xff]
    %v2327 = vld [vmem:[#allocation2 + $0x458] sm:$0xff]
    %v2328 = vld [vmem:[#allocation2 + $0x460] sm:$0xff]
    %v2329 = vld [vmem:[#allocation2 + $0x468] sm:$0xff]
    %v2330 = vld [vmem:[#allocation2 + $0x470] sm:$0xff]
    %v2331 = vld [vmem:[#allocation2 + $0x478] sm:$0xff]
    %s2332 = scalar_lea.vmem [#allocation8], 32
    %v2333 = vld [vmem:[%s2332] sm:$0xff]
    %v2334 = vld [vmem:[%s2332 + $0x8] sm:$0xff]
    %v2335 = vld [vmem:[%s2332 + $0x10] sm:$0xff]
    %v2336 = vld [vmem:[%s2332 + $0x18] sm:$0xff]
    %2338 = vset.pattern.permute.xlu0 0
    %2339 = vperm.xlu0 %2338, %v2333
    %v2340 = vpop.permute.xlu0 %2339
    %2343 = vset.pattern.permute.xlu0 0
    %2344 = vperm.xlu0 %2343, %v2334
    %v2345 = vpop.permute.xlu0 %2344
    %2348 = vset.pattern.permute.xlu0 0
    %2349 = vperm.xlu0 %2348, %v2335
    %v2350 = vpop.permute.xlu0 %2349
    %2353 = vset.pattern.permute.xlu0 0
    %2354 = vperm.xlu0 %2353, %v2336
    %v2355 = vpop.permute.xlu0 %2354
    %v2358 = vsel %vm1134, %v2178, 0
    %v2361 = vsel %vm1134, %v2181, 0
    %v2364 = vsel %vm1134, %v2184, 0
    %v2367 = vsel %vm1134, %v2187, 0
    %2369 = vmatprep.subr.mxu0 %v2189
    %2370 = vmatpush1.msra.mxu0 %v2188
    %2371 = vmatprep.subr.mxu0 %v2193
    %2372 = vmatpush1.msra.mxu0 %v2192
    %2373 = vmatprep.subr.mxu0 %v2197
    %2374 = vmatpush1.msra.mxu0 %v2196
    %2375 = vmatprep.subr.mxu0 %v2201
    %2376 = vmatpush1.msra.mxu0 %v2200
    %2377 = vmatprep.subr.mxu0 %v2205
    %2378 = vmatpush1.msra.mxu0 %v2204
    %2379 = vmatprep.subr.mxu0 %v2209
    %2380 = vmatpush1.msra.mxu0 %v2208
    %2381 = vmatprep.subr.mxu0 %v2213
    %2382 = vmatpush1.msra.mxu0 %v2212
    %2383 = vmatprep.subr.mxu0 %v2217
    %2384 = vmatpush1.msra.mxu0 %v2216
    %2385 = vmatprep.subr.mxu0 %v2221
    %2386 = vmatpush1.msra.mxu0 %v2220
    %2387 = vmatprep.subr.mxu0 %v2225
    %2388 = vmatpush1.msra.mxu0 %v2224
    %2389 = vmatprep.subr.mxu0 %v2229
    %2390 = vmatpush1.msra.mxu0 %v2228
    %2391 = vmatprep.subr.mxu0 %v2233
    %2392 = vmatpush1.msra.mxu0 %v2232
    %2393 = vmatprep.subr.mxu0 %v2237
    %2394 = vmatpush1.msra.mxu0 %v2236
    %2395 = vmatprep.subr.mxu0 %v2241
    %2396 = vmatpush1.msra.mxu0 %v2240
    %2397 = vmatprep.subr.mxu0 %v2245
    %2398 = vmatpush1.msra.mxu0 %v2244
    %2399 = vmatprep.subr.mxu0 %v2249
    %2400 = vmatpush1.msra.mxu0 %v2248
    %2401 = vmatprep.subr.mxu0 %v2253
    %2402 = vmatpush1.msra.mxu0 %v2252
    %2403 = vmatprep.subr.mxu0 %v2257
    %2404 = vmatpush1.msra.mxu0 %v2256
    %2405 = vmatprep.subr.mxu0 %v2261
    %2406 = vmatpush1.msra.mxu0 %v2260
    %2407 = vmatprep.subr.mxu0 %v2265
    %2408 = vmatpush1.msra.mxu0 %v2264
    %2409 = vmatprep.subr.mxu0 %v2269
    %2410 = vmatpush1.msra.mxu0 %v2268
    %2411 = vmatprep.subr.mxu0 %v2273
    %2412 = vmatpush1.msra.mxu0 %v2272
    %2413 = vmatprep.subr.mxu0 %v2277
    %2414 = vmatpush1.msra.mxu0 %v2276
    %2415 = vmatprep.subr.mxu0 %v2281
    %2416 = vmatpush1.msra.mxu0 %v2280
    %2417 = vmatprep.subr.mxu0 %v2285
    %2418 = vmatpush1.msra.mxu0 %v2284
    %2419 = vmatprep.subr.mxu0 %v2289
    %2420 = vmatpush1.msra.mxu0 %v2288
    %2421 = vmatprep.subr.mxu0 %v2293
    %2422 = vmatpush1.msra.mxu0 %v2292
    %2423 = vmatprep.subr.mxu0 %v2297
    %2424 = vmatpush1.msra.mxu0 %v2296
    %2425 = vmatprep.subr.mxu0 %v2301
    %2426 = vmatpush1.msra.mxu0 %v2300
    %2427 = vmatprep.subr.mxu0 %v2305
    %2428 = vmatpush1.msra.mxu0 %v2304
    %2429 = vmatprep.subr.mxu0 %v2309
    %2430 = vmatpush1.msra.mxu0 %v2308
    %2431 = vmatprep.subr.mxu0 %v2313
    %2432 = vmatpush1.msra.mxu0 %v2312
    %2433 = vmatprep.mubr.f32.mxu0 %v2177
    %2434 = vmatmul.mubr.f32.gmra.mrb[0].mxu0 %v2176
    %v2435 = vpop.f32.mrb[0].mxu0
    %v2436 = vadd.f32 %v2340, %v2435
    %v2437 = vpop.f32.mrb[0].mxu0
    %v2438 = vadd.f32 %v2340, %v2437
    %2439 = vmatprep.mubr.f32.mxu0 %v2180
    %2440 = vmatmul.mubr.f32.gmra.mrb[0].mxu0 %v2179
    %v2441 = vpop.f32.mrb[0].mxu0
    %v2442 = vadd.f32 %v2345, %v2441
    %v2443 = vpop.f32.mrb[0].mxu0
    %v2444 = vadd.f32 %v2345, %v2443
    %2445 = vmatprep.mubr.f32.mxu0 %v2183
    %2446 = vmatmul.mubr.f32.gmra.mrb[0].mxu0 %v2182
    %v2447 = vpop.f32.mrb[0].mxu0
    %v2448 = vadd.f32 %v2350, %v2447
    %v2449 = vpop.f32.mrb[0].mxu0
    %v2450 = vadd.f32 %v2350, %v2449
    %2451 = vmatprep.mubr.f32.mxu0 %v2186
    %2452 = vmatmul.mubr.f32.gmra.mrb[0].mxu0 %v2185
    %v2453 = vpop.f32.mrb[0].mxu0
    %v2454 = vadd.f32 %v2355, %v2453
    %v2455 = vpop.f32.mrb[0].mxu0
    %v2456 = vadd.f32 %v2355, %v2455
    %2457 = vdwg.mxu0
    %2458 = vmatprep.subr.mxu0 %v2317
    %2459 = vmatpush1.msra.mxu0 %v2316
    %2460 = vmatprep.subr.mxu0 %v2321
    %2461 = vmatpush1.msra.mxu0 %v2320
    %2462 = vmatprep.subr.mxu0 %v2325
    %2463 = vmatpush1.msra.mxu0 %v2324
    %2464 = vmatprep.subr.mxu0 %v2329
    %2465 = vmatpush1.msra.mxu0 %v2328
    %2466 = vmatprep.subr.mxu0 0.0
    %2467 = vmatpush1.msra.mxu0 0.0
    %2468 = vmatprep.subr.mxu0 0.0
    %2469 = vmatpush1.msra.mxu0 0.0
    %2470 = vmatprep.subr.mxu0 0.0
    %2471 = vmatpush1.msra.mxu0 0.0
    %2472 = vmatprep.subr.mxu0 0.0
    %2473 = vmatpush1.msra.mxu0 0.0
    %2474 = vmatprep.subr.mxu0 0.0
    %2475 = vmatpush1.msra.mxu0 0.0
    %2476 = vmatprep.subr.mxu0 0.0
    %2477 = vmatpush1.msra.mxu0 0.0
    %2478 = vmatprep.subr.mxu0 0.0
    %2479 = vmatpush1.msra.mxu0 0.0
    %2480 = vmatprep.subr.mxu0 0.0
    %2481 = vmatpush1.msra.mxu0 0.0
    %2482 = vmatprep.subr.mxu0 0.0
    %2483 = vmatpush1.msra.mxu0 0.0
    %2484 = vmatprep.subr.mxu0 0.0
    %2485 = vmatpush1.msra.mxu0 0.0
    %2486 = vmatprep.subr.mxu0 0.0
    %2487 = vmatpush1.msra.mxu0 0.0
    %2488 = vmatprep.subr.mxu0 0.0
    %2489 = vmatpush1.msra.mxu0 0.0
    %2490 = vmatprep.subr.mxu0 0.0
    %2491 = vmatpush1.msra.mxu0 0.0
    %2492 = vmatprep.subr.mxu0 0.0
    %2493 = vmatpush1.msra.mxu0 0.0
    %2494 = vmatprep.subr.mxu0 0.0
    %2495 = vmatpush1.msra.mxu0 0.0
    %2496 = vmatprep.subr.mxu0 0.0
    %2497 = vmatpush1.msra.mxu0 0.0
    %2498 = vmatprep.subr.mxu0 0.0
    %2499 = vmatpush1.msra.mxu0 0.0
    %2500 = vmatprep.subr.mxu0 0.0
    %2501 = vmatpush1.msra.mxu0 0.0
    %2502 = vmatprep.subr.mxu0 0.0
    %2503 = vmatpush1.msra.mxu0 0.0
    %2504 = vmatprep.subr.mxu0 0.0
    %2505 = vmatpush1.msra.mxu0 0.0
    %2506 = vmatprep.subr.mxu0 0.0
    %2507 = vmatpush1.msra.mxu0 0.0
    %2508 = vmatprep.subr.mxu0 0.0
    %2509 = vmatpush1.msra.mxu0 0.0
    %2510 = vmatprep.subr.mxu0 0.0
    %2511 = vmatpush1.msra.mxu0 0.0
    %2512 = vmatprep.subr.mxu0 0.0
    %2513 = vmatpush1.msra.mxu0 0.0
    %2514 = vmatprep.subr.mxu0 0.0
    %2515 = vmatpush1.msra.mxu0 0.0
    %2516 = vmatprep.subr.mxu0 0.0
    %2517 = vmatpush1.msra.mxu0 0.0
    %2518 = vmatprep.subr.mxu0 0.0
    %2519 = vmatpush1.msra.mxu0 0.0
    %2520 = vmatprep.subr.mxu0 0.0
    %2521 = vmatpush1.msra.mxu0 0.0
    %2522 = vmatprep.mubr.f32.mxu0 0.0
    %2523 = vmatmul.mubr.f32.gmra.mrb[0].mxu0 %v2358
    %v2524 = vpop.f32.mrb[0].mxu0
    %v2525 = vadd.f32 %v2436, %v2524
    %v2526 = vpop.f32.mrb[0].mxu0
    %v2527 = vadd.f32 %v2438, %v2526
    %2528 = vmatprep.mubr.f32.mxu0 0.0
    %2529 = vmatmul.mubr.f32.gmra.mrb[0].mxu0 %v2361
    %v2530 = vpop.f32.mrb[0].mxu0
    %v2531 = vadd.f32 %v2442, %v2530
    %v2532 = vpop.f32.mrb[0].mxu0
    %v2533 = vadd.f32 %v2444, %v2532
    %2534 = vmatprep.mubr.f32.mxu0 0.0
    %2535 = vmatmul.mubr.f32.gmra.mrb[0].mxu0 %v2364
    %v2536 = vpop.f32.mrb[0].mxu0
    %v2537 = vadd.f32 %v2448, %v2536
    %v2538 = vpop.f32.mrb[0].mxu0
    %v2539 = vadd.f32 %v2450, %v2538
    %2540 = vmatprep.mubr.f32.mxu0 0.0
    %2541 = vmatmul.mubr.f32.gmra.mrb[0].mxu0 %v2367
    %v2542 = vpop.f32.mrb[0].mxu0
    %v2543 = vadd.f32 %v2454, %v2542
    %v2544 = vpop.f32.mrb[0].mxu0
    %v2545 = vadd.f32 %v2456, %v2544
    %2546 = vdwg.mxu0
    %2547 = vmatprep.subr.mxu0 %v2191
    %2548 = vmatpush1.msra.mxu0 %v2190
    %2549 = vmatprep.subr.mxu0 %v2195
    %2550 = vmatpush1.msra.mxu0 %v2194
    %2551 = vmatprep.subr.mxu0 %v2199
    %2552 = vmatpush1.msra.mxu0 %v2198
    %2553 = vmatprep.subr.mxu0 %v2203
    %2554 = vmatpush1.msra.mxu0 %v2202
    %2555 = vmatprep.subr.mxu0 %v2207
    %2556 = vmatpush1.msra.mxu0 %v2206
    %2557 = vmatprep.subr.mxu0 %v2211
    %2558 = vmatpush1.msra.mxu0 %v2210
    %2559 = vmatprep.subr.mxu0 %v2215
    %2560 = vmatpush1.msra.mxu0 %v2214
    %2561 = vmatprep.subr.mxu0 %v2219
    %2562 = vmatpush1.msra.mxu0 %v2218
    %2563 = vmatprep.subr.mxu0 %v2223
    %2564 = vmatpush1.msra.mxu0 %v2222
    %2565 = vmatprep.subr.mxu0 %v2227
    %2566 = vmatpush1.msra.mxu0 %v2226
    %2567 = vmatprep.subr.mxu0 %v2231
    %2568 = vmatpush1.msra.mxu0 %v2230
    %2569 = vmatprep.subr.mxu0 %v2235
    %2570 = vmatpush1.msra.mxu0 %v2234
    %2571 = vmatprep.subr.mxu0 %v2239
    %2572 = vmatpush1.msra.mxu0 %v2238
    %2573 = vmatprep.subr.mxu0 %v2243
    %2574 = vmatpush1.msra.mxu0 %v2242
    %2575 = vmatprep.subr.mxu0 %v2247
    %2576 = vmatpush1.msra.mxu0 %v2246
    %2577 = vmatprep.subr.mxu0 %v2251
    %2578 = vmatpush1.msra.mxu0 %v2250
    %2579 = vmatprep.subr.mxu0 %v2255
    %2580 = vmatpush1.msra.mxu0 %v2254
    %2581 = vmatprep.subr.mxu0 %v2259
    %2582 = vmatpush1.msra.mxu0 %v2258
    %2583 = vmatprep.subr.mxu0 %v2263
    %2584 = vmatpush1.msra.mxu0 %v2262
    %2585 = vmatprep.subr.mxu0 %v2267
    %2586 = vmatpush1.msra.mxu0 %v2266
    %2587 = vmatprep.subr.mxu0 %v2271
    %2588 = vmatpush1.msra.mxu0 %v2270
    %2589 = vmatprep.subr.mxu0 %v2275
    %2590 = vmatpush1.msra.mxu0 %v2274
    %2591 = vmatprep.subr.mxu0 %v2279
    %2592 = vmatpush1.msra.mxu0 %v2278
    %2593 = vmatprep.subr.mxu0 %v2283
    %2594 = vmatpush1.msra.mxu0 %v2282
    %2595 = vmatprep.subr.mxu0 %v2287
    %2596 = vmatpush1.msra.mxu0 %v2286
    %2597 = vmatprep.subr.mxu0 %v2291
    %2598 = vmatpush1.msra.mxu0 %v2290
    %2599 = vmatprep.subr.mxu0 %v2295
    %2600 = vmatpush1.msra.mxu0 %v2294
    %2601 = vmatprep.subr.mxu0 %v2299
    %2602 = vmatpush1.msra.mxu0 %v2298
    %2603 = vmatprep.subr.mxu0 %v2303
    %2604 = vmatpush1.msra.mxu0 %v2302
    %2605 = vmatprep.subr.mxu0 %v2307
    %2606 = vmatpush1.msra.mxu0 %v2306
    %2607 = vmatprep.subr.mxu0 %v2311
    %2608 = vmatpush1.msra.mxu0 %v2310
    %2609 = vmatprep.subr.mxu0 %v2315
    %2610 = vmatpush1.msra.mxu0 %v2314
    %2611 = vmatprep.mubr.f32.mxu0 %v2177
    %2612 = vmatmul.mubr.f32.gmra.mrb[0].mxu0 %v2176
    %v2613 = vpop.f32.mrb[0].mxu0
    %v2614 = vadd.f32 %v2340, %v2613
    %v2615 = vpop.f32.mrb[0].mxu0
    %v2616 = vadd.f32 %v2340, %v2615
    %2617 = vmatprep.mubr.f32.mxu0 %v2180
    %2618 = vmatmul.mubr.f32.gmra.mrb[0].mxu0 %v2179
    %v2619 = vpop.f32.mrb[0].mxu0
    %v2620 = vadd.f32 %v2345, %v2619
    %v2621 = vpop.f32.mrb[0].mxu0
    %v2622 = vadd.f32 %v2345, %v2621
    %2623 = vmatprep.mubr.f32.mxu0 %v2183
    %2624 = vmatmul.mubr.f32.gmra.mrb[0].mxu0 %v2182
    %v2625 = vpop.f32.mrb[0].mxu0
    %v2626 = vadd.f32 %v2350, %v2625
    %v2627 = vpop.f32.mrb[0].mxu0
    %v2628 = vadd.f32 %v2350, %v2627
    %2629 = vmatprep.mubr.f32.mxu0 %v2186
    %2630 = vmatmul.mubr.f32.gmra.mrb[0].mxu0 %v2185
    %v2631 = vpop.f32.mrb[0].mxu0
    %v2632 = vadd.f32 %v2355, %v2631
    %v2633 = vpop.f32.mrb[0].mxu0
    %v2634 = vadd.f32 %v2355, %v2633
    %2635 = vdwg.mxu0
    %2636 = vmatprep.subr.mxu0 %v2319
    %2637 = vmatpush1.msra.mxu0 %v2318
    %2638 = vmatprep.subr.mxu0 %v2323
    %2639 = vmatpush1.msra.mxu0 %v2322
    %2640 = vmatprep.subr.mxu0 %v2327
    %2641 = vmatpush1.msra.mxu0 %v2326
    %2642 = vmatprep.subr.mxu0 %v2331
    %2643 = vmatpush1.msra.mxu0 %v2330
    %2644 = vmatprep.subr.mxu0 0.0
    %2645 = vmatpush1.msra.mxu0 0.0
    %2646 = vmatprep.subr.mxu0 0.0
    %2647 = vmatpush1.msra.mxu0 0.0
    %2648 = vmatprep.subr.mxu0 0.0
    %2649 = vmatpush1.msra.mxu0 0.0
    %2650 = vmatprep.subr.mxu0 0.0
    %2651 = vmatpush1.msra.mxu0 0.0
    %2652 = vmatprep.subr.mxu0 0.0
    %2653 = vmatpush1.msra.mxu0 0.0
    %2654 = vmatprep.subr.mxu0 0.0
    %2655 = vmatpush1.msra.mxu0 0.0
    %2656 = vmatprep.subr.mxu0 0.0
    %2657 = vmatpush1.msra.mxu0 0.0
    %2658 = vmatprep.subr.mxu0 0.0
    %2659 = vmatpush1.msra.mxu0 0.0
    %2660 = vmatprep.subr.mxu0 0.0
    %2661 = vmatpush1.msra.mxu0 0.0
    %2662 = vmatprep.subr.mxu0 0.0
    %2663 = vmatpush1.msra.mxu0 0.0
    %2664 = vmatprep.subr.mxu0 0.0
    %2665 = vmatpush1.msra.mxu0 0.0
    %2666 = vmatprep.subr.mxu0 0.0
    %2667 = vmatpush1.msra.mxu0 0.0
    %2668 = vmatprep.subr.mxu0 0.0
    %2669 = vmatpush1.msra.mxu0 0.0
    %2670 = vmatprep.subr.mxu0 0.0
    %2671 = vmatpush1.msra.mxu0 0.0
    %2672 = vmatprep.subr.mxu0 0.0
    %2673 = vmatpush1.msra.mxu0 0.0
    %2674 = vmatprep.subr.mxu0 0.0
    %2675 = vmatpush1.msra.mxu0 0.0
    %2676 = vmatprep.subr.mxu0 0.0
    %2677 = vmatpush1.msra.mxu0 0.0
    %2678 = vmatprep.subr.mxu0 0.0
    %2679 = vmatpush1.msra.mxu0 0.0
    %2680 = vmatprep.subr.mxu0 0.0
    %2681 = vmatpush1.msra.mxu0 0.0
    %2682 = vmatprep.subr.mxu0 0.0
    %2683 = vmatpush1.msra.mxu0 0.0
    %2684 = vmatprep.subr.mxu0 0.0
    %2685 = vmatpush1.msra.mxu0 0.0
    %2686 = vmatprep.subr.mxu0 0.0
    %2687 = vmatpush1.msra.mxu0 0.0
    %2688 = vmatprep.subr.mxu0 0.0
    %2689 = vmatpush1.msra.mxu0 0.0
    %2690 = vmatprep.subr.mxu0 0.0
    %2691 = vmatpush1.msra.mxu0 0.0
    %2692 = vmatprep.subr.mxu0 0.0
    %2693 = vmatpush1.msra.mxu0 0.0
    %2694 = vmatprep.subr.mxu0 0.0
    %2695 = vmatpush1.msra.mxu0 0.0
    %2696 = vmatprep.subr.mxu0 0.0
    %2697 = vmatpush1.msra.mxu0 0.0
    %2698 = vmatprep.subr.mxu0 0.0
    %2699 = vmatpush1.msra.mxu0 0.0
    %2700 = vmatprep.mubr.f32.mxu0 0.0
    %2701 = vmatmul.mubr.f32.gmra.mrb[0].mxu0 %v2358
    %v2702 = vpop.f32.mrb[0].mxu0
    %v2703 = vadd.f32 %v2614, %v2702
    %v2704 = vpop.f32.mrb[0].mxu0
    %v2705 = vadd.f32 %v2616, %v2704
    %2706 = vmatprep.mubr.f32.mxu0 0.0
    %2707 = vmatmul.mubr.f32.gmra.mrb[0].mxu0 %v2361
    %v2708 = vpop.f32.mrb[0].mxu0
    %v2709 = vadd.f32 %v2620, %v2708
    %v2710 = vpop.f32.mrb[0].mxu0
    %v2711 = vadd.f32 %v2622, %v2710
    %2712 = vmatprep.mubr.f32.mxu0 0.0
    %2713 = vmatmul.mubr.f32.gmra.mrb[0].mxu0 %v2364
    %v2714 = vpop.f32.mrb[0].mxu0
    %v2715 = vadd.f32 %v2626, %v2714
    %v2716 = vpop.f32.mrb[0].mxu0
    %v2717 = vadd.f32 %v2628, %v2716
    %2718 = vmatprep.mubr.f32.mxu0 0.0
    %2719 = vmatmul.mubr.f32.gmra.mrb[0].mxu0 %v2367
    %v2720 = vpop.f32.mrb[0].mxu0
    %v2721 = vadd.f32 %v2632, %v2720
    %v2722 = vpop.f32.mrb[0].mxu0
    %v2723 = vadd.f32 %v2634, %v2722
    %2724 = vdwg.mxu0
    %v2725 = vmax.f32 %v2525, 0.0
    %v2726 = vmax.f32 %v2527, 0.0
    %v2727 = vmax.f32 %v2703, 0.0
    %v2728 = vmax.f32 %v2705, 0.0
    %v2729 = vmax.f32 %v2531, 0.0
    %v2730 = vmax.f32 %v2533, 0.0
    %v2731 = vmax.f32 %v2709, 0.0
    %v2732 = vmax.f32 %v2711, 0.0
    %v2733 = vmax.f32 %v2537, 0.0
    %v2734 = vmax.f32 %v2539, 0.0
    %v2735 = vmax.f32 %v2715, 0.0
    %v2736 = vmax.f32 %v2717, 0.0
    %v2737 = vmax.f32 %v2543, 0.0
    %v2738 = vmax.f32 %v2545, 0.0
    %v2739 = vmax.f32 %v2721, 0.0
    %v2740 = vmax.f32 %v2723, 0.0
    %2741 = vrot.lane.b32.xlu0 %v2725, 17
    %v2742 = vpop.permute.xlu0 %2741
    %2743 = vrot.lane.b32.xlu0 %v2729, 17
    %v2744 = vpop.permute.xlu0 %2743
    %2745 = vrot.lane.b32.xlu0 %v2733, 17
    %v2746 = vpop.permute.xlu0 %2745
    %2747 = vrot.lane.b32.xlu0 %v2737, 17
    %v2748 = vpop.permute.xlu0 %2747
    %2749 = vrot.lane.b32.xlu0 %v2726, 17
    %v2750 = vpop.permute.xlu0 %2749
    %2751 = vrot.lane.b32.xlu0 %v2730, 17
    %v2752 = vpop.permute.xlu0 %2751
    %2753 = vrot.lane.b32.xlu0 %v2734, 17
    %v2754 = vpop.permute.xlu0 %2753
    %2755 = vrot.lane.b32.xlu0 %v2738, 17
    %v2756 = vpop.permute.xlu0 %2755
    %2757 = vrot.lane.b32.xlu0 %v2727, 17
    %v2758 = vpop.permute.xlu0 %2757
    %2759 = vrot.lane.b32.xlu0 %v2731, 17
    %v2760 = vpop.permute.xlu0 %2759
    %2761 = vrot.lane.b32.xlu0 %v2735, 17
    %v2762 = vpop.permute.xlu0 %2761
    %2763 = vrot.lane.b32.xlu0 %v2739, 17
    %v2764 = vpop.permute.xlu0 %2763
    %2765 = vrot.lane.b32.xlu0 %v2728, 17
    %v2766 = vpop.permute.xlu0 %2765
    %2767 = vrot.lane.b32.xlu0 %v2732, 17
    %v2768 = vpop.permute.xlu0 %2767
    %2769 = vrot.lane.b32.xlu0 %v2736, 17
    %v2770 = vpop.permute.xlu0 %2769
    %2771 = vrot.lane.b32.xlu0 %v2740, 17
    %v2772 = vpop.permute.xlu0 %2771
    %v2773 = vsel %vm154, %v2758, %v2766
    %v2774 = vsel %vm154, %v2760, %v2768
    %v2775 = vsel %vm154, %v2762, %v2770
    %v2776 = vsel %vm154, %v2764, %v2772
    %v2777 = vsel %vm154, %v2750, %v2758
    %v2778 = vsel %vm154, %v2752, %v2760
    %v2779 = vsel %vm154, %v2754, %v2762
    %v2780 = vsel %vm154, %v2756, %v2764
    %v2781 = vsel %vm154, %v2742, %v2750
    %v2782 = vsel %vm154, %v2744, %v2752
    %v2783 = vsel %vm154, %v2746, %v2754
    %v2784 = vsel %vm154, %v2748, %v2756
    %v2785 = vsel %vm154, %v2766, %v2742
    %v2786 = vsel %vm154, %v2768, %v2744
    %v2787 = vsel %vm154, %v2770, %v2746
    %v2788 = vsel %vm154, %v2772, %v2748
    %v2789 = vmul.f32 %v2785, %v175
    %v2790 = vmul.f32 %v2781, %v179
    %v2791 = vmul.f32 %v2777, %v183
    %v2792 = vmul.f32 %v2773, %v187
    %v2793 = vmul.f32 %v2786, %v175
    %v2794 = vmul.f32 %v2782, %v179
    %v2795 = vmul.f32 %v2778, %v183
    %v2796 = vmul.f32 %v2774, %v187
    %v2797 = vmul.f32 %v2787, %v175
    %v2798 = vmul.f32 %v2783, %v179
    %v2799 = vmul.f32 %v2779, %v183
    %v2800 = vmul.f32 %v2775, %v187
    %v2801 = vmul.f32 %v2788, %v175
    %v2802 = vmul.f32 %v2784, %v179
    %v2803 = vmul.f32 %v2780, %v183
    %v2804 = vmul.f32 %v2776, %v187
    %2805 = vst [vmem:[#allocation2] sm:$0xff] %v2789
    %2806 = vst [vmem:[#allocation2 + $0x8] sm:$0xff] %v2790
    %2807 = vst [vmem:[#allocation2 + $0x10] sm:$0xff] %v2791
    %2808 = vst [vmem:[#allocation2 + $0x18] sm:$0xff] %v2792
    %2809 = vst [vmem:[#allocation2 + $0x20] sm:$0xff] %v2793
    %2810 = vst [vmem:[#allocation2 + $0x28] sm:$0xff] %v2794
    %2811 = vst [vmem:[#allocation2 + $0x30] sm:$0xff] %v2795
    %2812 = vst [vmem:[#allocation2 + $0x38] sm:$0xff] %v2796
    %2813 = vst [vmem:[#allocation2 + $0x40] sm:$0xff] %v2797
    %2814 = vst [vmem:[#allocation2 + $0x48] sm:$0xff] %v2798
    %2815 = vst [vmem:[#allocation2 + $0x50] sm:$0xff] %v2799
    %2816 = vst [vmem:[#allocation2 + $0x58] sm:$0xff] %v2800
    %2817 = vst [vmem:[#allocation2 + $0x60] sm:$0xff] %v2801
    %2818 = vst [vmem:[#allocation2 + $0x68] sm:$0xff] %v2802
    %2819 = vst [vmem:[#allocation2 + $0x70] sm:$0xff] %v2803
    %2820 = vst [vmem:[#allocation2 + $0x78] sm:$0xff] %v2804
    %2821 = vrot.lane.b32.xlu0 %v2725, 16
    %v2822 = vpop.permute.xlu0 %2821
    %2823 = vrot.lane.b32.xlu0 %v2729, 16
    %v2824 = vpop.permute.xlu0 %2823
    %2825 = vrot.lane.b32.xlu0 %v2733, 16
    %v2826 = vpop.permute.xlu0 %2825
    %2827 = vrot.lane.b32.xlu0 %v2737, 16
    %v2828 = vpop.permute.xlu0 %2827
    %2829 = vrot.lane.b32.xlu0 %v2726, 16
    %v2830 = vpop.permute.xlu0 %2829
    %2831 = vrot.lane.b32.xlu0 %v2730, 16
    %v2832 = vpop.permute.xlu0 %2831
    %2833 = vrot.lane.b32.xlu0 %v2734, 16
    %v2834 = vpop.permute.xlu0 %2833
    %2835 = vrot.lane.b32.xlu0 %v2738, 16
    %v2836 = vpop.permute.xlu0 %2835
    %2837 = vrot.lane.b32.xlu0 %v2727, 16
    %v2838 = vpop.permute.xlu0 %2837
    %2839 = vrot.lane.b32.xlu0 %v2731, 16
    %v2840 = vpop.permute.xlu0 %2839
    %2841 = vrot.lane.b32.xlu0 %v2735, 16
    %v2842 = vpop.permute.xlu0 %2841
    %2843 = vrot.lane.b32.xlu0 %v2739, 16
    %v2844 = vpop.permute.xlu0 %2843
    %2845 = vrot.lane.b32.xlu0 %v2728, 16
    %v2846 = vpop.permute.xlu0 %2845
    %2847 = vrot.lane.b32.xlu0 %v2732, 16
    %v2848 = vpop.permute.xlu0 %2847
    %2849 = vrot.lane.b32.xlu0 %v2736, 16
    %v2850 = vpop.permute.xlu0 %2849
    %2851 = vrot.lane.b32.xlu0 %v2740, 16
    %v2852 = vpop.permute.xlu0 %2851
    %v2853 = vsel %vm256, %v2838, %v2846
    %v2854 = vsel %vm256, %v2840, %v2848
    %v2855 = vsel %vm256, %v2842, %v2850
    %v2856 = vsel %vm256, %v2844, %v2852
    %v2857 = vsel %vm256, %v2830, %v2838
    %v2858 = vsel %vm256, %v2832, %v2840
    %v2859 = vsel %vm256, %v2834, %v2842
    %v2860 = vsel %vm256, %v2836, %v2844
    %v2861 = vsel %vm256, %v2822, %v2830
    %v2862 = vsel %vm256, %v2824, %v2832
    %v2863 = vsel %vm256, %v2826, %v2834
    %v2864 = vsel %vm256, %v2828, %v2836
    %v2865 = vsel %vm256, %v2846, %v2822
    %v2866 = vsel %vm256, %v2848, %v2824
    %v2867 = vsel %vm256, %v2850, %v2826
    %v2868 = vsel %vm256, %v2852, %v2828
    %v2869 = vmul.f32 %v2865, %v277
    %v2870 = vmul.f32 %v2861, %v281
    %v2871 = vmul.f32 %v2857, %v285
    %v2872 = vmul.f32 %v2853, %v289
    %v2873 = vmul.f32 %v2866, %v277
    %v2874 = vmul.f32 %v2862, %v281
    %v2875 = vmul.f32 %v2858, %v285
    %v2876 = vmul.f32 %v2854, %v289
    %v2877 = vmul.f32 %v2867, %v277
    %v2878 = vmul.f32 %v2863, %v281
    %v2879 = vmul.f32 %v2859, %v285
    %v2880 = vmul.f32 %v2855, %v289
    %v2881 = vmul.f32 %v2868, %v277
    %v2882 = vmul.f32 %v2864, %v281
    %v2883 = vmul.f32 %v2860, %v285
    %v2884 = vmul.f32 %v2856, %v289
    %2885 = vst [vmem:[#allocation2 + $0x80] sm:$0xff] %v2869
    %2886 = vst [vmem:[#allocation2 + $0x88] sm:$0xff] %v2870
    %2887 = vst [vmem:[#allocation2 + $0x90] sm:$0xff] %v2871
    %2888 = vst [vmem:[#allocation2 + $0x98] sm:$0xff] %v2872
    %2889 = vst [vmem:[#allocation2 + $0xa0] sm:$0xff] %v2873
    %2890 = vst [vmem:[#allocation2 + $0xa8] sm:$0xff] %v2874
    %2891 = vst [vmem:[#allocation2 + $0xb0] sm:$0xff] %v2875
    %2892 = vst [vmem:[#allocation2 + $0xb8] sm:$0xff] %v2876
    %2893 = vst [vmem:[#allocation2 + $0xc0] sm:$0xff] %v2877
    %2894 = vst [vmem:[#allocation2 + $0xc8] sm:$0xff] %v2878
    %2895 = vst [vmem:[#allocation2 + $0xd0] sm:$0xff] %v2879
    %2896 = vst [vmem:[#allocation2 + $0xd8] sm:$0xff] %v2880
    %2897 = vst [vmem:[#allocation2 + $0xe0] sm:$0xff] %v2881
    %2898 = vst [vmem:[#allocation2 + $0xe8] sm:$0xff] %v2882
    %2899 = vst [vmem:[#allocation2 + $0xf0] sm:$0xff] %v2883
    %2900 = vst [vmem:[#allocation2 + $0xf8] sm:$0xff] %v2884
    %2901 = vrot.lane.b32.xlu0 %v2725, 15
    %v2902 = vpop.permute.xlu0 %2901
    %2903 = vrot.lane.b32.xlu0 %v2729, 15
    %v2904 = vpop.permute.xlu0 %2903
    %2905 = vrot.lane.b32.xlu0 %v2733, 15
    %v2906 = vpop.permute.xlu0 %2905
    %2907 = vrot.lane.b32.xlu0 %v2737, 15
    %v2908 = vpop.permute.xlu0 %2907
    %2909 = vrot.lane.b32.xlu0 %v2726, 15
    %v2910 = vpop.permute.xlu0 %2909
    %2911 = vrot.lane.b32.xlu0 %v2730, 15
    %v2912 = vpop.permute.xlu0 %2911
    %2913 = vrot.lane.b32.xlu0 %v2734, 15
    %v2914 = vpop.permute.xlu0 %2913
    %2915 = vrot.lane.b32.xlu0 %v2738, 15
    %v2916 = vpop.permute.xlu0 %2915
    %2917 = vrot.lane.b32.xlu0 %v2727, 15
    %v2918 = vpop.permute.xlu0 %2917
    %2919 = vrot.lane.b32.xlu0 %v2731, 15
    %v2920 = vpop.permute.xlu0 %2919
    %2921 = vrot.lane.b32.xlu0 %v2735, 15
    %v2922 = vpop.permute.xlu0 %2921
    %2923 = vrot.lane.b32.xlu0 %v2739, 15
    %v2924 = vpop.permute.xlu0 %2923
    %2925 = vrot.lane.b32.xlu0 %v2728, 15
    %v2926 = vpop.permute.xlu0 %2925
    %2927 = vrot.lane.b32.xlu0 %v2732, 15
    %v2928 = vpop.permute.xlu0 %2927
    %2929 = vrot.lane.b32.xlu0 %v2736, 15
    %v2930 = vpop.permute.xlu0 %2929
    %2931 = vrot.lane.b32.xlu0 %v2740, 15
    %v2932 = vpop.permute.xlu0 %2931
    %v2933 = vsel %vm358, %v2918, %v2926
    %v2934 = vsel %vm358, %v2920, %v2928
    %v2935 = vsel %vm358, %v2922, %v2930
    %v2936 = vsel %vm358, %v2924, %v2932
    %v2937 = vsel %vm358, %v2910, %v2918
    %v2938 = vsel %vm358, %v2912, %v2920
    %v2939 = vsel %vm358, %v2914, %v2922
    %v2940 = vsel %vm358, %v2916, %v2924
    %v2941 = vsel %vm358, %v2902, %v2910
    %v2942 = vsel %vm358, %v2904, %v2912
    %v2943 = vsel %vm358, %v2906, %v2914
    %v2944 = vsel %vm358, %v2908, %v2916
    %v2945 = vsel %vm358, %v2926, %v2902
    %v2946 = vsel %vm358, %v2928, %v2904
    %v2947 = vsel %vm358, %v2930, %v2906
    %v2948 = vsel %vm358, %v2932, %v2908
    %v2949 = vmul.f32 %v2945, %v379
    %v2950 = vmul.f32 %v2941, %v383
    %v2951 = vmul.f32 %v2937, %v387
    %v2952 = vmul.f32 %v2933, %v391
    %v2953 = vmul.f32 %v2946, %v379
    %v2954 = vmul.f32 %v2942, %v383
    %v2955 = vmul.f32 %v2938, %v387
    %v2956 = vmul.f32 %v2934, %v391
    %v2957 = vmul.f32 %v2947, %v379
    %v2958 = vmul.f32 %v2943, %v383
    %v2959 = vmul.f32 %v2939, %v387
    %v2960 = vmul.f32 %v2935, %v391
    %v2961 = vmul.f32 %v2948, %v379
    %v2962 = vmul.f32 %v2944, %v383
    %v2963 = vmul.f32 %v2940, %v387
    %v2964 = vmul.f32 %v2936, %v391
    %2965 = vst [vmem:[#allocation2 + $0x100] sm:$0xff] %v2949
    %2966 = vst [vmem:[#allocation2 + $0x108] sm:$0xff] %v2950
    %2967 = vst [vmem:[#allocation2 + $0x110] sm:$0xff] %v2951
    %2968 = vst [vmem:[#allocation2 + $0x118] sm:$0xff] %v2952
    %2969 = vst [vmem:[#allocation2 + $0x120] sm:$0xff] %v2953
    %2970 = vst [vmem:[#allocation2 + $0x128] sm:$0xff] %v2954
    %2971 = vst [vmem:[#allocation2 + $0x130] sm:$0xff] %v2955
    %2972 = vst [vmem:[#allocation2 + $0x138] sm:$0xff] %v2956
    %2973 = vst [vmem:[#allocation2 + $0x140] sm:$0xff] %v2957
    %2974 = vst [vmem:[#allocation2 + $0x148] sm:$0xff] %v2958
    %2975 = vst [vmem:[#allocation2 + $0x150] sm:$0xff] %v2959
    %2976 = vst [vmem:[#allocation2 + $0x158] sm:$0xff] %v2960
    %2977 = vst [vmem:[#allocation2 + $0x160] sm:$0xff] %v2961
    %2978 = vst [vmem:[#allocation2 + $0x168] sm:$0xff] %v2962
    %2979 = vst [vmem:[#allocation2 + $0x170] sm:$0xff] %v2963
    %2980 = vst [vmem:[#allocation2 + $0x178] sm:$0xff] %v2964
    %2981 = vrot.lane.b32.xlu0 %v2725, 1
    %v2982 = vpop.permute.xlu0 %2981
    %2983 = vrot.lane.b32.xlu0 %v2729, 1
    %v2984 = vpop.permute.xlu0 %2983
    %2985 = vrot.lane.b32.xlu0 %v2733, 1
    %v2986 = vpop.permute.xlu0 %2985
    %2987 = vrot.lane.b32.xlu0 %v2737, 1
    %v2988 = vpop.permute.xlu0 %2987
    %2989 = vrot.lane.b32.xlu0 %v2726, 1
    %v2990 = vpop.permute.xlu0 %2989
    %2991 = vrot.lane.b32.xlu0 %v2730, 1
    %v2992 = vpop.permute.xlu0 %2991
    %2993 = vrot.lane.b32.xlu0 %v2734, 1
    %v2994 = vpop.permute.xlu0 %2993
    %2995 = vrot.lane.b32.xlu0 %v2738, 1
    %v2996 = vpop.permute.xlu0 %2995
    %2997 = vrot.lane.b32.xlu0 %v2727, 1
    %v2998 = vpop.permute.xlu0 %2997
    %2999 = vrot.lane.b32.xlu0 %v2731, 1
    %v3000 = vpop.permute.xlu0 %2999
    %3001 = vrot.lane.b32.xlu0 %v2735, 1
    %v3002 = vpop.permute.xlu0 %3001
    %3003 = vrot.lane.b32.xlu0 %v2739, 1
    %v3004 = vpop.permute.xlu0 %3003
    %3005 = vrot.lane.b32.xlu0 %v2728, 1
    %v3006 = vpop.permute.xlu0 %3005
    %3007 = vrot.lane.b32.xlu0 %v2732, 1
    %v3008 = vpop.permute.xlu0 %3007
    %3009 = vrot.lane.b32.xlu0 %v2736, 1
    %v3010 = vpop.permute.xlu0 %3009
    %3011 = vrot.lane.b32.xlu0 %v2740, 1
    %v3012 = vpop.permute.xlu0 %3011
    %v3013 = vsel %vm460, %v2998, %v3006
    %v3014 = vsel %vm460, %v3000, %v3008
    %v3015 = vsel %vm460, %v3002, %v3010
    %v3016 = vsel %vm460, %v3004, %v3012
    %v3017 = vsel %vm460, %v2990, %v2998
    %v3018 = vsel %vm460, %v2992, %v3000
    %v3019 = vsel %vm460, %v2994, %v3002
    %v3020 = vsel %vm460, %v2996, %v3004
    %v3021 = vsel %vm460, %v2982, %v2990
    %v3022 = vsel %vm460, %v2984, %v2992
    %v3023 = vsel %vm460, %v2986, %v2994
    %v3024 = vsel %vm460, %v2988, %v2996
    %v3025 = vsel %vm460, %v3006, %v2982
    %v3026 = vsel %vm460, %v3008, %v2984
    %v3027 = vsel %vm460, %v3010, %v2986
    %v3028 = vsel %vm460, %v3012, %v2988
    %v3029 = vmul.f32 %v3025, %v481
    %v3030 = vmul.f32 %v3021, %v485
    %v3031 = vmul.f32 %v3017, %v489
    %v3032 = vmul.f32 %v3013, %v493
    %v3033 = vmul.f32 %v3026, %v481
    %v3034 = vmul.f32 %v3022, %v485
    %v3035 = vmul.f32 %v3018, %v489
    %v3036 = vmul.f32 %v3014, %v493
    %v3037 = vmul.f32 %v3027, %v481
    %v3038 = vmul.f32 %v3023, %v485
    %v3039 = vmul.f32 %v3019, %v489
    %v3040 = vmul.f32 %v3015, %v493
    %v3041 = vmul.f32 %v3028, %v481
    %v3042 = vmul.f32 %v3024, %v485
    %v3043 = vmul.f32 %v3020, %v489
    %v3044 = vmul.f32 %v3016, %v493
    %3045 = vst [vmem:[#allocation2 + $0x180] sm:$0xff] %v3029
    %3046 = vst [vmem:[#allocation2 + $0x188] sm:$0xff] %v3030
    %3047 = vst [vmem:[#allocation2 + $0x190] sm:$0xff] %v3031
    %3048 = vst [vmem:[#allocation2 + $0x198] sm:$0xff] %v3032
    %3049 = vst [vmem:[#allocation2 + $0x1a0] sm:$0xff] %v3033
    %3050 = vst [vmem:[#allocation2 + $0x1a8] sm:$0xff] %v3034
    %3051 = vst [vmem:[#allocation2 + $0x1b0] sm:$0xff] %v3035
    %3052 = vst [vmem:[#allocation2 + $0x1b8] sm:$0xff] %v3036
    %3053 = vst [vmem:[#allocation2 + $0x1c0] sm:$0xff] %v3037
    %3054 = vst [vmem:[#allocation2 + $0x1c8] sm:$0xff] %v3038
    %3055 = vst [vmem:[#allocation2 + $0x1d0] sm:$0xff] %v3039
    %3056 = vst [vmem:[#allocation2 + $0x1d8] sm:$0xff] %v3040
    %3057 = vst [vmem:[#allocation2 + $0x1e0] sm:$0xff] %v3041
    %3058 = vst [vmem:[#allocation2 + $0x1e8] sm:$0xff] %v3042
    %3059 = vst [vmem:[#allocation2 + $0x1f0] sm:$0xff] %v3043
    %3060 = vst [vmem:[#allocation2 + $0x1f8] sm:$0xff] %v3044
    %3061 = vst [vmem:[#allocation2 + $0x200] sm:$0xff] %v2725
    %3062 = vst [vmem:[#allocation2 + $0x208] sm:$0xff] %v2726
    %3063 = vst [vmem:[#allocation2 + $0x210] sm:$0xff] %v2727
    %3064 = vst [vmem:[#allocation2 + $0x218] sm:$0xff] %v2728
    %3065 = vst [vmem:[#allocation2 + $0x220] sm:$0xff] %v2729
    %3066 = vst [vmem:[#allocation2 + $0x228] sm:$0xff] %v2730
    %3067 = vst [vmem:[#allocation2 + $0x230] sm:$0xff] %v2731
    %3068 = vst [vmem:[#allocation2 + $0x238] sm:$0xff] %v2732
    %3069 = vst [vmem:[#allocation2 + $0x240] sm:$0xff] %v2733
    %3070 = vst [vmem:[#allocation2 + $0x248] sm:$0xff] %v2734
    %3071 = vst [vmem:[#allocation2 + $0x250] sm:$0xff] %v2735
    %3072 = vst [vmem:[#allocation2 + $0x258] sm:$0xff] %v2736
    %3073 = vst [vmem:[#allocation2 + $0x260] sm:$0xff] %v2737
    %3074 = vst [vmem:[#allocation2 + $0x268] sm:$0xff] %v2738
    %3075 = vst [vmem:[#allocation2 + $0x270] sm:$0xff] %v2739
    %3076 = vst [vmem:[#allocation2 + $0x278] sm:$0xff] %v2740
    %3077 = vrot.lane.b32.xlu0 %v2725, 127
    %v3078 = vpop.permute.xlu0 %3077
    %3079 = vrot.lane.b32.xlu0 %v2729, 127
    %v3080 = vpop.permute.xlu0 %3079
    %3081 = vrot.lane.b32.xlu0 %v2733, 127
    %v3082 = vpop.permute.xlu0 %3081
    %3083 = vrot.lane.b32.xlu0 %v2737, 127
    %v3084 = vpop.permute.xlu0 %3083
    %3085 = vrot.lane.b32.xlu0 %v2726, 127
    %v3086 = vpop.permute.xlu0 %3085
    %3087 = vrot.lane.b32.xlu0 %v2730, 127
    %v3088 = vpop.permute.xlu0 %3087
    %3089 = vrot.lane.b32.xlu0 %v2734, 127
    %v3090 = vpop.permute.xlu0 %3089
    %3091 = vrot.lane.b32.xlu0 %v2738, 127
    %v3092 = vpop.permute.xlu0 %3091
    %3093 = vrot.lane.b32.xlu0 %v2727, 127
    %v3094 = vpop.permute.xlu0 %3093
    %3095 = vrot.lane.b32.xlu0 %v2731, 127
    %v3096 = vpop.permute.xlu0 %3095
    %3097 = vrot.lane.b32.xlu0 %v2735, 127
    %v3098 = vpop.permute.xlu0 %3097
    %3099 = vrot.lane.b32.xlu0 %v2739, 127
    %v3100 = vpop.permute.xlu0 %3099
    %3101 = vrot.lane.b32.xlu0 %v2728, 127
    %v3102 = vpop.permute.xlu0 %3101
    %3103 = vrot.lane.b32.xlu0 %v2732, 127
    %v3104 = vpop.permute.xlu0 %3103
    %3105 = vrot.lane.b32.xlu0 %v2736, 127
    %v3106 = vpop.permute.xlu0 %3105
    %3107 = vrot.lane.b32.xlu0 %v2740, 127
    %v3108 = vpop.permute.xlu0 %3107
    %v3109 = vsel %vm578, %v3094, %v3102
    %v3110 = vsel %vm578, %v3096, %v3104
    %v3111 = vsel %vm578, %v3098, %v3106
    %v3112 = vsel %vm578, %v3100, %v3108
    %v3113 = vsel %vm578, %v3086, %v3094
    %v3114 = vsel %vm578, %v3088, %v3096
    %v3115 = vsel %vm578, %v3090, %v3098
    %v3116 = vsel %vm578, %v3092, %v3100
    %v3117 = vsel %vm578, %v3078, %v3086
    %v3118 = vsel %vm578, %v3080, %v3088
    %v3119 = vsel %vm578, %v3082, %v3090
    %v3120 = vsel %vm578, %v3084, %v3092
    %v3121 = vsel %vm578, %v3102, %v3078
    %v3122 = vsel %vm578, %v3104, %v3080
    %v3123 = vsel %vm578, %v3106, %v3082
    %v3124 = vsel %vm578, %v3108, %v3084
    %v3125 = vmul.f32 %v3117, %v599
    %v3126 = vmul.f32 %v3113, %v603
    %v3127 = vmul.f32 %v3109, %v607
    %v3128 = vmul.f32 %v3121, %v611
    %v3129 = vmul.f32 %v3118, %v599
    %v3130 = vmul.f32 %v3114, %v603
    %v3131 = vmul.f32 %v3110, %v607
    %v3132 = vmul.f32 %v3122, %v611
    %v3133 = vmul.f32 %v3119, %v599
    %v3134 = vmul.f32 %v3115, %v603
    %v3135 = vmul.f32 %v3111, %v607
    %v3136 = vmul.f32 %v3123, %v611
    %v3137 = vmul.f32 %v3120, %v599
    %v3138 = vmul.f32 %v3116, %v603
    %v3139 = vmul.f32 %v3112, %v607
    %v3140 = vmul.f32 %v3124, %v611
    %3141 = vst [vmem:[#allocation2 + $0x280] sm:$0xff] %v3125
    %3142 = vst [vmem:[#allocation2 + $0x288] sm:$0xff] %v3126
    %3143 = vst [vmem:[#allocation2 + $0x290] sm:$0xff] %v3127
    %3144 = vst [vmem:[#allocation2 + $0x298] sm:$0xff] %v3128
    %3145 = vst [vmem:[#allocation2 + $0x2a0] sm:$0xff] %v3129
    %3146 = vst [vmem:[#allocation2 + $0x2a8] sm:$0xff] %v3130
    %3147 = vst [vmem:[#allocation2 + $0x2b0] sm:$0xff] %v3131
    %3148 = vst [vmem:[#allocation2 + $0x2b8] sm:$0xff] %v3132
    %3149 = vst [vmem:[#allocation2 + $0x2c0] sm:$0xff] %v3133
    %3150 = vst [vmem:[#allocation2 + $0x2c8] sm:$0xff] %v3134
    %3151 = vst [vmem:[#allocation2 + $0x2d0] sm:$0xff] %v3135
    %3152 = vst [vmem:[#allocation2 + $0x2d8] sm:$0xff] %v3136
    %3153 = vst [vmem:[#allocation2 + $0x2e0] sm:$0xff] %v3137
    %3154 = vst [vmem:[#allocation2 + $0x2e8] sm:$0xff] %v3138
    %3155 = vst [vmem:[#allocation2 + $0x2f0] sm:$0xff] %v3139
    %3156 = vst [vmem:[#allocation2 + $0x2f8] sm:$0xff] %v3140
    %3157 = vrot.lane.b32.xlu0 %v2725, 113
    %v3158 = vpop.permute.xlu0 %3157
    %3159 = vrot.lane.b32.xlu0 %v2729, 113
    %v3160 = vpop.permute.xlu0 %3159
    %3161 = vrot.lane.b32.xlu0 %v2733, 113
    %v3162 = vpop.permute.xlu0 %3161
    %3163 = vrot.lane.b32.xlu0 %v2737, 113
    %v3164 = vpop.permute.xlu0 %3163
    %3165 = vrot.lane.b32.xlu0 %v2726, 113
    %v3166 = vpop.permute.xlu0 %3165
    %3167 = vrot.lane.b32.xlu0 %v2730, 113
    %v3168 = vpop.permute.xlu0 %3167
    %3169 = vrot.lane.b32.xlu0 %v2734, 113
    %v3170 = vpop.permute.xlu0 %3169
    %3171 = vrot.lane.b32.xlu0 %v2738, 113
    %v3172 = vpop.permute.xlu0 %3171
    %3173 = vrot.lane.b32.xlu0 %v2727, 113
    %v3174 = vpop.permute.xlu0 %3173
    %3175 = vrot.lane.b32.xlu0 %v2731, 113
    %v3176 = vpop.permute.xlu0 %3175
    %3177 = vrot.lane.b32.xlu0 %v2735, 113
    %v3178 = vpop.permute.xlu0 %3177
    %3179 = vrot.lane.b32.xlu0 %v2739, 113
    %v3180 = vpop.permute.xlu0 %3179
    %3181 = vrot.lane.b32.xlu0 %v2728, 113
    %v3182 = vpop.permute.xlu0 %3181
    %3183 = vrot.lane.b32.xlu0 %v2732, 113
    %v3184 = vpop.permute.xlu0 %3183
    %3185 = vrot.lane.b32.xlu0 %v2736, 113
    %v3186 = vpop.permute.xlu0 %3185
    %3187 = vrot.lane.b32.xlu0 %v2740, 113
    %v3188 = vpop.permute.xlu0 %3187
    %v3189 = vsel %vm680, %v3174, %v3182
    %v3190 = vsel %vm680, %v3176, %v3184
    %v3191 = vsel %vm680, %v3178, %v3186
    %v3192 = vsel %vm680, %v3180, %v3188
    %v3193 = vsel %vm680, %v3166, %v3174
    %v3194 = vsel %vm680, %v3168, %v3176
    %v3195 = vsel %vm680, %v3170, %v3178
    %v3196 = vsel %vm680, %v3172, %v3180
    %v3197 = vsel %vm680, %v3158, %v3166
    %v3198 = vsel %vm680, %v3160, %v3168
    %v3199 = vsel %vm680, %v3162, %v3170
    %v3200 = vsel %vm680, %v3164, %v3172
    %v3201 = vsel %vm680, %v3182, %v3158
    %v3202 = vsel %vm680, %v3184, %v3160
    %v3203 = vsel %vm680, %v3186, %v3162
    %v3204 = vsel %vm680, %v3188, %v3164
    %v3205 = vmul.f32 %v3197, %v701
    %v3206 = vmul.f32 %v3193, %v705
    %v3207 = vmul.f32 %v3189, %v709
    %v3208 = vmul.f32 %v3201, %v713
    %v3209 = vmul.f32 %v3198, %v701
    %v3210 = vmul.f32 %v3194, %v705
    %v3211 = vmul.f32 %v3190, %v709
    %v3212 = vmul.f32 %v3202, %v713
    %v3213 = vmul.f32 %v3199, %v701
    %v3214 = vmul.f32 %v3195, %v705
    %v3215 = vmul.f32 %v3191, %v709
    %v3216 = vmul.f32 %v3203, %v713
    %v3217 = vmul.f32 %v3200, %v701
    %v3218 = vmul.f32 %v3196, %v705
    %v3219 = vmul.f32 %v3192, %v709
    %v3220 = vmul.f32 %v3204, %v713
    %3221 = vst [vmem:[#allocation2 + $0x300] sm:$0xff] %v3205
    %3222 = vst [vmem:[#allocation2 + $0x308] sm:$0xff] %v3206
    %3223 = vst [vmem:[#allocation2 + $0x310] sm:$0xff] %v3207
    %3224 = vst [vmem:[#allocation2 + $0x318] sm:$0xff] %v3208
    %3225 = vst [vmem:[#allocation2 + $0x320] sm:$0xff] %v3209
    %3226 = vst [vmem:[#allocation2 + $0x328] sm:$0xff] %v3210
    %3227 = vst [vmem:[#allocation2 + $0x330] sm:$0xff] %v3211
    %3228 = vst [vmem:[#allocation2 + $0x338] sm:$0xff] %v3212
    %3229 = vst [vmem:[#allocation2 + $0x340] sm:$0xff] %v3213
    %3230 = vst [vmem:[#allocation2 + $0x348] sm:$0xff] %v3214
    %3231 = vst [vmem:[#allocation2 + $0x350] sm:$0xff] %v3215
    %3232 = vst [vmem:[#allocation2 + $0x358] sm:$0xff] %v3216
    %3233 = vst [vmem:[#allocation2 + $0x360] sm:$0xff] %v3217
    %3234 = vst [vmem:[#allocation2 + $0x368] sm:$0xff] %v3218
    %3235 = vst [vmem:[#allocation2 + $0x370] sm:$0xff] %v3219
    %3236 = vst [vmem:[#allocation2 + $0x378] sm:$0xff] %v3220
    %3237 = vrot.lane.b32.xlu0 %v2725, 112
    %v3238 = vpop.permute.xlu0 %3237
    %3239 = vrot.lane.b32.xlu0 %v2729, 112
    %v3240 = vpop.permute.xlu0 %3239
    %3241 = vrot.lane.b32.xlu0 %v2733, 112
    %v3242 = vpop.permute.xlu0 %3241
    %3243 = vrot.lane.b32.xlu0 %v2737, 112
    %v3244 = vpop.permute.xlu0 %3243
    %3245 = vrot.lane.b32.xlu0 %v2726, 112
    %v3246 = vpop.permute.xlu0 %3245
    %3247 = vrot.lane.b32.xlu0 %v2730, 112
    %v3248 = vpop.permute.xlu0 %3247
    %3249 = vrot.lane.b32.xlu0 %v2734, 112
    %v3250 = vpop.permute.xlu0 %3249
    %3251 = vrot.lane.b32.xlu0 %v2738, 112
    %v3252 = vpop.permute.xlu0 %3251
    %3253 = vrot.lane.b32.xlu0 %v2727, 112
    %v3254 = vpop.permute.xlu0 %3253
    %3255 = vrot.lane.b32.xlu0 %v2731, 112
    %v3256 = vpop.permute.xlu0 %3255
    %3257 = vrot.lane.b32.xlu0 %v2735, 112
    %v3258 = vpop.permute.xlu0 %3257
    %3259 = vrot.lane.b32.xlu0 %v2739, 112
    %v3260 = vpop.permute.xlu0 %3259
    %3261 = vrot.lane.b32.xlu0 %v2728, 112
    %v3262 = vpop.permute.xlu0 %3261
    %3263 = vrot.lane.b32.xlu0 %v2732, 112
    %v3264 = vpop.permute.xlu0 %3263
    %3265 = vrot.lane.b32.xlu0 %v2736, 112
    %v3266 = vpop.permute.xlu0 %3265
    %3267 = vrot.lane.b32.xlu0 %v2740, 112
    %v3268 = vpop.permute.xlu0 %3267
    %v3269 = vsel %vm782, %v3254, %v3262
    %v3270 = vsel %vm782, %v3256, %v3264
    %v3271 = vsel %vm782, %v3258, %v3266
    %v3272 = vsel %vm782, %v3260, %v3268
    %v3273 = vsel %vm782, %v3246, %v3254
    %v3274 = vsel %vm782, %v3248, %v3256
    %v3275 = vsel %vm782, %v3250, %v3258
    %v3276 = vsel %vm782, %v3252, %v3260
    %v3277 = vsel %vm782, %v3238, %v3246
    %v3278 = vsel %vm782, %v3240, %v3248
    %v3279 = vsel %vm782, %v3242, %v3250
    %v3280 = vsel %vm782, %v3244, %v3252
    %v3281 = vsel %vm782, %v3262, %v3238
    %v3282 = vsel %vm782, %v3264, %v3240
    %v3283 = vsel %vm782, %v3266, %v3242
    %v3284 = vsel %vm782, %v3268, %v3244
    %v3285 = vmul.f32 %v3277, %v803
    %v3286 = vmul.f32 %v3273, %v807
    %v3287 = vmul.f32 %v3269, %v811
    %v3288 = vmul.f32 %v3281, %v815
    %v3289 = vmul.f32 %v3278, %v803
    %v3290 = vmul.f32 %v3274, %v807
    %v3291 = vmul.f32 %v3270, %v811
    %v3292 = vmul.f32 %v3282, %v815
    %v3293 = vmul.f32 %v3279, %v803
    %v3294 = vmul.f32 %v3275, %v807
    %v3295 = vmul.f32 %v3271, %v811
    %v3296 = vmul.f32 %v3283, %v815
    %v3297 = vmul.f32 %v3280, %v803
    %v3298 = vmul.f32 %v3276, %v807
    %v3299 = vmul.f32 %v3272, %v811
    %v3300 = vmul.f32 %v3284, %v815
    %3301 = vst [vmem:[#allocation2 + $0x380] sm:$0xff] %v3285
    %3302 = vst [vmem:[#allocation2 + $0x388] sm:$0xff] %v3286
    %3303 = vst [vmem:[#allocation2 + $0x390] sm:$0xff] %v3287
    %3304 = vst [vmem:[#allocation2 + $0x398] sm:$0xff] %v3288
    %3305 = vst [vmem:[#allocation2 + $0x3a0] sm:$0xff] %v3289
    %3306 = vst [vmem:[#allocation2 + $0x3a8] sm:$0xff] %v3290
    %3307 = vst [vmem:[#allocation2 + $0x3b0] sm:$0xff] %v3291
    %3308 = vst [vmem:[#allocation2 + $0x3b8] sm:$0xff] %v3292
    %3309 = vst [vmem:[#allocation2 + $0x3c0] sm:$0xff] %v3293
    %3310 = vst [vmem:[#allocation2 + $0x3c8] sm:$0xff] %v3294
    %3311 = vst [vmem:[#allocation2 + $0x3d0] sm:$0xff] %v3295
    %3312 = vst [vmem:[#allocation2 + $0x3d8] sm:$0xff] %v3296
    %3313 = vst [vmem:[#allocation2 + $0x3e0] sm:$0xff] %v3297
    %3314 = vst [vmem:[#allocation2 + $0x3e8] sm:$0xff] %v3298
    %3315 = vst [vmem:[#allocation2 + $0x3f0] sm:$0xff] %v3299
    %3316 = vst [vmem:[#allocation2 + $0x3f8] sm:$0xff] %v3300
    %3317 = vrot.lane.b32.xlu0 %v2725, 111
    %v3318 = vpop.permute.xlu0 %3317
    %3319 = vrot.lane.b32.xlu0 %v2729, 111
    %v3320 = vpop.permute.xlu0 %3319
    %3321 = vrot.lane.b32.xlu0 %v2733, 111
    %v3322 = vpop.permute.xlu0 %3321
    %3323 = vrot.lane.b32.xlu0 %v2737, 111
    %v3324 = vpop.permute.xlu0 %3323
    %3325 = vrot.lane.b32.xlu0 %v2726, 111
    %v3326 = vpop.permute.xlu0 %3325
    %3327 = vrot.lane.b32.xlu0 %v2730, 111
    %v3328 = vpop.permute.xlu0 %3327
    %3329 = vrot.lane.b32.xlu0 %v2734, 111
    %v3330 = vpop.permute.xlu0 %3329
    %3331 = vrot.lane.b32.xlu0 %v2738, 111
    %v3332 = vpop.permute.xlu0 %3331
    %3333 = vrot.lane.b32.xlu0 %v2727, 111
    %v3334 = vpop.permute.xlu0 %3333
    %3335 = vrot.lane.b32.xlu0 %v2731, 111
    %v3336 = vpop.permute.xlu0 %3335
    %3337 = vrot.lane.b32.xlu0 %v2735, 111
    %v3338 = vpop.permute.xlu0 %3337
    %3339 = vrot.lane.b32.xlu0 %v2739, 111
    %v3340 = vpop.permute.xlu0 %3339
    %3341 = vrot.lane.b32.xlu0 %v2728, 111
    %v3342 = vpop.permute.xlu0 %3341
    %3343 = vrot.lane.b32.xlu0 %v2732, 111
    %v3344 = vpop.permute.xlu0 %3343
    %3345 = vrot.lane.b32.xlu0 %v2736, 111
    %v3346 = vpop.permute.xlu0 %3345
    %3347 = vrot.lane.b32.xlu0 %v2740, 111
    %v3348 = vpop.permute.xlu0 %3347
    %v3349 = vsel %vm884, %v3334, %v3342
    %v3350 = vsel %vm884, %v3336, %v3344
    %v3351 = vsel %vm884, %v3338, %v3346
    %v3352 = vsel %vm884, %v3340, %v3348
    %v3353 = vsel %vm884, %v3326, %v3334
    %v3354 = vsel %vm884, %v3328, %v3336
    %v3355 = vsel %vm884, %v3330, %v3338
    %v3356 = vsel %vm884, %v3332, %v3340
    %v3357 = vsel %vm884, %v3318, %v3326
    %v3358 = vsel %vm884, %v3320, %v3328
    %v3359 = vsel %vm884, %v3322, %v3330
    %v3360 = vsel %vm884, %v3324, %v3332
    %v3361 = vsel %vm884, %v3342, %v3318
    %v3362 = vsel %vm884, %v3344, %v3320
    %v3363 = vsel %vm884, %v3346, %v3322
    %v3364 = vsel %vm884, %v3348, %v3324
    %v3365 = vmul.f32 %v3357, %v905
    %v3366 = vmul.f32 %v3353, %v909
    %v3367 = vmul.f32 %v3349, %v913
    %v3368 = vmul.f32 %v3361, %v917
    %v3369 = vmul.f32 %v3358, %v905
    %v3370 = vmul.f32 %v3354, %v909
    %v3371 = vmul.f32 %v3350, %v913
    %v3372 = vmul.f32 %v3362, %v917
    %v3373 = vmul.f32 %v3359, %v905
    %v3374 = vmul.f32 %v3355, %v909
    %v3375 = vmul.f32 %v3351, %v913
    %v3376 = vmul.f32 %v3363, %v917
    %v3377 = vmul.f32 %v3360, %v905
    %v3378 = vmul.f32 %v3356, %v909
    %v3379 = vmul.f32 %v3352, %v913
    %v3380 = vmul.f32 %v3364, %v917
    %3381 = vst [vmem:[#allocation2 + $0x400] sm:$0xff] %v3365
    %3382 = vst [vmem:[#allocation2 + $0x408] sm:$0xff] %v3366
    %3383 = vst [vmem:[#allocation2 + $0x410] sm:$0xff] %v3367
    %3384 = vst [vmem:[#allocation2 + $0x418] sm:$0xff] %v3368
    %3385 = vst [vmem:[#allocation2 + $0x420] sm:$0xff] %v3369
    %3386 = vst [vmem:[#allocation2 + $0x428] sm:$0xff] %v3370
    %3387 = vst [vmem:[#allocation2 + $0x430] sm:$0xff] %v3371
    %3388 = vst [vmem:[#allocation2 + $0x438] sm:$0xff] %v3372
    %3389 = vst [vmem:[#allocation2 + $0x440] sm:$0xff] %v3373
    %3390 = vst [vmem:[#allocation2 + $0x448] sm:$0xff] %v3374
    %3391 = vst [vmem:[#allocation2 + $0x450] sm:$0xff] %v3375
    %3392 = vst [vmem:[#allocation2 + $0x458] sm:$0xff] %v3376
    %3393 = vst [vmem:[#allocation2 + $0x460] sm:$0xff] %v3377
    %3394 = vst [vmem:[#allocation2 + $0x468] sm:$0xff] %v3378
    %3395 = vst [vmem:[#allocation2 + $0x470] sm:$0xff] %v3379
    %3396 = vst [vmem:[#allocation2 + $0x478] sm:$0xff] %v3380
    %s3397 = scalar_lea.vmem [#allocation6], 192
    %v3398 = vld [vmem:[%s3397] sm:$0xff]
    %v3399 = vld [vmem:[%s3397 + $0x8] sm:$0xff]
    %v3400 = vld [vmem:[%s3397 + $0x10] sm:$0xff]
    %v3401 = vld [vmem:[%s3397 + $0x18] sm:$0xff]
    %v3402 = vld [vmem:[%s3397 + $0x20] sm:$0xff]
    %v3403 = vld [vmem:[%s3397 + $0x28] sm:$0xff]
    %v3404 = vld [vmem:[%s3397 + $0x30] sm:$0xff]
    %v3405 = vld [vmem:[%s3397 + $0x38] sm:$0xff]
    %v3406 = vld [vmem:[%s3397 + $0x40] sm:$0xff]
    %v3407 = vld [vmem:[%s3397 + $0x48] sm:$0xff]
    %v3408 = vld [vmem:[%s3397 + $0x50] sm:$0xff]
    %v3409 = vld [vmem:[%s3397 + $0x58] sm:$0xff]
    %v3410 = vld [vmem:[#allocation2] sm:$0xff]
    %v3411 = vld [vmem:[#allocation2 + $0x8] sm:$0xff]
    %v3412 = vld [vmem:[#allocation2 + $0x10] sm:$0xff]
    %v3413 = vld [vmem:[#allocation2 + $0x18] sm:$0xff]
    %v3414 = vld [vmem:[#allocation2 + $0x20] sm:$0xff]
    %v3415 = vld [vmem:[#allocation2 + $0x28] sm:$0xff]
    %v3416 = vld [vmem:[#allocation2 + $0x30] sm:$0xff]
    %v3417 = vld [vmem:[#allocation2 + $0x38] sm:$0xff]
    %v3418 = vld [vmem:[#allocation2 + $0x40] sm:$0xff]
    %v3419 = vld [vmem:[#allocation2 + $0x48] sm:$0xff]
    %v3420 = vld [vmem:[#allocation2 + $0x50] sm:$0xff]
    %v3421 = vld [vmem:[#allocation2 + $0x58] sm:$0xff]
    %v3422 = vld [vmem:[#allocation2 + $0x60] sm:$0xff]
    %v3423 = vld [vmem:[#allocation2 + $0x68] sm:$0xff]
    %v3424 = vld [vmem:[#allocation2 + $0x70] sm:$0xff]
    %v3425 = vld [vmem:[#allocation2 + $0x78] sm:$0xff]
    %v3426 = vld [vmem:[#allocation2 + $0x80] sm:$0xff]
    %v3427 = vld [vmem:[#allocation2 + $0x88] sm:$0xff]
    %v3428 = vld [vmem:[#allocation2 + $0x90] sm:$0xff]
    %v3429 = vld [vmem:[#allocation2 + $0x98] sm:$0xff]
    %v3430 = vld [vmem:[#allocation2 + $0xa0] sm:$0xff]
    %v3431 = vld [vmem:[#allocation2 + $0xa8] sm:$0xff]
    %v3432 = vld [vmem:[#allocation2 + $0xb0] sm:$0xff]
    %v3433 = vld [vmem:[#allocation2 + $0xb8] sm:$0xff]
    %v3434 = vld [vmem:[#allocation2 + $0xc0] sm:$0xff]
    %v3435 = vld [vmem:[#allocation2 + $0xc8] sm:$0xff]
    %v3436 = vld [vmem:[#allocation2 + $0xd0] sm:$0xff]
    %v3437 = vld [vmem:[#allocation2 + $0xd8] sm:$0xff]
    %v3438 = vld [vmem:[#allocation2 + $0xe0] sm:$0xff]
    %v3439 = vld [vmem:[#allocation2 + $0xe8] sm:$0xff]
    %v3440 = vld [vmem:[#allocation2 + $0xf0] sm:$0xff]
    %v3441 = vld [vmem:[#allocation2 + $0xf8] sm:$0xff]
    %v3442 = vld [vmem:[#allocation2 + $0x100] sm:$0xff]
    %v3443 = vld [vmem:[#allocation2 + $0x108] sm:$0xff]
    %v3444 = vld [vmem:[#allocation2 + $0x110] sm:$0xff]
    %v3445 = vld [vmem:[#allocation2 + $0x118] sm:$0xff]
    %v3446 = vld [vmem:[#allocation2 + $0x120] sm:$0xff]
    %v3447 = vld [vmem:[#allocation2 + $0x128] sm:$0xff]
    %v3448 = vld [vmem:[#allocation2 + $0x130] sm:$0xff]
    %v3449 = vld [vmem:[#allocation2 + $0x138] sm:$0xff]
    %v3450 = vld [vmem:[#allocation2 + $0x140] sm:$0xff]
    %v3451 = vld [vmem:[#allocation2 + $0x148] sm:$0xff]
    %v3452 = vld [vmem:[#allocation2 + $0x150] sm:$0xff]
    %v3453 = vld [vmem:[#allocation2 + $0x158] sm:$0xff]
    %v3454 = vld [vmem:[#allocation2 + $0x160] sm:$0xff]
    %v3455 = vld [vmem:[#allocation2 + $0x168] sm:$0xff]
    %v3456 = vld [vmem:[#allocation2 + $0x170] sm:$0xff]
    %v3457 = vld [vmem:[#allocation2 + $0x178] sm:$0xff]
    %v3458 = vld [vmem:[#allocation2 + $0x180] sm:$0xff]
    %v3459 = vld [vmem:[#allocation2 + $0x188] sm:$0xff]
    %v3460 = vld [vmem:[#allocation2 + $0x190] sm:$0xff]
    %v3461 = vld [vmem:[#allocation2 + $0x198] sm:$0xff]
    %v3462 = vld [vmem:[#allocation2 + $0x1a0] sm:$0xff]
    %v3463 = vld [vmem:[#allocation2 + $0x1a8] sm:$0xff]
    %v3464 = vld [vmem:[#allocation2 + $0x1b0] sm:$0xff]
    %v3465 = vld [vmem:[#allocation2 + $0x1b8] sm:$0xff]
    %v3466 = vld [vmem:[#allocation2 + $0x1c0] sm:$0xff]
    %v3467 = vld [vmem:[#allocation2 + $0x1c8] sm:$0xff]
    %v3468 = vld [vmem:[#allocation2 + $0x1d0] sm:$0xff]
    %v3469 = vld [vmem:[#allocation2 + $0x1d8] sm:$0xff]
    %v3470 = vld [vmem:[#allocation2 + $0x1e0] sm:$0xff]
    %v3471 = vld [vmem:[#allocation2 + $0x1e8] sm:$0xff]
    %v3472 = vld [vmem:[#allocation2 + $0x1f0] sm:$0xff]
    %v3473 = vld [vmem:[#allocation2 + $0x1f8] sm:$0xff]
    %v3474 = vld [vmem:[#allocation2 + $0x200] sm:$0xff]
    %v3475 = vld [vmem:[#allocation2 + $0x208] sm:$0xff]
    %v3476 = vld [vmem:[#allocation2 + $0x210] sm:$0xff]
    %v3477 = vld [vmem:[#allocation2 + $0x218] sm:$0xff]
    %v3478 = vld [vmem:[#allocation2 + $0x220] sm:$0xff]
    %v3479 = vld [vmem:[#allocation2 + $0x228] sm:$0xff]
    %v3480 = vld [vmem:[#allocation2 + $0x230] sm:$0xff]
    %v3481 = vld [vmem:[#allocation2 + $0x238] sm:$0xff]
    %v3482 = vld [vmem:[#allocation2 + $0x240] sm:$0xff]
    %v3483 = vld [vmem:[#allocation2 + $0x248] sm:$0xff]
    %v3484 = vld [vmem:[#allocation2 + $0x250] sm:$0xff]
    %v3485 = vld [vmem:[#allocation2 + $0x258] sm:$0xff]
    %v3486 = vld [vmem:[#allocation2 + $0x260] sm:$0xff]
    %v3487 = vld [vmem:[#allocation2 + $0x268] sm:$0xff]
    %v3488 = vld [vmem:[#allocation2 + $0x270] sm:$0xff]
    %v3489 = vld [vmem:[#allocation2 + $0x278] sm:$0xff]
    %v3490 = vld [vmem:[#allocation2 + $0x280] sm:$0xff]
    %v3491 = vld [vmem:[#allocation2 + $0x288] sm:$0xff]
    %v3492 = vld [vmem:[#allocation2 + $0x290] sm:$0xff]
    %v3493 = vld [vmem:[#allocation2 + $0x298] sm:$0xff]
    %v3494 = vld [vmem:[#allocation2 + $0x2a0] sm:$0xff]
    %v3495 = vld [vmem:[#allocation2 + $0x2a8] sm:$0xff]
    %v3496 = vld [vmem:[#allocation2 + $0x2b0] sm:$0xff]
    %v3497 = vld [vmem:[#allocation2 + $0x2b8] sm:$0xff]
    %v3498 = vld [vmem:[#allocation2 + $0x2c0] sm:$0xff]
    %v3499 = vld [vmem:[#allocation2 + $0x2c8] sm:$0xff]
    %v3500 = vld [vmem:[#allocation2 + $0x2d0] sm:$0xff]
    %v3501 = vld [vmem:[#allocation2 + $0x2d8] sm:$0xff]
    %v3502 = vld [vmem:[#allocation2 + $0x2e0] sm:$0xff]
    %v3503 = vld [vmem:[#allocation2 + $0x2e8] sm:$0xff]
    %v3504 = vld [vmem:[#allocation2 + $0x2f0] sm:$0xff]
    %v3505 = vld [vmem:[#allocation2 + $0x2f8] sm:$0xff]
    %v3506 = vld [vmem:[#allocation2 + $0x300] sm:$0xff]
    %v3507 = vld [vmem:[#allocation2 + $0x308] sm:$0xff]
    %v3508 = vld [vmem:[#allocation2 + $0x310] sm:$0xff]
    %v3509 = vld [vmem:[#allocation2 + $0x318] sm:$0xff]
    %v3510 = vld [vmem:[#allocation2 + $0x320] sm:$0xff]
    %v3511 = vld [vmem:[#allocation2 + $0x328] sm:$0xff]
    %v3512 = vld [vmem:[#allocation2 + $0x330] sm:$0xff]
    %v3513 = vld [vmem:[#allocation2 + $0x338] sm:$0xff]
    %v3514 = vld [vmem:[#allocation2 + $0x340] sm:$0xff]
    %v3515 = vld [vmem:[#allocation2 + $0x348] sm:$0xff]
    %v3516 = vld [vmem:[#allocation2 + $0x350] sm:$0xff]
    %v3517 = vld [vmem:[#allocation2 + $0x358] sm:$0xff]
    %v3518 = vld [vmem:[#allocation2 + $0x360] sm:$0xff]
    %v3519 = vld [vmem:[#allocation2 + $0x368] sm:$0xff]
    %v3520 = vld [vmem:[#allocation2 + $0x370] sm:$0xff]
    %v3521 = vld [vmem:[#allocation2 + $0x378] sm:$0xff]
    %v3522 = vld [vmem:[#allocation2 + $0x380] sm:$0xff]
    %v3523 = vld [vmem:[#allocation2 + $0x388] sm:$0xff]
    %v3524 = vld [vmem:[#allocation2 + $0x390] sm:$0xff]
    %v3525 = vld [vmem:[#allocation2 + $0x398] sm:$0xff]
    %v3526 = vld [vmem:[#allocation2 + $0x3a0] sm:$0xff]
    %v3527 = vld [vmem:[#allocation2 + $0x3a8] sm:$0xff]
    %v3528 = vld [vmem:[#allocation2 + $0x3b0] sm:$0xff]
    %v3529 = vld [vmem:[#allocation2 + $0x3b8] sm:$0xff]
    %v3530 = vld [vmem:[#allocation2 + $0x3c0] sm:$0xff]
    %v3531 = vld [vmem:[#allocation2 + $0x3c8] sm:$0xff]
    %v3532 = vld [vmem:[#allocation2 + $0x3d0] sm:$0xff]
    %v3533 = vld [vmem:[#allocation2 + $0x3d8] sm:$0xff]
    %v3534 = vld [vmem:[#allocation2 + $0x3e0] sm:$0xff]
    %v3535 = vld [vmem:[#allocation2 + $0x3e8] sm:$0xff]
    %v3536 = vld [vmem:[#allocation2 + $0x3f0] sm:$0xff]
    %v3537 = vld [vmem:[#allocation2 + $0x3f8] sm:$0xff]
    %v3538 = vld [vmem:[#allocation2 + $0x400] sm:$0xff]
    %v3539 = vld [vmem:[#allocation2 + $0x408] sm:$0xff]
    %v3540 = vld [vmem:[#allocation2 + $0x410] sm:$0xff]
    %v3541 = vld [vmem:[#allocation2 + $0x418] sm:$0xff]
    %v3542 = vld [vmem:[#allocation2 + $0x420] sm:$0xff]
    %v3543 = vld [vmem:[#allocation2 + $0x428] sm:$0xff]
    %v3544 = vld [vmem:[#allocation2 + $0x430] sm:$0xff]
    %v3545 = vld [vmem:[#allocation2 + $0x438] sm:$0xff]
    %v3546 = vld [vmem:[#allocation2 + $0x440] sm:$0xff]
    %v3547 = vld [vmem:[#allocation2 + $0x448] sm:$0xff]
    %v3548 = vld [vmem:[#allocation2 + $0x450] sm:$0xff]
    %v3549 = vld [vmem:[#allocation2 + $0x458] sm:$0xff]
    %v3550 = vld [vmem:[#allocation2 + $0x460] sm:$0xff]
    %v3551 = vld [vmem:[#allocation2 + $0x468] sm:$0xff]
    %v3552 = vld [vmem:[#allocation2 + $0x470] sm:$0xff]
    %v3553 = vld [vmem:[#allocation2 + $0x478] sm:$0xff]
    %s3554 = scalar_lea.vmem [#allocation8], 64
    %v3555 = vld [vmem:[%s3554] sm:$0xff]
    %v3556 = vld [vmem:[%s3554 + $0x8] sm:$0xff]
    %v3557 = vld [vmem:[%s3554 + $0x10] sm:$0xff]
    %v3558 = vld [vmem:[%s3554 + $0x18] sm:$0xff]
    %3560 = vset.pattern.permute.xlu0 0
    %3561 = vperm.xlu0 %3560, %v3555
    %v3562 = vpop.permute.xlu0 %3561
    %3565 = vset.pattern.permute.xlu0 0
    %3566 = vperm.xlu0 %3565, %v3556
    %v3567 = vpop.permute.xlu0 %3566
    %3570 = vset.pattern.permute.xlu0 0
    %3571 = vperm.xlu0 %3570, %v3557
    %v3572 = vpop.permute.xlu0 %3571
    %3575 = vset.pattern.permute.xlu0 0
    %3576 = vperm.xlu0 %3575, %v3558
    %v3577 = vpop.permute.xlu0 %3576
    %v3580 = vsel %vm1134, %v3400, 0
    %v3583 = vsel %vm1134, %v3403, 0
    %v3586 = vsel %vm1134, %v3406, 0
    %v3589 = vsel %vm1134, %v3409, 0
    %3591 = vmatprep.subr.mxu0 %v3411
    %3592 = vmatpush1.msra.mxu0 %v3410
    %3593 = vmatprep.subr.mxu0 %v3415
    %3594 = vmatpush1.msra.mxu0 %v3414
    %3595 = vmatprep.subr.mxu0 %v3419
    %3596 = vmatpush1.msra.mxu0 %v3418
    %3597 = vmatprep.subr.mxu0 %v3423
    %3598 = vmatpush1.msra.mxu0 %v3422
    %3599 = vmatprep.subr.mxu0 %v3427
    %3600 = vmatpush1.msra.mxu0 %v3426
    %3601 = vmatprep.subr.mxu0 %v3431
    %3602 = vmatpush1.msra.mxu0 %v3430
    %3603 = vmatprep.subr.mxu0 %v3435
    %3604 = vmatpush1.msra.mxu0 %v3434
    %3605 = vmatprep.subr.mxu0 %v3439
    %3606 = vmatpush1.msra.mxu0 %v3438
    %3607 = vmatprep.subr.mxu0 %v3443
    %3608 = vmatpush1.msra.mxu0 %v3442
    %3609 = vmatprep.subr.mxu0 %v3447
    %3610 = vmatpush1.msra.mxu0 %v3446
    %3611 = vmatprep.subr.mxu0 %v3451
    %3612 = vmatpush1.msra.mxu0 %v3450
    %3613 = vmatprep.subr.mxu0 %v3455
    %3614 = vmatpush1.msra.mxu0 %v3454
    %3615 = vmatprep.subr.mxu0 %v3459
    %3616 = vmatpush1.msra.mxu0 %v3458
    %3617 = vmatprep.subr.mxu0 %v3463
    %3618 = vmatpush1.msra.mxu0 %v3462
    %3619 = vmatprep.subr.mxu0 %v3467
    %3620 = vmatpush1.msra.mxu0 %v3466
    %3621 = vmatprep.subr.mxu0 %v3471
    %3622 = vmatpush1.msra.mxu0 %v3470
    %3623 = vmatprep.subr.mxu0 %v3475
    %3624 = vmatpush1.msra.mxu0 %v3474
    %3625 = vmatprep.subr.mxu0 %v3479
    %3626 = vmatpush1.msra.mxu0 %v3478
    %3627 = vmatprep.subr.mxu0 %v3483
    %3628 = vmatpush1.msra.mxu0 %v3482
    %3629 = vmatprep.subr.mxu0 %v3487
    %3630 = vmatpush1.msra.mxu0 %v3486
    %3631 = vmatprep.subr.mxu0 %v3491
    %3632 = vmatpush1.msra.mxu0 %v3490
    %3633 = vmatprep.subr.mxu0 %v3495
    %3634 = vmatpush1.msra.mxu0 %v3494
    %3635 = vmatprep.subr.mxu0 %v3499
    %3636 = vmatpush1.msra.mxu0 %v3498
    %3637 = vmatprep.subr.mxu0 %v3503
    %3638 = vmatpush1.msra.mxu0 %v3502
    %3639 = vmatprep.subr.mxu0 %v3507
    %3640 = vmatpush1.msra.mxu0 %v3506
    %3641 = vmatprep.subr.mxu0 %v3511
    %3642 = vmatpush1.msra.mxu0 %v3510
    %3643 = vmatprep.subr.mxu0 %v3515
    %3644 = vmatpush1.msra.mxu0 %v3514
    %3645 = vmatprep.subr.mxu0 %v3519
    %3646 = vmatpush1.msra.mxu0 %v3518
    %3647 = vmatprep.subr.mxu0 %v3523
    %3648 = vmatpush1.msra.mxu0 %v3522
    %3649 = vmatprep.subr.mxu0 %v3527
    %3650 = vmatpush1.msra.mxu0 %v3526
    %3651 = vmatprep.subr.mxu0 %v3531
    %3652 = vmatpush1.msra.mxu0 %v3530
    %3653 = vmatprep.subr.mxu0 %v3535
    %3654 = vmatpush1.msra.mxu0 %v3534
    %3655 = vmatprep.mubr.f32.mxu0 %v3399
    %3656 = vmatmul.mubr.f32.gmra.mrb[0].mxu0 %v3398
    %v3657 = vpop.f32.mrb[0].mxu0
    %v3658 = vadd.f32 %v3562, %v3657
    %v3659 = vpop.f32.mrb[0].mxu0
    %v3660 = vadd.f32 %v3562, %v3659
    %3661 = vmatprep.mubr.f32.mxu0 %v3402
    %3662 = vmatmul.mubr.f32.gmra.mrb[0].mxu0 %v3401
    %v3663 = vpop.f32.mrb[0].mxu0
    %v3664 = vadd.f32 %v3567, %v3663
    %v3665 = vpop.f32.mrb[0].mxu0
    %v3666 = vadd.f32 %v3567, %v3665
    %3667 = vmatprep.mubr.f32.mxu0 %v3405
    %3668 = vmatmul.mubr.f32.gmra.mrb[0].mxu0 %v3404
    %v3669 = vpop.f32.mrb[0].mxu0
    %v3670 = vadd.f32 %v3572, %v3669
    %v3671 = vpop.f32.mrb[0].mxu0
    %v3672 = vadd.f32 %v3572, %v3671
    %3673 = vmatprep.mubr.f32.mxu0 %v3408
    %3674 = vmatmul.mubr.f32.gmra.mrb[0].mxu0 %v3407
    %v3675 = vpop.f32.mrb[0].mxu0
    %v3676 = vadd.f32 %v3577, %v3675
    %v3677 = vpop.f32.mrb[0].mxu0
    %v3678 = vadd.f32 %v3577, %v3677
    %3679 = vdwg.mxu0
    %3680 = vmatprep.subr.mxu0 %v3539
    %3681 = vmatpush1.msra.mxu0 %v3538
    %3682 = vmatprep.subr.mxu0 %v3543
    %3683 = vmatpush1.msra.mxu0 %v3542
    %3684 = vmatprep.subr.mxu0 %v3547
    %3685 = vmatpush1.msra.mxu0 %v3546
    %3686 = vmatprep.subr.mxu0 %v3551
    %3687 = vmatpush1.msra.mxu0 %v3550
    %3688 = vmatprep.subr.mxu0 0.0
    %3689 = vmatpush1.msra.mxu0 0.0
    %3690 = vmatprep.subr.mxu0 0.0
    %3691 = vmatpush1.msra.mxu0 0.0
    %3692 = vmatprep.subr.mxu0 0.0
    %3693 = vmatpush1.msra.mxu0 0.0
    %3694 = vmatprep.subr.mxu0 0.0
    %3695 = vmatpush1.msra.mxu0 0.0
    %3696 = vmatprep.subr.mxu0 0.0
    %3697 = vmatpush1.msra.mxu0 0.0
    %3698 = vmatprep.subr.mxu0 0.0
    %3699 = vmatpush1.msra.mxu0 0.0
    %3700 = vmatprep.subr.mxu0 0.0
    %3701 = vmatpush1.msra.mxu0 0.0
    %3702 = vmatprep.subr.mxu0 0.0
    %3703 = vmatpush1.msra.mxu0 0.0
    %3704 = vmatprep.subr.mxu0 0.0
    %3705 = vmatpush1.msra.mxu0 0.0
    %3706 = vmatprep.subr.mxu0 0.0
    %3707 = vmatpush1.msra.mxu0 0.0
    %3708 = vmatprep.subr.mxu0 0.0
    %3709 = vmatpush1.msra.mxu0 0.0
    %3710 = vmatprep.subr.mxu0 0.0
    %3711 = vmatpush1.msra.mxu0 0.0
    %3712 = vmatprep.subr.mxu0 0.0
    %3713 = vmatpush1.msra.mxu0 0.0
    %3714 = vmatprep.subr.mxu0 0.0
    %3715 = vmatpush1.msra.mxu0 0.0
    %3716 = vmatprep.subr.mxu0 0.0
    %3717 = vmatpush1.msra.mxu0 0.0
    %3718 = vmatprep.subr.mxu0 0.0
    %3719 = vmatpush1.msra.mxu0 0.0
    %3720 = vmatprep.subr.mxu0 0.0
    %3721 = vmatpush1.msra.mxu0 0.0
    %3722 = vmatprep.subr.mxu0 0.0
    %3723 = vmatpush1.msra.mxu0 0.0
    %3724 = vmatprep.subr.mxu0 0.0
    %3725 = vmatpush1.msra.mxu0 0.0
    %3726 = vmatprep.subr.mxu0 0.0
    %3727 = vmatpush1.msra.mxu0 0.0
    %3728 = vmatprep.subr.mxu0 0.0
    %3729 = vmatpush1.msra.mxu0 0.0
    %3730 = vmatprep.subr.mxu0 0.0
    %3731 = vmatpush1.msra.mxu0 0.0
    %3732 = vmatprep.subr.mxu0 0.0
    %3733 = vmatpush1.msra.mxu0 0.0
    %3734 = vmatprep.subr.mxu0 0.0
    %3735 = vmatpush1.msra.mxu0 0.0
    %3736 = vmatprep.subr.mxu0 0.0
    %3737 = vmatpush1.msra.mxu0 0.0
    %3738 = vmatprep.subr.mxu0 0.0
    %3739 = vmatpush1.msra.mxu0 0.0
    %3740 = vmatprep.subr.mxu0 0.0
    %3741 = vmatpush1.msra.mxu0 0.0
    %3742 = vmatprep.subr.mxu0 0.0
    %3743 = vmatpush1.msra.mxu0 0.0
    %3744 = vmatprep.mubr.f32.mxu0 0.0
    %3745 = vmatmul.mubr.f32.gmra.mrb[0].mxu0 %v3580
    %v3746 = vpop.f32.mrb[0].mxu0
    %v3747 = vadd.f32 %v3658, %v3746
    %v3748 = vpop.f32.mrb[0].mxu0
    %v3749 = vadd.f32 %v3660, %v3748
    %3750 = vmatprep.mubr.f32.mxu0 0.0
    %3751 = vmatmul.mubr.f32.gmra.mrb[0].mxu0 %v3583
    %v3752 = vpop.f32.mrb[0].mxu0
    %v3753 = vadd.f32 %v3664, %v3752
    %v3754 = vpop.f32.mrb[0].mxu0
    %v3755 = vadd.f32 %v3666, %v3754
    %3756 = vmatprep.mubr.f32.mxu0 0.0
    %3757 = vmatmul.mubr.f32.gmra.mrb[0].mxu0 %v3586
    %v3758 = vpop.f32.mrb[0].mxu0
    %v3759 = vadd.f32 %v3670, %v3758
    %v3760 = vpop.f32.mrb[0].mxu0
    %v3761 = vadd.f32 %v3672, %v3760
    %3762 = vmatprep.mubr.f32.mxu0 0.0
    %3763 = vmatmul.mubr.f32.gmra.mrb[0].mxu0 %v3589
    %v3764 = vpop.f32.mrb[0].mxu0
    %v3765 = vadd.f32 %v3676, %v3764
    %v3766 = vpop.f32.mrb[0].mxu0
    %v3767 = vadd.f32 %v3678, %v3766
    %3768 = vdwg.mxu0
    %3769 = vmatprep.subr.mxu0 %v3413
    %3770 = vmatpush1.msra.mxu0 %v3412
    %3771 = vmatprep.subr.mxu0 %v3417
    %3772 = vmatpush1.msra.mxu0 %v3416
    %3773 = vmatprep.subr.mxu0 %v3421
    %3774 = vmatpush1.msra.mxu0 %v3420
    %3775 = vmatprep.subr.mxu0 %v3425
    %3776 = vmatpush1.msra.mxu0 %v3424
    %3777 = vmatprep.subr.mxu0 %v3429
    %3778 = vmatpush1.msra.mxu0 %v3428
    %3779 = vmatprep.subr.mxu0 %v3433
    %3780 = vmatpush1.msra.mxu0 %v3432
    %3781 = vmatprep.subr.mxu0 %v3437
    %3782 = vmatpush1.msra.mxu0 %v3436
    %3783 = vmatprep.subr.mxu0 %v3441
    %3784 = vmatpush1.msra.mxu0 %v3440
    %3785 = vmatprep.subr.mxu0 %v3445
    %3786 = vmatpush1.msra.mxu0 %v3444
    %3787 = vmatprep.subr.mxu0 %v3449
    %3788 = vmatpush1.msra.mxu0 %v3448
    %3789 = vmatprep.subr.mxu0 %v3453
    %3790 = vmatpush1.msra.mxu0 %v3452
    %3791 = vmatprep.subr.mxu0 %v3457
    %3792 = vmatpush1.msra.mxu0 %v3456
    %3793 = vmatprep.subr.mxu0 %v3461
    %3794 = vmatpush1.msra.mxu0 %v3460
    %3795 = vmatprep.subr.mxu0 %v3465
    %3796 = vmatpush1.msra.mxu0 %v3464
    %3797 = vmatprep.subr.mxu0 %v3469
    %3798 = vmatpush1.msra.mxu0 %v3468
    %3799 = vmatprep.subr.mxu0 %v3473
    %3800 = vmatpush1.msra.mxu0 %v3472
    %3801 = vmatprep.subr.mxu0 %v3477
    %3802 = vmatpush1.msra.mxu0 %v3476
    %3803 = vmatprep.subr.mxu0 %v3481
    %3804 = vmatpush1.msra.mxu0 %v3480
    %3805 = vmatprep.subr.mxu0 %v3485
    %3806 = vmatpush1.msra.mxu0 %v3484
    %3807 = vmatprep.subr.mxu0 %v3489
    %3808 = vmatpush1.msra.mxu0 %v3488
    %3809 = vmatprep.subr.mxu0 %v3493
    %3810 = vmatpush1.msra.mxu0 %v3492
    %3811 = vmatprep.subr.mxu0 %v3497
    %3812 = vmatpush1.msra.mxu0 %v3496
    %3813 = vmatprep.subr.mxu0 %v3501
    %3814 = vmatpush1.msra.mxu0 %v3500
    %3815 = vmatprep.subr.mxu0 %v3505
    %3816 = vmatpush1.msra.mxu0 %v3504
    %3817 = vmatprep.subr.mxu0 %v3509
    %3818 = vmatpush1.msra.mxu0 %v3508
    %3819 = vmatprep.subr.mxu0 %v3513
    %3820 = vmatpush1.msra.mxu0 %v3512
    %3821 = vmatprep.subr.mxu0 %v3517
    %3822 = vmatpush1.msra.mxu0 %v3516
    %3823 = vmatprep.subr.mxu0 %v3521
    %3824 = vmatpush1.msra.mxu0 %v3520
    %3825 = vmatprep.subr.mxu0 %v3525
    %3826 = vmatpush1.msra.mxu0 %v3524
    %3827 = vmatprep.subr.mxu0 %v3529
    %3828 = vmatpush1.msra.mxu0 %v3528
    %3829 = vmatprep.subr.mxu0 %v3533
    %3830 = vmatpush1.msra.mxu0 %v3532
    %3831 = vmatprep.subr.mxu0 %v3537
    %3832 = vmatpush1.msra.mxu0 %v3536
    %3833 = vmatprep.mubr.f32.mxu0 %v3399
    %3834 = vmatmul.mubr.f32.gmra.mrb[0].mxu0 %v3398
    %v3835 = vpop.f32.mrb[0].mxu0
    %v3836 = vadd.f32 %v3562, %v3835
    %v3837 = vpop.f32.mrb[0].mxu0
    %v3838 = vadd.f32 %v3562, %v3837
    %3839 = vmatprep.mubr.f32.mxu0 %v3402
    %3840 = vmatmul.mubr.f32.gmra.mrb[0].mxu0 %v3401
    %v3841 = vpop.f32.mrb[0].mxu0
    %v3842 = vadd.f32 %v3567, %v3841
    %v3843 = vpop.f32.mrb[0].mxu0
    %v3844 = vadd.f32 %v3567, %v3843
    %3845 = vmatprep.mubr.f32.mxu0 %v3405
    %3846 = vmatmul.mubr.f32.gmra.mrb[0].mxu0 %v3404
    %v3847 = vpop.f32.mrb[0].mxu0
    %v3848 = vadd.f32 %v3572, %v3847
    %v3849 = vpop.f32.mrb[0].mxu0
    %v3850 = vadd.f32 %v3572, %v3849
    %3851 = vmatprep.mubr.f32.mxu0 %v3408
    %3852 = vmatmul.mubr.f32.gmra.mrb[0].mxu0 %v3407
    %v3853 = vpop.f32.mrb[0].mxu0
    %v3854 = vadd.f32 %v3577, %v3853
    %v3855 = vpop.f32.mrb[0].mxu0
    %v3856 = vadd.f32 %v3577, %v3855
    %3857 = vdwg.mxu0
    %3858 = vmatprep.subr.mxu0 %v3541
    %3859 = vmatpush1.msra.mxu0 %v3540
    %3860 = vmatprep.subr.mxu0 %v3545
    %3861 = vmatpush1.msra.mxu0 %v3544
    %3862 = vmatprep.subr.mxu0 %v3549
    %3863 = vmatpush1.msra.mxu0 %v3548
    %3864 = vmatprep.subr.mxu0 %v3553
    %3865 = vmatpush1.msra.mxu0 %v3552
    %3866 = vmatprep.subr.mxu0 0.0
    %3867 = vmatpush1.msra.mxu0 0.0
    %3868 = vmatprep.subr.mxu0 0.0
    %3869 = vmatpush1.msra.mxu0 0.0
    %3870 = vmatprep.subr.mxu0 0.0
    %3871 = vmatpush1.msra.mxu0 0.0
    %3872 = vmatprep.subr.mxu0 0.0
    %3873 = vmatpush1.msra.mxu0 0.0
    %3874 = vmatprep.subr.mxu0 0.0
    %3875 = vmatpush1.msra.mxu0 0.0
    %3876 = vmatprep.subr.mxu0 0.0
    %3877 = vmatpush1.msra.mxu0 0.0
    %3878 = vmatprep.subr.mxu0 0.0
    %3879 = vmatpush1.msra.mxu0 0.0
    %3880 = vmatprep.subr.mxu0 0.0
    %3881 = vmatpush1.msra.mxu0 0.0
    %3882 = vmatprep.subr.mxu0 0.0
    %3883 = vmatpush1.msra.mxu0 0.0
    %3884 = vmatprep.subr.mxu0 0.0
    %3885 = vmatpush1.msra.mxu0 0.0
    %3886 = vmatprep.subr.mxu0 0.0
    %3887 = vmatpush1.msra.mxu0 0.0
    %3888 = vmatprep.subr.mxu0 0.0
    %3889 = vmatpush1.msra.mxu0 0.0
    %3890 = vmatprep.subr.mxu0 0.0
    %3891 = vmatpush1.msra.mxu0 0.0
    %3892 = vmatprep.subr.mxu0 0.0
    %3893 = vmatpush1.msra.mxu0 0.0
    %3894 = vmatprep.subr.mxu0 0.0
    %3895 = vmatpush1.msra.mxu0 0.0
    %3896 = vmatprep.subr.mxu0 0.0
    %3897 = vmatpush1.msra.mxu0 0.0
    %3898 = vmatprep.subr.mxu0 0.0
    %3899 = vmatpush1.msra.mxu0 0.0
    %3900 = vmatprep.subr.mxu0 0.0
    %3901 = vmatpush1.msra.mxu0 0.0
    %3902 = vmatprep.subr.mxu0 0.0
    %3903 = vmatpush1.msra.mxu0 0.0
    %3904 = vmatprep.subr.mxu0 0.0
    %3905 = vmatpush1.msra.mxu0 0.0
    %3906 = vmatprep.subr.mxu0 0.0
    %3907 = vmatpush1.msra.mxu0 0.0
    %3908 = vmatprep.subr.mxu0 0.0
    %3909 = vmatpush1.msra.mxu0 0.0
    %3910 = vmatprep.subr.mxu0 0.0
    %3911 = vmatpush1.msra.mxu0 0.0
    %3912 = vmatprep.subr.mxu0 0.0
    %3913 = vmatpush1.msra.mxu0 0.0
    %3914 = vmatprep.subr.mxu0 0.0
    %3915 = vmatpush1.msra.mxu0 0.0
    %3916 = vmatprep.subr.mxu0 0.0
    %3917 = vmatpush1.msra.mxu0 0.0
    %3918 = vmatprep.subr.mxu0 0.0
    %3919 = vmatpush1.msra.mxu0 0.0
    %3920 = vmatprep.subr.mxu0 0.0
    %3921 = vmatpush1.msra.mxu0 0.0
    %3922 = vmatprep.mubr.f32.mxu0 0.0
    %3923 = vmatmul.mubr.f32.gmra.mrb[0].mxu0 %v3580
    %v3924 = vpop.f32.mrb[0].mxu0
    %v3925 = vadd.f32 %v3836, %v3924
    %v3926 = vpop.f32.mrb[0].mxu0
    %v3927 = vadd.f32 %v3838, %v3926
    %3928 = vmatprep.mubr.f32.mxu0 0.0
    %3929 = vmatmul.mubr.f32.gmra.mrb[0].mxu0 %v3583
    %v3930 = vpop.f32.mrb[0].mxu0
    %v3931 = vadd.f32 %v3842, %v3930
    %v3932 = vpop.f32.mrb[0].mxu0
    %v3933 = vadd.f32 %v3844, %v3932
    %3934 = vmatprep.mubr.f32.mxu0 0.0
    %3935 = vmatmul.mubr.f32.gmra.mrb[0].mxu0 %v3586
    %v3936 = vpop.f32.mrb[0].mxu0
    %v3937 = vadd.f32 %v3848, %v3936
    %v3938 = vpop.f32.mrb[0].mxu0
    %v3939 = vadd.f32 %v3850, %v3938
    %3940 = vmatprep.mubr.f32.mxu0 0.0
    %3941 = vmatmul.mubr.f32.gmra.mrb[0].mxu0 %v3589
    %v3942 = vpop.f32.mrb[0].mxu0
    %v3943 = vadd.f32 %v3854, %v3942
    %v3944 = vpop.f32.mrb[0].mxu0
    %v3945 = vadd.f32 %v3856, %v3944
    %3946 = vdwg.mxu0
    %v3947 = vld [vmem:[#allocation3] sm:$0xff]
    %v3948 = vld [vmem:[#allocation3 + $0x8] sm:$0xff]
    %v3949 = vld [vmem:[#allocation3 + $0x10] sm:$0xff]
    %v3950 = vld [vmem:[#allocation3 + $0x18] sm:$0xff]
    %v3951 = vld [vmem:[#allocation3 + $0x20] sm:$0xff]
    %v3952 = vld [vmem:[#allocation3 + $0x28] sm:$0xff]
    %v3953 = vld [vmem:[#allocation3 + $0x30] sm:$0xff]
    %v3954 = vld [vmem:[#allocation3 + $0x38] sm:$0xff]
    %v3955 = vld [vmem:[#allocation3 + $0x40] sm:$0xff]
    %v3956 = vld [vmem:[#allocation3 + $0x48] sm:$0xff]
    %v3957 = vld [vmem:[#allocation3 + $0x50] sm:$0xff]
    %v3958 = vld [vmem:[#allocation3 + $0x58] sm:$0xff]
    %v3959 = vld [vmem:[#allocation3 + $0x60] sm:$0xff]
    %v3960 = vld [vmem:[#allocation3 + $0x68] sm:$0xff]
    %v3961 = vld [vmem:[#allocation3 + $0x70] sm:$0xff]
    %v3962 = vld [vmem:[#allocation3 + $0x78] sm:$0xff]
    %v3963 = vadd.f32 %v3747, %v3947
    %v3964 = vadd.f32 %v3749, %v3948
    %v3965 = vadd.f32 %v3925, %v3949
    %v3966 = vadd.f32 %v3927, %v3950
    %v3967 = vadd.f32 %v3753, %v3951
    %v3968 = vadd.f32 %v3755, %v3952
    %v3969 = vadd.f32 %v3931, %v3953
    %v3970 = vadd.f32 %v3933, %v3954
    %v3971 = vadd.f32 %v3759, %v3955
    %v3972 = vadd.f32 %v3761, %v3956
    %v3973 = vadd.f32 %v3937, %v3957
    %v3974 = vadd.f32 %v3939, %v3958
    %v3975 = vadd.f32 %v3765, %v3959
    %v3976 = vadd.f32 %v3767, %v3960
    %v3977 = vadd.f32 %v3943, %v3961
    %v3978 = vadd.f32 %v3945, %v3962
    %3979 = vst [vmem:[#allocation11] sm:$0xff] %v3963
    %3980 = vst [vmem:[#allocation11 + $0x8] sm:$0xff] %v3964
    %3981 = vst [vmem:[#allocation11 + $0x10] sm:$0xff] %v3965
    %3982 = vst [vmem:[#allocation11 + $0x18] sm:$0xff] %v3966
    %3983 = vst [vmem:[#allocation11 + $0x20] sm:$0xff] %v3967
    %3984 = vst [vmem:[#allocation11 + $0x28] sm:$0xff] %v3968
    %3985 = vst [vmem:[#allocation11 + $0x30] sm:$0xff] %v3969
    %3986 = vst [vmem:[#allocation11 + $0x38] sm:$0xff] %v3970
    %3987 = vst [vmem:[#allocation11 + $0x40] sm:$0xff] %v3971
    %3988 = vst [vmem:[#allocation11 + $0x48] sm:$0xff] %v3972
    %3989 = vst [vmem:[#allocation11 + $0x50] sm:$0xff] %v3973
    %3990 = vst [vmem:[#allocation11 + $0x58] sm:$0xff] %v3974
    %3991 = vst [vmem:[#allocation11 + $0x60] sm:$0xff] %v3975
    %3992 = vst [vmem:[#allocation11 + $0x68] sm:$0xff] %v3976
    %3993 = vst [vmem:[#allocation11 + $0x70] sm:$0xff] %v3977
    %3994 = vst [vmem:[#allocation11 + $0x78] sm:$0xff] %v3978
    // Predicated region
    $region34: #{xception_middle_flow_block.1} parent=1 // pred_check
      _
    $region35: #{xception_middle_flow_block.1} parent=1 // pred_check_branch
      %3996 = sbr.rel (0) target = $region37
    $region36: #{xception_middle_flow_block.1} parent=1 // pred_region
      %s3998 = ssub.s32 2048, 2048
      %3999 = vsyncadd [#allocation5], %s3998
      %s4000 = sshll.u32 [#allocation11], 4
      %s4001 = int_to_ptr.vmem [resolvable:$true] %s4000
      %4006 = dma.vmem_to_hbm [thread:$0]  %s4001, 2048, %s4, [#allocation5], 512, 512, 32
    $region37: #{xception_middle_flow_block.1} parent=1 // pred_fallthru
      _
    // Predicated region
    $region38: #{xception_middle_flow_block.1} parent=1 // pred_check
      _
    $region39: #{xception_middle_flow_block.1} parent=1 // pred_check_branch
      %4008 = sbr.rel (0) target = $region41
    $region40: #{xception_middle_flow_block.1} parent=1 // pred_region
      %4009 = dma.done [#allocation5], 2048
    $region41: #{xception_middle_flow_block.1} parent=1 // pred_fallthru
      _
    %4010 = vsyncpa [#allocation4], 1
    %4011 = vsyncpa [#allocation7], 1
    %4012 = vsyncpa [#allocation10], 1
    %4013 = vsyncpa [#allocation5], 1

</llo_original>
